<compile_context>
chip_gen: v6e
topology: v6e:2x2x1
jax: 0.10.0
libtpu: 0.0.40
codegen_flags: <defaults>
</compile_context>

<pallas_src>
import numpy as np
import jax
import jax.numpy as jnp
from jax import lax
from jax.experimental import pallas as pl
from jax.experimental.pallas import tpu as pltpu

N_MAT = 4          # square matrix size of y_pred[..., N, N]
QR_ITERS_4 = 12    # shifted QR iterations on the 4x4 block
QR_ITERS_3 = 10    # shifted QR iterations on the deflated 3x3 block
SUBLANES = 8
LANES = 128
M_TILE = SUBLANES * LANES   # 1024 matrices per grid step (one full vreg / entry)


# ---------- complex helpers: a complex value is a (re, im) pair of f32 tiles ----------
def _cadd(a, b):
    return (a[0] + b[0], a[1] + b[1])


def _csub(a, b):
    return (a[0] - b[0], a[1] - b[1])


def _cmul(a, b):
    return (a[0] * b[0] - a[1] * b[1], a[0] * b[1] + a[1] * b[0])


def _cconj_mul(a, b):  # conj(a) * b
    return (a[0] * b[0] + a[1] * b[1], a[0] * b[1] - a[1] * b[0])


def _cabs2(a):
    return a[0] * a[0] + a[1] * a[1]


def _csqrt(a):
    x, y = a
    r = jnp.sqrt(x * x + y * y)
    re = jnp.sqrt(jnp.maximum(0.5 * (r + x), 0.0))
    im = jnp.sqrt(jnp.maximum(0.5 * (r - x), 0.0))
    sgn = jnp.where(y >= 0.0, 1.0, -1.0)
    return (re, sgn * im)


def _wilkinson_shift(p, q, r, s):
    """Eigenvalues of [[p,q],[r,s]]; returns (closest to s, the other one)."""
    tr_half = (0.5 * (p[0] + s[0]), 0.5 * (p[1] + s[1]))
    delta = (0.5 * (p[0] - s[0]), 0.5 * (p[1] - s[1]))
    disc = _csqrt(_cadd(_cmul(delta, delta), _cmul(q, r)))
    mu1 = _cadd(tr_half, disc)
    mu2 = _csub(tr_half, disc)
    pick = _cabs2(_csub(mu1, s)) <= _cabs2(_csub(mu2, s))
    near = (jnp.where(pick, mu1[0], mu2[0]), jnp.where(pick, mu1[1], mu2[1]))
    far = (jnp.where(pick, mu2[0], mu1[0]), jnp.where(pick, mu2[1], mu1[1]))
    return near, far


def _qr_shift_step(a, k):
    """One shifted complex QR step on a k x k matrix of element tiles (pure VPU)."""
    mu, _ = _wilkinson_shift(a[k - 2][k - 2], a[k - 2][k - 1],
                             a[k - 1][k - 2], a[k - 1][k - 1])

    # B = A - mu*I, stored as columns of complex components.
    cols = []
    for j in range(k):
        col = []
        for i in range(k):
            e = a[i][j]
            if i == j:
                e = (e[0] - mu[0], e[1] - mu[1])
            col.append(e)
        cols.append(col)

    # Modified Gram-Schmidt  B = Q R  (R diagonal kept as real arrays).
    qcols = []
    r_off = [[None] * k for _ in range(k)]
    r_diag = [None] * k
    for j in range(k):
        v = list(cols[j])
        for t in range(j):
            qt = qcols[t]
            acc = _cconj_mul(qt[0], v[0])
            for i in range(1, k):
                acc = _cadd(acc, _cconj_mul(qt[i], v[i]))
            r_off[t][j] = acc
            for i in range(k):
                prod = _cmul(acc, qt[i])
                v[i] = (v[i][0] - prod[0], v[i][1] - prod[1])
        nrm2 = _cabs2(v[0])
        for i in range(1, k):
            nrm2 = nrm2 + _cabs2(v[i])
        inv = lax.rsqrt(jnp.maximum(nrm2, 1e-30))   # EUP rsqrt, clamped
        r_diag[j] = nrm2 * inv                      # == sqrt(nrm2)
        qcols.append([(v[i][0] * inv, v[i][1] * inv) for i in range(k)])

    # A <- R Q + mu*I   (Q[t][l] = qcols[l][t]; R upper triangular, real diagonal).
    a_new = [[None] * k for _ in range(k)]
    for i in range(k):
        for l in range(k):
            qi = qcols[l][i]
            acc = (r_diag[i] * qi[0], r_diag[i] * qi[1])   # t == i term, no zero-init
            for t in range(i + 1, k):
                acc = _cadd(acc, _cmul(r_off[i][t], qcols[l][t]))
            if i == l:
                acc = (acc[0] + mu[0], acc[1] + mu[1])
            a_new[i][l] = acc
    return a_new


def _pack(a, k):
    flat = []
    for i in range(k):
        for j in range(k):
            flat.append(a[i][j][0])
            flat.append(a[i][j][1])
    return tuple(flat)


def _unpack(flat, k):
    a = [[None] * k for _ in range(k)]
    t = 0
    for i in range(k):
        for j in range(k):
            a[i][j] = (flat[t], flat[t + 1])
            t += 2
    return a


def _qr_sweep(a, k, iters):
    """Run `iters` shifted QR steps on the leading k x k block; flat-tuple carry."""
    sub = [[a[i][j] for j in range(k)] for i in range(k)]

    def body(_, flat):
        return _pack(_qr_shift_step(_unpack(flat, k), k), k)

    flat = lax.fori_loop(0, iters, body, _pack(sub, k))
    sub = _unpack(flat, k)
    for i in range(k):
        for j in range(k):
            a[i][j] = sub[i][j]
    return a


# ------------------------------ Pallas kernel ------------------------------
def _mse_evs_kernel(ar_ref, ai_ref, yt_ref, out_ref):
    n = N_MAT
    # Element-per-row, lane-dense layout: each matrix entry is an (8, 128) tile
    # over the batch of matrices handled by this grid step.
    a = [[(ar_ref[0, i * n + j], ai_ref[0, i * n + j]) for j in range(n)]
         for i in range(n)]

    # Shifted QR with static deflation: 4x4 -> 3x3 -> closed-form 2x2.
    a = _qr_sweep(a, 4, QR_ITERS_4)
    lam3 = a[3][3]
    a = _qr_sweep(a, 3, QR_ITERS_3)
    lam2 = a[2][2]
    lam1, lam0 = _wilkinson_shift(a[0][0], a[0][1], a[1][0], a[1][1])

    lams = (lam0, lam1, lam2, lam3)
    total = None
    for i in range(n):
        mag = jnp.sqrt(_cabs2(lams[i]))
        d = mag - yt_ref[0, i]
        sq = d * d
        total = sq if total is None else total + sq

    # Lane-dense per-tile partial sums; padded lanes hold zero matrices and
    # zero targets so they contribute exactly 0. Final mean done in wrapper.
    out_ref[0] = total


# ------------------------------ host-side glue ------------------------------
def make_idxs(freq_points: int, samplerate: int, freqs) -> jnp.ndarray:
    """Replicates MSE_evs_idxs.__init__ index construction (deterministic)."""
    freq_axis = np.linspace(0.0, samplerate / 2.0, freq_points)
    freqs = np.asarray(freqs, dtype=np.float64)
    idxs = np.argmin(np.abs(freq_axis[:, None] - freqs[None, :]), axis=0)
    idxs = np.concatenate([idxs - 2, idxs - 1, idxs, idxs + 1, idxs + 2])
    return jnp.asarray(idxs, dtype=jnp.int32)


@jax.jit
def mse_evs_idxs(y_pred, y_true, idxs):
    # Frequency-subset gather + layout change (plain-JAX glue).
    yp = jnp.take(y_pred, idxs, axis=1)            # (B, F_sel, N, N) complex64
    yt = jnp.take(y_true, idxs, axis=1)            # (B, F_sel, N)    float32
    B, F, n, _ = yp.shape
    M = B * F
    G = (M + M_TILE - 1) // M_TILE
    M_pad = G * M_TILE
    pad = M_pad - M

    ar = jnp.pad(jnp.real(yp).reshape(M, n * n).astype(jnp.float32), ((0, pad), (0, 0)))
    ai = jnp.pad(jnp.imag(yp).reshape(M, n * n).astype(jnp.float32), ((0, pad), (0, 0)))
    ytf = jnp.pad(yt.reshape(M, n).astype(jnp.float32), ((0, pad), (0, 0)))

    # (M_pad, E) -> (G, E, 8, 128): batch is lane-dense per matrix entry.
    ar = jnp.transpose(ar.reshape(G, SUBLANES, LANES, n * n), (0, 3, 1, 2))
    ai = jnp.transpose(ai.reshape(G, SUBLANES, LANES, n * n), (0, 3, 1, 2))
    ytf = jnp.transpose(ytf.reshape(G, SUBLANES, LANES, n), (0, 3, 1, 2))

    partial = pl.pallas_call(
        _mse_evs_kernel,
        out_shape=jax.ShapeDtypeStruct((G, SUBLANES, LANES), jnp.float32),
        grid_spec=pltpu.PrefetchScalarGridSpec(
            num_scalar_prefetch=0,
            grid=(G,),
            in_specs=[
                pl.BlockSpec((1, n * n, SUBLANES, LANES), lambda g: (g, 0, 0, 0)),
                pl.BlockSpec((1, n * n, SUBLANES, LANES), lambda g: (g, 0, 0, 0)),
                pl.BlockSpec((1, n, SUBLANES, LANES), lambda g: (g, 0, 0, 0)),
            ],
            out_specs=pl.BlockSpec((1, SUBLANES, LANES), lambda g: (g, 0, 0)),
        ),
        compiler_params=pltpu.CompilerParams(
            dimension_semantics=("parallel",)),   # megacore-safe: disjoint outputs
    )(ar, ai, ytf)

    # Divide by the TRUE (unpadded) element count, matching torch.mean.
    return jnp.sum(partial) / jnp.float32(n * M)


if __name__ == "__main__":
    key = jax.random.PRNGKey(0)
    B = 2
    N = N_MAT
    freq_points = 16
    samplerate = 48000
    iter_num = 4  # stored by the module but unused in forward
    freqs = np.array([4000.0, 8000.0, 12000.0, 16000.0])

    idxs = make_idxs(freq_points, samplerate, freqs)   # (20,) -> F_sel = 20

    k1, k2, k3 = jax.random.split(key, 3)
    yp_r = jax.random.normal(k1, (B, freq_points, N, N), dtype=jnp.float32)
    yp_i = jax.random.normal(k2, (B, freq_points, N, N), dtype=jnp.float32)
    y_pred = (yp_r + 1j * yp_i).astype(jnp.complex64)
    y_true = jnp.abs(jax.random.normal(k3, (B, freq_points, N), dtype=jnp.float32))

    loss = mse_evs_idxs(y_pred, y_true, idxs)
    jax.block_until_ready(loss)
    print("KERNEL_OK")
</pallas_src>

<mosaic_0001>
module attributes {stable_mosaic.version = 11 : i64} {
  func.func @_mse_evs_kernel(%arg0: i32, %arg1: memref<1x16x8x128xf32, #tpu.memory_space<vmem>>, %arg2: memref<1x16x8x128xf32, #tpu.memory_space<vmem>>, %arg3: memref<1x4x8x128xf32, #tpu.memory_space<vmem>>, %arg4: memref<1x8x128xf32, #tpu.memory_space<vmem>>) attributes {dimension_semantics = [#tpu.dimension_semantics<parallel>], iteration_bounds = array<i64: 1>, scalar_prefetch = 0 : i64, scratch_operands = 0 : i64, tpu.core_type = #tpu.core_type<tc>, window_params = [{transform_indices = @transform_0, window_bounds = array<i64: 1, 16, 8, 128>}, {transform_indices = @transform_1, window_bounds = array<i64: 1, 16, 8, 128>}, {transform_indices = @transform_2, window_bounds = array<i64: 1, 4, 8, 128>}, {transform_indices = @transform_3, window_bounds = array<i64: 1, 8, 128>}]} {
    %c0 = arith.constant 0 : index
    %c0_0 = arith.constant 0 : index
    %c0_1 = arith.constant 0 : index
    %c0_2 = arith.constant 0 : index
    %0 = vector.load %arg1[%c0, %c0_0, %c0_1, %c0_2] : memref<1x16x8x128xf32, #tpu.memory_space<vmem>>, vector<1x1x8x128xf32>
    %1 = vector.shape_cast %0 : vector<1x1x8x128xf32> to vector<8x128xf32>
    %c0_3 = arith.constant 0 : index
    %c0_4 = arith.constant 0 : index
    %c0_5 = arith.constant 0 : index
    %c0_6 = arith.constant 0 : index
    %2 = vector.load %arg2[%c0_3, %c0_4, %c0_5, %c0_6] : memref<1x16x8x128xf32, #tpu.memory_space<vmem>>, vector<1x1x8x128xf32>
    %3 = vector.shape_cast %2 : vector<1x1x8x128xf32> to vector<8x128xf32>
    %c0_7 = arith.constant 0 : index
    %c1 = arith.constant 1 : index
    %c0_8 = arith.constant 0 : index
    %c0_9 = arith.constant 0 : index
    %4 = vector.load %arg1[%c0_7, %c1, %c0_8, %c0_9] : memref<1x16x8x128xf32, #tpu.memory_space<vmem>>, vector<1x1x8x128xf32>
    %5 = vector.shape_cast %4 : vector<1x1x8x128xf32> to vector<8x128xf32>
    %c0_10 = arith.constant 0 : index
    %c1_11 = arith.constant 1 : index
    %c0_12 = arith.constant 0 : index
    %c0_13 = arith.constant 0 : index
    %6 = vector.load %arg2[%c0_10, %c1_11, %c0_12, %c0_13] : memref<1x16x8x128xf32, #tpu.memory_space<vmem>>, vector<1x1x8x128xf32>
    %7 = vector.shape_cast %6 : vector<1x1x8x128xf32> to vector<8x128xf32>
    %c0_14 = arith.constant 0 : index
    %c2 = arith.constant 2 : index
    %c0_15 = arith.constant 0 : index
    %c0_16 = arith.constant 0 : index
    %8 = vector.load %arg1[%c0_14, %c2, %c0_15, %c0_16] : memref<1x16x8x128xf32, #tpu.memory_space<vmem>>, vector<1x1x8x128xf32>
    %9 = vector.shape_cast %8 : vector<1x1x8x128xf32> to vector<8x128xf32>
    %c0_17 = arith.constant 0 : index
    %c2_18 = arith.constant 2 : index
    %c0_19 = arith.constant 0 : index
    %c0_20 = arith.constant 0 : index
    %10 = vector.load %arg2[%c0_17, %c2_18, %c0_19, %c0_20] : memref<1x16x8x128xf32, #tpu.memory_space<vmem>>, vector<1x1x8x128xf32>
    %11 = vector.shape_cast %10 : vector<1x1x8x128xf32> to vector<8x128xf32>
    %c0_21 = arith.constant 0 : index
    %c3 = arith.constant 3 : index
    %c0_22 = arith.constant 0 : index
    %c0_23 = arith.constant 0 : index
    %12 = vector.load %arg1[%c0_21, %c3, %c0_22, %c0_23] : memref<1x16x8x128xf32, #tpu.memory_space<vmem>>, vector<1x1x8x128xf32>
    %13 = vector.shape_cast %12 : vector<1x1x8x128xf32> to vector<8x128xf32>
    %c0_24 = arith.constant 0 : index
    %c3_25 = arith.constant 3 : index
    %c0_26 = arith.constant 0 : index
    %c0_27 = arith.constant 0 : index
    %14 = vector.load %arg2[%c0_24, %c3_25, %c0_26, %c0_27] : memref<1x16x8x128xf32, #tpu.memory_space<vmem>>, vector<1x1x8x128xf32>
    %15 = vector.shape_cast %14 : vector<1x1x8x128xf32> to vector<8x128xf32>
    %c0_28 = arith.constant 0 : index
    %c4 = arith.constant 4 : index
    %c0_29 = arith.constant 0 : index
    %c0_30 = arith.constant 0 : index
    %16 = vector.load %arg1[%c0_28, %c4, %c0_29, %c0_30] : memref<1x16x8x128xf32, #tpu.memory_space<vmem>>, vector<1x1x8x128xf32>
    %17 = vector.shape_cast %16 : vector<1x1x8x128xf32> to vector<8x128xf32>
    %c0_31 = arith.constant 0 : index
    %c4_32 = arith.constant 4 : index
    %c0_33 = arith.constant 0 : index
    %c0_34 = arith.constant 0 : index
    %18 = vector.load %arg2[%c0_31, %c4_32, %c0_33, %c0_34] : memref<1x16x8x128xf32, #tpu.memory_space<vmem>>, vector<1x1x8x128xf32>
    %19 = vector.shape_cast %18 : vector<1x1x8x128xf32> to vector<8x128xf32>
    %c0_35 = arith.constant 0 : index
    %c5 = arith.constant 5 : index
    %c0_36 = arith.constant 0 : index
    %c0_37 = arith.constant 0 : index
    %20 = vector.load %arg1[%c0_35, %c5, %c0_36, %c0_37] : memref<1x16x8x128xf32, #tpu.memory_space<vmem>>, vector<1x1x8x128xf32>
    %21 = vector.shape_cast %20 : vector<1x1x8x128xf32> to vector<8x128xf32>
    %c0_38 = arith.constant 0 : index
    %c5_39 = arith.constant 5 : index
    %c0_40 = arith.constant 0 : index
    %c0_41 = arith.constant 0 : index
    %22 = vector.load %arg2[%c0_38, %c5_39, %c0_40, %c0_41] : memref<1x16x8x128xf32, #tpu.memory_space<vmem>>, vector<1x1x8x128xf32>
    %23 = vector.shape_cast %22 : vector<1x1x8x128xf32> to vector<8x128xf32>
    %c0_42 = arith.constant 0 : index
    %c6 = arith.constant 6 : index
    %c0_43 = arith.constant 0 : index
    %c0_44 = arith.constant 0 : index
    %24 = vector.load %arg1[%c0_42, %c6, %c0_43, %c0_44] : memref<1x16x8x128xf32, #tpu.memory_space<vmem>>, vector<1x1x8x128xf32>
    %25 = vector.shape_cast %24 : vector<1x1x8x128xf32> to vector<8x128xf32>
    %c0_45 = arith.constant 0 : index
    %c6_46 = arith.constant 6 : index
    %c0_47 = arith.constant 0 : index
    %c0_48 = arith.constant 0 : index
    %26 = vector.load %arg2[%c0_45, %c6_46, %c0_47, %c0_48] : memref<1x16x8x128xf32, #tpu.memory_space<vmem>>, vector<1x1x8x128xf32>
    %27 = vector.shape_cast %26 : vector<1x1x8x128xf32> to vector<8x128xf32>
    %c0_49 = arith.constant 0 : index
    %c7 = arith.constant 7 : index
    %c0_50 = arith.constant 0 : index
    %c0_51 = arith.constant 0 : index
    %28 = vector.load %arg1[%c0_49, %c7, %c0_50, %c0_51] : memref<1x16x8x128xf32, #tpu.memory_space<vmem>>, vector<1x1x8x128xf32>
    %29 = vector.shape_cast %28 : vector<1x1x8x128xf32> to vector<8x128xf32>
    %c0_52 = arith.constant 0 : index
    %c7_53 = arith.constant 7 : index
    %c0_54 = arith.constant 0 : index
    %c0_55 = arith.constant 0 : index
    %30 = vector.load %arg2[%c0_52, %c7_53, %c0_54, %c0_55] : memref<1x16x8x128xf32, #tpu.memory_space<vmem>>, vector<1x1x8x128xf32>
    %31 = vector.shape_cast %30 : vector<1x1x8x128xf32> to vector<8x128xf32>
    %c0_56 = arith.constant 0 : index
    %c8 = arith.constant 8 : index
    %c0_57 = arith.constant 0 : index
    %c0_58 = arith.constant 0 : index
    %32 = vector.load %arg1[%c0_56, %c8, %c0_57, %c0_58] : memref<1x16x8x128xf32, #tpu.memory_space<vmem>>, vector<1x1x8x128xf32>
    %33 = vector.shape_cast %32 : vector<1x1x8x128xf32> to vector<8x128xf32>
    %c0_59 = arith.constant 0 : index
    %c8_60 = arith.constant 8 : index
    %c0_61 = arith.constant 0 : index
    %c0_62 = arith.constant 0 : index
    %34 = vector.load %arg2[%c0_59, %c8_60, %c0_61, %c0_62] : memref<1x16x8x128xf32, #tpu.memory_space<vmem>>, vector<1x1x8x128xf32>
    %35 = vector.shape_cast %34 : vector<1x1x8x128xf32> to vector<8x128xf32>
    %c0_63 = arith.constant 0 : index
    %c9 = arith.constant 9 : index
    %c0_64 = arith.constant 0 : index
    %c0_65 = arith.constant 0 : index
    %36 = vector.load %arg1[%c0_63, %c9, %c0_64, %c0_65] : memref<1x16x8x128xf32, #tpu.memory_space<vmem>>, vector<1x1x8x128xf32>
    %37 = vector.shape_cast %36 : vector<1x1x8x128xf32> to vector<8x128xf32>
    %c0_66 = arith.constant 0 : index
    %c9_67 = arith.constant 9 : index
    %c0_68 = arith.constant 0 : index
    %c0_69 = arith.constant 0 : index
    %38 = vector.load %arg2[%c0_66, %c9_67, %c0_68, %c0_69] : memref<1x16x8x128xf32, #tpu.memory_space<vmem>>, vector<1x1x8x128xf32>
    %39 = vector.shape_cast %38 : vector<1x1x8x128xf32> to vector<8x128xf32>
    %c0_70 = arith.constant 0 : index
    %c10 = arith.constant 10 : index
    %c0_71 = arith.constant 0 : index
    %c0_72 = arith.constant 0 : index
    %40 = vector.load %arg1[%c0_70, %c10, %c0_71, %c0_72] : memref<1x16x8x128xf32, #tpu.memory_space<vmem>>, vector<1x1x8x128xf32>
    %41 = vector.shape_cast %40 : vector<1x1x8x128xf32> to vector<8x128xf32>
    %c0_73 = arith.constant 0 : index
    %c10_74 = arith.constant 10 : index
    %c0_75 = arith.constant 0 : index
    %c0_76 = arith.constant 0 : index
    %42 = vector.load %arg2[%c0_73, %c10_74, %c0_75, %c0_76] : memref<1x16x8x128xf32, #tpu.memory_space<vmem>>, vector<1x1x8x128xf32>
    %43 = vector.shape_cast %42 : vector<1x1x8x128xf32> to vector<8x128xf32>
    %c0_77 = arith.constant 0 : index
    %c11 = arith.constant 11 : index
    %c0_78 = arith.constant 0 : index
    %c0_79 = arith.constant 0 : index
    %44 = vector.load %arg1[%c0_77, %c11, %c0_78, %c0_79] : memref<1x16x8x128xf32, #tpu.memory_space<vmem>>, vector<1x1x8x128xf32>
    %45 = vector.shape_cast %44 : vector<1x1x8x128xf32> to vector<8x128xf32>
    %c0_80 = arith.constant 0 : index
    %c11_81 = arith.constant 11 : index
    %c0_82 = arith.constant 0 : index
    %c0_83 = arith.constant 0 : index
    %46 = vector.load %arg2[%c0_80, %c11_81, %c0_82, %c0_83] : memref<1x16x8x128xf32, #tpu.memory_space<vmem>>, vector<1x1x8x128xf32>
    %47 = vector.shape_cast %46 : vector<1x1x8x128xf32> to vector<8x128xf32>
    %c0_84 = arith.constant 0 : index
    %c12 = arith.constant 12 : index
    %c0_85 = arith.constant 0 : index
    %c0_86 = arith.constant 0 : index
    %48 = vector.load %arg1[%c0_84, %c12, %c0_85, %c0_86] : memref<1x16x8x128xf32, #tpu.memory_space<vmem>>, vector<1x1x8x128xf32>
    %49 = vector.shape_cast %48 : vector<1x1x8x128xf32> to vector<8x128xf32>
    %c0_87 = arith.constant 0 : index
    %c12_88 = arith.constant 12 : index
    %c0_89 = arith.constant 0 : index
    %c0_90 = arith.constant 0 : index
    %50 = vector.load %arg2[%c0_87, %c12_88, %c0_89, %c0_90] : memref<1x16x8x128xf32, #tpu.memory_space<vmem>>, vector<1x1x8x128xf32>
    %51 = vector.shape_cast %50 : vector<1x1x8x128xf32> to vector<8x128xf32>
    %c0_91 = arith.constant 0 : index
    %c13 = arith.constant 13 : index
    %c0_92 = arith.constant 0 : index
    %c0_93 = arith.constant 0 : index
    %52 = vector.load %arg1[%c0_91, %c13, %c0_92, %c0_93] : memref<1x16x8x128xf32, #tpu.memory_space<vmem>>, vector<1x1x8x128xf32>
    %53 = vector.shape_cast %52 : vector<1x1x8x128xf32> to vector<8x128xf32>
    %c0_94 = arith.constant 0 : index
    %c13_95 = arith.constant 13 : index
    %c0_96 = arith.constant 0 : index
    %c0_97 = arith.constant 0 : index
    %54 = vector.load %arg2[%c0_94, %c13_95, %c0_96, %c0_97] : memref<1x16x8x128xf32, #tpu.memory_space<vmem>>, vector<1x1x8x128xf32>
    %55 = vector.shape_cast %54 : vector<1x1x8x128xf32> to vector<8x128xf32>
    %c0_98 = arith.constant 0 : index
    %c14 = arith.constant 14 : index
    %c0_99 = arith.constant 0 : index
    %c0_100 = arith.constant 0 : index
    %56 = vector.load %arg1[%c0_98, %c14, %c0_99, %c0_100] : memref<1x16x8x128xf32, #tpu.memory_space<vmem>>, vector<1x1x8x128xf32>
    %57 = vector.shape_cast %56 : vector<1x1x8x128xf32> to vector<8x128xf32>
    %c0_101 = arith.constant 0 : index
    %c14_102 = arith.constant 14 : index
    %c0_103 = arith.constant 0 : index
    %c0_104 = arith.constant 0 : index
    %58 = vector.load %arg2[%c0_101, %c14_102, %c0_103, %c0_104] : memref<1x16x8x128xf32, #tpu.memory_space<vmem>>, vector<1x1x8x128xf32>
    %59 = vector.shape_cast %58 : vector<1x1x8x128xf32> to vector<8x128xf32>
    %c0_105 = arith.constant 0 : index
    %c15 = arith.constant 15 : index
    %c0_106 = arith.constant 0 : index
    %c0_107 = arith.constant 0 : index
    %60 = vector.load %arg1[%c0_105, %c15, %c0_106, %c0_107] : memref<1x16x8x128xf32, #tpu.memory_space<vmem>>, vector<1x1x8x128xf32>
    %61 = vector.shape_cast %60 : vector<1x1x8x128xf32> to vector<8x128xf32>
    %c0_108 = arith.constant 0 : index
    %c15_109 = arith.constant 15 : index
    %c0_110 = arith.constant 0 : index
    %c0_111 = arith.constant 0 : index
    %62 = vector.load %arg2[%c0_108, %c15_109, %c0_110, %c0_111] : memref<1x16x8x128xf32, #tpu.memory_space<vmem>>, vector<1x1x8x128xf32>
    %63 = vector.shape_cast %62 : vector<1x1x8x128xf32> to vector<8x128xf32>
    %c0_i32 = arith.constant 0 : i32
    %c12_i32 = arith.constant 12 : i32
    %64 = arith.addi %c0_i32, %c12_i32 : i32
    %c1_i32 = arith.constant 1 : i32
    %65:32 = scf.for %arg5 = %c0_i32 to %64 step %c1_i32 iter_args(%arg6 = %1, %arg7 = %3, %arg8 = %5, %arg9 = %7, %arg10 = %9, %arg11 = %11, %arg12 = %13, %arg13 = %15, %arg14 = %17, %arg15 = %19, %arg16 = %21, %arg17 = %23, %arg18 = %25, %arg19 = %27, %arg20 = %29, %arg21 = %31, %arg22 = %33, %arg23 = %35, %arg24 = %37, %arg25 = %39, %arg26 = %41, %arg27 = %43, %arg28 = %45, %arg29 = %47, %arg30 = %49, %arg31 = %51, %arg32 = %53, %arg33 = %55, %arg34 = %57, %arg35 = %59, %arg36 = %61, %arg37 = %63) -> (vector<8x128xf32>, vector<8x128xf32>, vector<8x128xf32>, vector<8x128xf32>, vector<8x128xf32>, vector<8x128xf32>, vector<8x128xf32>, vector<8x128xf32>, vector<8x128xf32>, vector<8x128xf32>, vector<8x128xf32>, vector<8x128xf32>, vector<8x128xf32>, vector<8x128xf32>, vector<8x128xf32>, vector<8x128xf32>, vector<8x128xf32>, vector<8x128xf32>, vector<8x128xf32>, vector<8x128xf32>, vector<8x128xf32>, vector<8x128xf32>, vector<8x128xf32>, vector<8x128xf32>, vector<8x128xf32>, vector<8x128xf32>, vector<8x128xf32>, vector<8x128xf32>, vector<8x128xf32>, vector<8x128xf32>, vector<8x128xf32>, vector<8x128xf32>)  : i32 {
      %173 = arith.addf %arg26, %arg36 : vector<8x128xf32>
      %cst_143 = arith.constant 5.000000e-01 : f32
      %174 = vector.broadcast %cst_143 : f32 to vector<8x128xf32>
      %175 = arith.mulf %174, %173 : vector<8x128xf32>
      %176 = arith.addf %arg27, %arg37 : vector<8x128xf32>
      %cst_144 = arith.constant 5.000000e-01 : f32
      %177 = vector.broadcast %cst_144 : f32 to vector<8x128xf32>
      %178 = arith.mulf %177, %176 : vector<8x128xf32>
      %179 = arith.subf %arg26, %arg36 : vector<8x128xf32>
      %cst_145 = arith.constant 5.000000e-01 : f32
      %180 = vector.broadcast %cst_145 : f32 to vector<8x128xf32>
      %181 = arith.mulf %180, %179 : vector<8x128xf32>
      %182 = arith.subf %arg27, %arg37 : vector<8x128xf32>
      %cst_146 = arith.constant 5.000000e-01 : f32
      %183 = vector.broadcast %cst_146 : f32 to vector<8x128xf32>
      %184 = arith.mulf %183, %182 : vector<8x128xf32>
      %185 = arith.mulf %181, %181 : vector<8x128xf32>
      %186 = arith.mulf %184, %184 : vector<8x128xf32>
      %187 = arith.subf %185, %186 : vector<8x128xf32>
      %188 = arith.mulf %181, %184 : vector<8x128xf32>
      %189 = arith.mulf %184, %181 : vector<8x128xf32>
      %190 = arith.addf %188, %189 : vector<8x128xf32>
      %191 = arith.mulf %arg28, %arg34 : vector<8x128xf32>
      %192 = arith.mulf %arg29, %arg35 : vector<8x128xf32>
      %193 = arith.subf %191, %192 : vector<8x128xf32>
      %194 = arith.mulf %arg28, %arg35 : vector<8x128xf32>
      %195 = arith.mulf %arg29, %arg34 : vector<8x128xf32>
      %196 = arith.addf %194, %195 : vector<8x128xf32>
      %197 = arith.addf %187, %193 : vector<8x128xf32>
      %198 = arith.addf %190, %196 : vector<8x128xf32>
      %199 = arith.mulf %197, %197 : vector<8x128xf32>
      %200 = arith.mulf %198, %198 : vector<8x128xf32>
      %201 = arith.addf %199, %200 : vector<8x128xf32>
      %202 = math.sqrt %201 : vector<8x128xf32>
      %203 = arith.addf %202, %197 : vector<8x128xf32>
      %cst_147 = arith.constant 5.000000e-01 : f32
      %204 = vector.broadcast %cst_147 : f32 to vector<8x128xf32>
      %205 = arith.mulf %204, %203 : vector<8x128xf32>
      %cst_148 = arith.constant 0.000000e+00 : f32
      %206 = vector.broadcast %cst_148 : f32 to vector<8x128xf32>
      %207 = arith.maximumf %205, %206 : vector<8x128xf32>
      %208 = math.sqrt %207 : vector<8x128xf32>
      %209 = arith.subf %202, %197 : vector<8x128xf32>
      %cst_149 = arith.constant 5.000000e-01 : f32
      %210 = vector.broadcast %cst_149 : f32 to vector<8x128xf32>
      %211 = arith.mulf %210, %209 : vector<8x128xf32>
      %cst_150 = arith.constant 0.000000e+00 : f32
      %212 = vector.broadcast %cst_150 : f32 to vector<8x128xf32>
      %213 = arith.maximumf %211, %212 : vector<8x128xf32>
      %214 = math.sqrt %213 : vector<8x128xf32>
      %cst_151 = arith.constant 0.000000e+00 : f32
      %215 = vector.broadcast %cst_151 : f32 to vector<8x128xf32>
      %216 = arith.cmpf oge, %198, %215 : vector<8x128xf32>
      %cst_152 = arith.constant 1.000000e+00 : f32
      %cst_153 = arith.constant -1.000000e+00 : f32
      %217 = vector.broadcast %cst_152 : f32 to vector<8x128xf32>
      %218 = vector.broadcast %cst_153 : f32 to vector<8x128xf32>
      %219 = arith.select %216, %217, %218 : vector<8x128xi1>, vector<8x128xf32>
      %220 = arith.mulf %219, %214 : vector<8x128xf32>
      %221 = arith.addf %175, %208 : vector<8x128xf32>
      %222 = arith.addf %178, %220 : vector<8x128xf32>
      %223 = arith.subf %175, %208 : vector<8x128xf32>
      %224 = arith.subf %178, %220 : vector<8x128xf32>
      %225 = arith.subf %221, %arg36 : vector<8x128xf32>
      %226 = arith.subf %222, %arg37 : vector<8x128xf32>
      %227 = arith.mulf %225, %225 : vector<8x128xf32>
      %228 = arith.mulf %226, %226 : vector<8x128xf32>
      %229 = arith.addf %227, %228 : vector<8x128xf32>
      %230 = arith.subf %223, %arg36 : vector<8x128xf32>
      %231 = arith.subf %224, %arg37 : vector<8x128xf32>
      %232 = arith.mulf %230, %230 : vector<8x128xf32>
      %233 = arith.mulf %231, %231 : vector<8x128xf32>
      %234 = arith.addf %232, %233 : vector<8x128xf32>
      %235 = arith.cmpf ole, %229, %234 : vector<8x128xf32>
      %236 = arith.select %235, %221, %223 : vector<8x128xi1>, vector<8x128xf32>
      %237 = arith.select %235, %222, %224 : vector<8x128xi1>, vector<8x128xf32>
      %238 = arith.subf %arg6, %236 : vector<8x128xf32>
      %239 = arith.subf %arg7, %237 : vector<8x128xf32>
      %240 = arith.subf %arg16, %236 : vector<8x128xf32>
      %241 = arith.subf %arg17, %237 : vector<8x128xf32>
      %242 = arith.subf %arg26, %236 : vector<8x128xf32>
      %243 = arith.subf %arg27, %237 : vector<8x128xf32>
      %244 = arith.subf %arg36, %236 : vector<8x128xf32>
      %245 = arith.subf %arg37, %237 : vector<8x128xf32>
      %246 = arith.mulf %238, %238 : vector<8x128xf32>
      %247 = arith.mulf %239, %239 : vector<8x128xf32>
      %248 = arith.addf %246, %247 : vector<8x128xf32>
      %249 = arith.mulf %arg14, %arg14 : vector<8x128xf32>
      %250 = arith.mulf %arg15, %arg15 : vector<8x128xf32>
      %251 = arith.addf %249, %250 : vector<8x128xf32>
      %252 = arith.addf %248, %251 : vector<8x128xf32>
      %253 = arith.mulf %arg22, %arg22 : vector<8x128xf32>
      %254 = arith.mulf %arg23, %arg23 : vector<8x128xf32>
      %255 = arith.addf %253, %254 : vector<8x128xf32>
      %256 = arith.addf %252, %255 : vector<8x128xf32>
      %257 = arith.mulf %arg30, %arg30 : vector<8x128xf32>
      %258 = arith.mulf %arg31, %arg31 : vector<8x128xf32>
      %259 = arith.addf %257, %258 : vector<8x128xf32>
      %260 = arith.addf %256, %259 : vector<8x128xf32>
      %cst_154 = arith.constant 1.000000e-30 : f32
      %261 = vector.broadcast %cst_154 : f32 to vector<8x128xf32>
      %262 = arith.maximumf %260, %261 : vector<8x128xf32>
      %263 = math.rsqrt %262 : vector<8x128xf32>
      %264 = arith.mulf %260, %263 : vector<8x128xf32>
      %265 = arith.mulf %238, %263 : vector<8x128xf32>
      %266 = arith.mulf %239, %263 : vector<8x128xf32>
      %267 = arith.mulf %arg14, %263 : vector<8x128xf32>
      %268 = arith.mulf %arg15, %263 : vector<8x128xf32>
      %269 = arith.mulf %arg22, %263 : vector<8x128xf32>
      %270 = arith.mulf %arg23, %263 : vector<8x128xf32>
      %271 = arith.mulf %arg30, %263 : vector<8x128xf32>
      %272 = arith.mulf %arg31, %263 : vector<8x128xf32>
      %273 = arith.mulf %265, %arg8 : vector<8x128xf32>
      %274 = arith.mulf %266, %arg9 : vector<8x128xf32>
      %275 = arith.addf %273, %274 : vector<8x128xf32>
      %276 = arith.mulf %265, %arg9 : vector<8x128xf32>
      %277 = arith.mulf %266, %arg8 : vector<8x128xf32>
      %278 = arith.subf %276, %277 : vector<8x128xf32>
      %279 = arith.mulf %267, %240 : vector<8x128xf32>
      %280 = arith.mulf %268, %241 : vector<8x128xf32>
      %281 = arith.addf %279, %280 : vector<8x128xf32>
      %282 = arith.mulf %267, %241 : vector<8x128xf32>
      %283 = arith.mulf %268, %240 : vector<8x128xf32>
      %284 = arith.subf %282, %283 : vector<8x128xf32>
      %285 = arith.addf %275, %281 : vector<8x128xf32>
      %286 = arith.addf %278, %284 : vector<8x128xf32>
      %287 = arith.mulf %269, %arg24 : vector<8x128xf32>
      %288 = arith.mulf %270, %arg25 : vector<8x128xf32>
      %289 = arith.addf %287, %288 : vector<8x128xf32>
      %290 = arith.mulf %269, %arg25 : vector<8x128xf32>
      %291 = arith.mulf %270, %arg24 : vector<8x128xf32>
      %292 = arith.subf %290, %291 : vector<8x128xf32>
      %293 = arith.addf %285, %289 : vector<8x128xf32>
      %294 = arith.addf %286, %292 : vector<8x128xf32>
      %295 = arith.mulf %271, %arg32 : vector<8x128xf32>
      %296 = arith.mulf %272, %arg33 : vector<8x128xf32>
      %297 = arith.addf %295, %296 : vector<8x128xf32>
      %298 = arith.mulf %271, %arg33 : vector<8x128xf32>
      %299 = arith.mulf %272, %arg32 : vector<8x128xf32>
      %300 = arith.subf %298, %299 : vector<8x128xf32>
      %301 = arith.addf %293, %297 : vector<8x128xf32>
      %302 = arith.addf %294, %300 : vector<8x128xf32>
      %303 = arith.mulf %301, %265 : vector<8x128xf32>
      %304 = arith.mulf %302, %266 : vector<8x128xf32>
      %305 = arith.subf %303, %304 : vector<8x128xf32>
      %306 = arith.mulf %301, %266 : vector<8x128xf32>
      %307 = arith.mulf %302, %265 : vector<8x128xf32>
      %308 = arith.addf %306, %307 : vector<8x128xf32>
      %309 = arith.subf %arg8, %305 : vector<8x128xf32>
      %310 = arith.subf %arg9, %308 : vector<8x128xf32>
      %311 = arith.mulf %301, %267 : vector<8x128xf32>
      %312 = arith.mulf %302, %268 : vector<8x128xf32>
      %313 = arith.subf %311, %312 : vector<8x128xf32>
      %314 = arith.mulf %301, %268 : vector<8x128xf32>
      %315 = arith.mulf %302, %267 : vector<8x128xf32>
      %316 = arith.addf %314, %315 : vector<8x128xf32>
      %317 = arith.subf %240, %313 : vector<8x128xf32>
      %318 = arith.subf %241, %316 : vector<8x128xf32>
      %319 = arith.mulf %301, %269 : vector<8x128xf32>
      %320 = arith.mulf %302, %270 : vector<8x128xf32>
      %321 = arith.subf %319, %320 : vector<8x128xf32>
      %322 = arith.mulf %301, %270 : vector<8x128xf32>
      %323 = arith.mulf %302, %269 : vector<8x128xf32>
      %324 = arith.addf %322, %323 : vector<8x128xf32>
      %325 = arith.subf %arg24, %321 : vector<8x128xf32>
      %326 = arith.subf %arg25, %324 : vector<8x128xf32>
      %327 = arith.mulf %301, %271 : vector<8x128xf32>
      %328 = arith.mulf %302, %272 : vector<8x128xf32>
      %329 = arith.subf %327, %328 : vector<8x128xf32>
      %330 = arith.mulf %301, %272 : vector<8x128xf32>
      %331 = arith.mulf %302, %271 : vector<8x128xf32>
      %332 = arith.addf %330, %331 : vector<8x128xf32>
      %333 = arith.subf %arg32, %329 : vector<8x128xf32>
      %334 = arith.subf %arg33, %332 : vector<8x128xf32>
      %335 = arith.mulf %309, %309 : vector<8x128xf32>
      %336 = arith.mulf %310, %310 : vector<8x128xf32>
      %337 = arith.addf %335, %336 : vector<8x128xf32>
      %338 = arith.mulf %317, %317 : vector<8x128xf32>
      %339 = arith.mulf %318, %318 : vector<8x128xf32>
      %340 = arith.addf %338, %339 : vector<8x128xf32>
      %341 = arith.addf %337, %340 : vector<8x128xf32>
      %342 = arith.mulf %325, %325 : vector<8x128xf32>
      %343 = arith.mulf %326, %326 : vector<8x128xf32>
      %344 = arith.addf %342, %343 : vector<8x128xf32>
      %345 = arith.addf %341, %344 : vector<8x128xf32>
      %346 = arith.mulf %333, %333 : vector<8x128xf32>
      %347 = arith.mulf %334, %334 : vector<8x128xf32>
      %348 = arith.addf %346, %347 : vector<8x128xf32>
      %349 = arith.addf %345, %348 : vector<8x128xf32>
      %cst_155 = arith.constant 1.000000e-30 : f32
      %350 = vector.broadcast %cst_155 : f32 to vector<8x128xf32>
      %351 = arith.maximumf %349, %350 : vector<8x128xf32>
      %352 = math.rsqrt %351 : vector<8x128xf32>
      %353 = arith.mulf %349, %352 : vector<8x128xf32>
      %354 = arith.mulf %309, %352 : vector<8x128xf32>
      %355 = arith.mulf %310, %352 : vector<8x128xf32>
      %356 = arith.mulf %317, %352 : vector<8x128xf32>
      %357 = arith.mulf %318, %352 : vector<8x128xf32>
      %358 = arith.mulf %325, %352 : vector<8x128xf32>
      %359 = arith.mulf %326, %352 : vector<8x128xf32>
      %360 = arith.mulf %333, %352 : vector<8x128xf32>
      %361 = arith.mulf %334, %352 : vector<8x128xf32>
      %362 = arith.mulf %265, %arg10 : vector<8x128xf32>
      %363 = arith.mulf %266, %arg11 : vector<8x128xf32>
      %364 = arith.addf %362, %363 : vector<8x128xf32>
      %365 = arith.mulf %265, %arg11 : vector<8x128xf32>
      %366 = arith.mulf %266, %arg10 : vector<8x128xf32>
      %367 = arith.subf %365, %366 : vector<8x128xf32>
      %368 = arith.mulf %267, %arg18 : vector<8x128xf32>
      %369 = arith.mulf %268, %arg19 : vector<8x128xf32>
      %370 = arith.addf %368, %369 : vector<8x128xf32>
      %371 = arith.mulf %267, %arg19 : vector<8x128xf32>
      %372 = arith.mulf %268, %arg18 : vector<8x128xf32>
      %373 = arith.subf %371, %372 : vector<8x128xf32>
      %374 = arith.addf %364, %370 : vector<8x128xf32>
      %375 = arith.addf %367, %373 : vector<8x128xf32>
      %376 = arith.mulf %269, %242 : vector<8x128xf32>
      %377 = arith.mulf %270, %243 : vector<8x128xf32>
      %378 = arith.addf %376, %377 : vector<8x128xf32>
      %379 = arith.mulf %269, %243 : vector<8x128xf32>
      %380 = arith.mulf %270, %242 : vector<8x128xf32>
      %381 = arith.subf %379, %380 : vector<8x128xf32>
      %382 = arith.addf %374, %378 : vector<8x128xf32>
      %383 = arith.addf %375, %381 : vector<8x128xf32>
      %384 = arith.mulf %271, %arg34 : vector<8x128xf32>
      %385 = arith.mulf %272, %arg35 : vector<8x128xf32>
      %386 = arith.addf %384, %385 : vector<8x128xf32>
      %387 = arith.mulf %271, %arg35 : vector<8x128xf32>
      %388 = arith.mulf %272, %arg34 : vector<8x128xf32>
      %389 = arith.subf %387, %388 : vector<8x128xf32>
      %390 = arith.addf %382, %386 : vector<8x128xf32>
      %391 = arith.addf %383, %389 : vector<8x128xf32>
      %392 = arith.mulf %390, %265 : vector<8x128xf32>
      %393 = arith.mulf %391, %266 : vector<8x128xf32>
      %394 = arith.subf %392, %393 : vector<8x128xf32>
      %395 = arith.mulf %390, %266 : vector<8x128xf32>
      %396 = arith.mulf %391, %265 : vector<8x128xf32>
      %397 = arith.addf %395, %396 : vector<8x128xf32>
      %398 = arith.subf %arg10, %394 : vector<8x128xf32>
      %399 = arith.subf %arg11, %397 : vector<8x128xf32>
      %400 = arith.mulf %390, %267 : vector<8x128xf32>
      %401 = arith.mulf %391, %268 : vector<8x128xf32>
      %402 = arith.subf %400, %401 : vector<8x128xf32>
      %403 = arith.mulf %390, %268 : vector<8x128xf32>
      %404 = arith.mulf %391, %267 : vector<8x128xf32>
      %405 = arith.addf %403, %404 : vector<8x128xf32>
      %406 = arith.subf %arg18, %402 : vector<8x128xf32>
      %407 = arith.subf %arg19, %405 : vector<8x128xf32>
      %408 = arith.mulf %390, %269 : vector<8x128xf32>
      %409 = arith.mulf %391, %270 : vector<8x128xf32>
      %410 = arith.subf %408, %409 : vector<8x128xf32>
      %411 = arith.mulf %390, %270 : vector<8x128xf32>
      %412 = arith.mulf %391, %269 : vector<8x128xf32>
      %413 = arith.addf %411, %412 : vector<8x128xf32>
      %414 = arith.subf %242, %410 : vector<8x128xf32>
      %415 = arith.subf %243, %413 : vector<8x128xf32>
      %416 = arith.mulf %390, %271 : vector<8x128xf32>
      %417 = arith.mulf %391, %272 : vector<8x128xf32>
      %418 = arith.subf %416, %417 : vector<8x128xf32>
      %419 = arith.mulf %390, %272 : vector<8x128xf32>
      %420 = arith.mulf %391, %271 : vector<8x128xf32>
      %421 = arith.addf %419, %420 : vector<8x128xf32>
      %422 = arith.subf %arg34, %418 : vector<8x128xf32>
      %423 = arith.subf %arg35, %421 : vector<8x128xf32>
      %424 = arith.mulf %354, %398 : vector<8x128xf32>
      %425 = arith.mulf %355, %399 : vector<8x128xf32>
      %426 = arith.addf %424, %425 : vector<8x128xf32>
      %427 = arith.mulf %354, %399 : vector<8x128xf32>
      %428 = arith.mulf %355, %398 : vector<8x128xf32>
      %429 = arith.subf %427, %428 : vector<8x128xf32>
      %430 = arith.mulf %356, %406 : vector<8x128xf32>
      %431 = arith.mulf %357, %407 : vector<8x128xf32>
      %432 = arith.addf %430, %431 : vector<8x128xf32>
      %433 = arith.mulf %356, %407 : vector<8x128xf32>
      %434 = arith.mulf %357, %406 : vector<8x128xf32>
      %435 = arith.subf %433, %434 : vector<8x128xf32>
      %436 = arith.addf %426, %432 : vector<8x128xf32>
      %437 = arith.addf %429, %435 : vector<8x128xf32>
      %438 = arith.mulf %358, %414 : vector<8x128xf32>
      %439 = arith.mulf %359, %415 : vector<8x128xf32>
      %440 = arith.addf %438, %439 : vector<8x128xf32>
      %441 = arith.mulf %358, %415 : vector<8x128xf32>
      %442 = arith.mulf %359, %414 : vector<8x128xf32>
      %443 = arith.subf %441, %442 : vector<8x128xf32>
      %444 = arith.addf %436, %440 : vector<8x128xf32>
      %445 = arith.addf %437, %443 : vector<8x128xf32>
      %446 = arith.mulf %360, %422 : vector<8x128xf32>
      %447 = arith.mulf %361, %423 : vector<8x128xf32>
      %448 = arith.addf %446, %447 : vector<8x128xf32>
      %449 = arith.mulf %360, %423 : vector<8x128xf32>
      %450 = arith.mulf %361, %422 : vector<8x128xf32>
      %451 = arith.subf %449, %450 : vector<8x128xf32>
      %452 = arith.addf %444, %448 : vector<8x128xf32>
      %453 = arith.addf %445, %451 : vector<8x128xf32>
      %454 = arith.mulf %452, %354 : vector<8x128xf32>
      %455 = arith.mulf %453, %355 : vector<8x128xf32>
      %456 = arith.subf %454, %455 : vector<8x128xf32>
      %457 = arith.mulf %452, %355 : vector<8x128xf32>
      %458 = arith.mulf %453, %354 : vector<8x128xf32>
      %459 = arith.addf %457, %458 : vector<8x128xf32>
      %460 = arith.subf %398, %456 : vector<8x128xf32>
      %461 = arith.subf %399, %459 : vector<8x128xf32>
      %462 = arith.mulf %452, %356 : vector<8x128xf32>
      %463 = arith.mulf %453, %357 : vector<8x128xf32>
      %464 = arith.subf %462, %463 : vector<8x128xf32>
      %465 = arith.mulf %452, %357 : vector<8x128xf32>
      %466 = arith.mulf %453, %356 : vector<8x128xf32>
      %467 = arith.addf %465, %466 : vector<8x128xf32>
      %468 = arith.subf %406, %464 : vector<8x128xf32>
      %469 = arith.subf %407, %467 : vector<8x128xf32>
      %470 = arith.mulf %452, %358 : vector<8x128xf32>
      %471 = arith.mulf %453, %359 : vector<8x128xf32>
      %472 = arith.subf %470, %471 : vector<8x128xf32>
      %473 = arith.mulf %452, %359 : vector<8x128xf32>
      %474 = arith.mulf %453, %358 : vector<8x128xf32>
      %475 = arith.addf %473, %474 : vector<8x128xf32>
      %476 = arith.subf %414, %472 : vector<8x128xf32>
      %477 = arith.subf %415, %475 : vector<8x128xf32>
      %478 = arith.mulf %452, %360 : vector<8x128xf32>
      %479 = arith.mulf %453, %361 : vector<8x128xf32>
      %480 = arith.subf %478, %479 : vector<8x128xf32>
      %481 = arith.mulf %452, %361 : vector<8x128xf32>
      %482 = arith.mulf %453, %360 : vector<8x128xf32>
      %483 = arith.addf %481, %482 : vector<8x128xf32>
      %484 = arith.subf %422, %480 : vector<8x128xf32>
      %485 = arith.subf %423, %483 : vector<8x128xf32>
      %486 = arith.mulf %460, %460 : vector<8x128xf32>
      %487 = arith.mulf %461, %461 : vector<8x128xf32>
      %488 = arith.addf %486, %487 : vector<8x128xf32>
      %489 = arith.mulf %468, %468 : vector<8x128xf32>
      %490 = arith.mulf %469, %469 : vector<8x128xf32>
      %491 = arith.addf %489, %490 : vector<8x128xf32>
      %492 = arith.addf %488, %491 : vector<8x128xf32>
      %493 = arith.mulf %476, %476 : vector<8x128xf32>
      %494 = arith.mulf %477, %477 : vector<8x128xf32>
      %495 = arith.addf %493, %494 : vector<8x128xf32>
      %496 = arith.addf %492, %495 : vector<8x128xf32>
      %497 = arith.mulf %484, %484 : vector<8x128xf32>
      %498 = arith.mulf %485, %485 : vector<8x128xf32>
      %499 = arith.addf %497, %498 : vector<8x128xf32>
      %500 = arith.addf %496, %499 : vector<8x128xf32>
      %cst_156 = arith.constant 1.000000e-30 : f32
      %501 = vector.broadcast %cst_156 : f32 to vector<8x128xf32>
      %502 = arith.maximumf %500, %501 : vector<8x128xf32>
      %503 = math.rsqrt %502 : vector<8x128xf32>
      %504 = arith.mulf %500, %503 : vector<8x128xf32>
      %505 = arith.mulf %460, %503 : vector<8x128xf32>
      %506 = arith.mulf %461, %503 : vector<8x128xf32>
      %507 = arith.mulf %468, %503 : vector<8x128xf32>
      %508 = arith.mulf %469, %503 : vector<8x128xf32>
      %509 = arith.mulf %476, %503 : vector<8x128xf32>
      %510 = arith.mulf %477, %503 : vector<8x128xf32>
      %511 = arith.mulf %484, %503 : vector<8x128xf32>
      %512 = arith.mulf %485, %503 : vector<8x128xf32>
      %513 = arith.mulf %265, %arg12 : vector<8x128xf32>
      %514 = arith.mulf %266, %arg13 : vector<8x128xf32>
      %515 = arith.addf %513, %514 : vector<8x128xf32>
      %516 = arith.mulf %265, %arg13 : vector<8x128xf32>
      %517 = arith.mulf %266, %arg12 : vector<8x128xf32>
      %518 = arith.subf %516, %517 : vector<8x128xf32>
      %519 = arith.mulf %267, %arg20 : vector<8x128xf32>
      %520 = arith.mulf %268, %arg21 : vector<8x128xf32>
      %521 = arith.addf %519, %520 : vector<8x128xf32>
      %522 = arith.mulf %267, %arg21 : vector<8x128xf32>
      %523 = arith.mulf %268, %arg20 : vector<8x128xf32>
      %524 = arith.subf %522, %523 : vector<8x128xf32>
      %525 = arith.addf %515, %521 : vector<8x128xf32>
      %526 = arith.addf %518, %524 : vector<8x128xf32>
      %527 = arith.mulf %269, %arg28 : vector<8x128xf32>
      %528 = arith.mulf %270, %arg29 : vector<8x128xf32>
      %529 = arith.addf %527, %528 : vector<8x128xf32>
      %530 = arith.mulf %269, %arg29 : vector<8x128xf32>
      %531 = arith.mulf %270, %arg28 : vector<8x128xf32>
      %532 = arith.subf %530, %531 : vector<8x128xf32>
      %533 = arith.addf %525, %529 : vector<8x128xf32>
      %534 = arith.addf %526, %532 : vector<8x128xf32>
      %535 = arith.mulf %271, %244 : vector<8x128xf32>
      %536 = arith.mulf %272, %245 : vector<8x128xf32>
      %537 = arith.addf %535, %536 : vector<8x128xf32>
      %538 = arith.mulf %271, %245 : vector<8x128xf32>
      %539 = arith.mulf %272, %244 : vector<8x128xf32>
      %540 = arith.subf %538, %539 : vector<8x128xf32>
      %541 = arith.addf %533, %537 : vector<8x128xf32>
      %542 = arith.addf %534, %540 : vector<8x128xf32>
      %543 = arith.mulf %541, %265 : vector<8x128xf32>
      %544 = arith.mulf %542, %266 : vector<8x128xf32>
      %545 = arith.subf %543, %544 : vector<8x128xf32>
      %546 = arith.mulf %541, %266 : vector<8x128xf32>
      %547 = arith.mulf %542, %265 : vector<8x128xf32>
      %548 = arith.addf %546, %547 : vector<8x128xf32>
      %549 = arith.subf %arg12, %545 : vector<8x128xf32>
      %550 = arith.subf %arg13, %548 : vector<8x128xf32>
      %551 = arith.mulf %541, %267 : vector<8x128xf32>
      %552 = arith.mulf %542, %268 : vector<8x128xf32>
      %553 = arith.subf %551, %552 : vector<8x128xf32>
      %554 = arith.mulf %541, %268 : vector<8x128xf32>
      %555 = arith.mulf %542, %267 : vector<8x128xf32>
      %556 = arith.addf %554, %555 : vector<8x128xf32>
      %557 = arith.subf %arg20, %553 : vector<8x128xf32>
      %558 = arith.subf %arg21, %556 : vector<8x128xf32>
      %559 = arith.mulf %541, %269 : vector<8x128xf32>
      %560 = arith.mulf %542, %270 : vector<8x128xf32>
      %561 = arith.subf %559, %560 : vector<8x128xf32>
      %562 = arith.mulf %541, %270 : vector<8x128xf32>
      %563 = arith.mulf %542, %269 : vector<8x128xf32>
      %564 = arith.addf %562, %563 : vector<8x128xf32>
      %565 = arith.subf %arg28, %561 : vector<8x128xf32>
      %566 = arith.subf %arg29, %564 : vector<8x128xf32>
      %567 = arith.mulf %541, %271 : vector<8x128xf32>
      %568 = arith.mulf %542, %272 : vector<8x128xf32>
      %569 = arith.subf %567, %568 : vector<8x128xf32>
      %570 = arith.mulf %541, %272 : vector<8x128xf32>
      %571 = arith.mulf %542, %271 : vector<8x128xf32>
      %572 = arith.addf %570, %571 : vector<8x128xf32>
      %573 = arith.subf %244, %569 : vector<8x128xf32>
      %574 = arith.subf %245, %572 : vector<8x128xf32>
      %575 = arith.mulf %354, %549 : vector<8x128xf32>
      %576 = arith.mulf %355, %550 : vector<8x128xf32>
      %577 = arith.addf %575, %576 : vector<8x128xf32>
      %578 = arith.mulf %354, %550 : vector<8x128xf32>
      %579 = arith.mulf %355, %549 : vector<8x128xf32>
      %580 = arith.subf %578, %579 : vector<8x128xf32>
      %581 = arith.mulf %356, %557 : vector<8x128xf32>
      %582 = arith.mulf %357, %558 : vector<8x128xf32>
      %583 = arith.addf %581, %582 : vector<8x128xf32>
      %584 = arith.mulf %356, %558 : vector<8x128xf32>
      %585 = arith.mulf %357, %557 : vector<8x128xf32>
      %586 = arith.subf %584, %585 : vector<8x128xf32>
      %587 = arith.addf %577, %583 : vector<8x128xf32>
      %588 = arith.addf %580, %586 : vector<8x128xf32>
      %589 = arith.mulf %358, %565 : vector<8x128xf32>
      %590 = arith.mulf %359, %566 : vector<8x128xf32>
      %591 = arith.addf %589, %590 : vector<8x128xf32>
      %592 = arith.mulf %358, %566 : vector<8x128xf32>
      %593 = arith.mulf %359, %565 : vector<8x128xf32>
      %594 = arith.subf %592, %593 : vector<8x128xf32>
      %595 = arith.addf %587, %591 : vector<8x128xf32>
      %596 = arith.addf %588, %594 : vector<8x128xf32>
      %597 = arith.mulf %360, %573 : vector<8x128xf32>
      %598 = arith.mulf %361, %574 : vector<8x128xf32>
      %599 = arith.addf %597, %598 : vector<8x128xf32>
      %600 = arith.mulf %360, %574 : vector<8x128xf32>
      %601 = arith.mulf %361, %573 : vector<8x128xf32>
      %602 = arith.subf %600, %601 : vector<8x128xf32>
      %603 = arith.addf %595, %599 : vector<8x128xf32>
      %604 = arith.addf %596, %602 : vector<8x128xf32>
      %605 = arith.mulf %603, %354 : vector<8x128xf32>
      %606 = arith.mulf %604, %355 : vector<8x128xf32>
      %607 = arith.subf %605, %606 : vector<8x128xf32>
      %608 = arith.mulf %603, %355 : vector<8x128xf32>
      %609 = arith.mulf %604, %354 : vector<8x128xf32>
      %610 = arith.addf %608, %609 : vector<8x128xf32>
      %611 = arith.subf %549, %607 : vector<8x128xf32>
      %612 = arith.subf %550, %610 : vector<8x128xf32>
      %613 = arith.mulf %603, %356 : vector<8x128xf32>
      %614 = arith.mulf %604, %357 : vector<8x128xf32>
      %615 = arith.subf %613, %614 : vector<8x128xf32>
      %616 = arith.mulf %603, %357 : vector<8x128xf32>
      %617 = arith.mulf %604, %356 : vector<8x128xf32>
      %618 = arith.addf %616, %617 : vector<8x128xf32>
      %619 = arith.subf %557, %615 : vector<8x128xf32>
      %620 = arith.subf %558, %618 : vector<8x128xf32>
      %621 = arith.mulf %603, %358 : vector<8x128xf32>
      %622 = arith.mulf %604, %359 : vector<8x128xf32>
      %623 = arith.subf %621, %622 : vector<8x128xf32>
      %624 = arith.mulf %603, %359 : vector<8x128xf32>
      %625 = arith.mulf %604, %358 : vector<8x128xf32>
      %626 = arith.addf %624, %625 : vector<8x128xf32>
      %627 = arith.subf %565, %623 : vector<8x128xf32>
      %628 = arith.subf %566, %626 : vector<8x128xf32>
      %629 = arith.mulf %603, %360 : vector<8x128xf32>
      %630 = arith.mulf %604, %361 : vector<8x128xf32>
      %631 = arith.subf %629, %630 : vector<8x128xf32>
      %632 = arith.mulf %603, %361 : vector<8x128xf32>
      %633 = arith.mulf %604, %360 : vector<8x128xf32>
      %634 = arith.addf %632, %633 : vector<8x128xf32>
      %635 = arith.subf %573, %631 : vector<8x128xf32>
      %636 = arith.subf %574, %634 : vector<8x128xf32>
      %637 = arith.mulf %505, %611 : vector<8x128xf32>
      %638 = arith.mulf %506, %612 : vector<8x128xf32>
      %639 = arith.addf %637, %638 : vector<8x128xf32>
      %640 = arith.mulf %505, %612 : vector<8x128xf32>
      %641 = arith.mulf %506, %611 : vector<8x128xf32>
      %642 = arith.subf %640, %641 : vector<8x128xf32>
      %643 = arith.mulf %507, %619 : vector<8x128xf32>
      %644 = arith.mulf %508, %620 : vector<8x128xf32>
      %645 = arith.addf %643, %644 : vector<8x128xf32>
      %646 = arith.mulf %507, %620 : vector<8x128xf32>
      %647 = arith.mulf %508, %619 : vector<8x128xf32>
      %648 = arith.subf %646, %647 : vector<8x128xf32>
      %649 = arith.addf %639, %645 : vector<8x128xf32>
      %650 = arith.addf %642, %648 : vector<8x128xf32>
      %651 = arith.mulf %509, %627 : vector<8x128xf32>
      %652 = arith.mulf %510, %628 : vector<8x128xf32>
      %653 = arith.addf %651, %652 : vector<8x128xf32>
      %654 = arith.mulf %509, %628 : vector<8x128xf32>
      %655 = arith.mulf %510, %627 : vector<8x128xf32>
      %656 = arith.subf %654, %655 : vector<8x128xf32>
      %657 = arith.addf %649, %653 : vector<8x128xf32>
      %658 = arith.addf %650, %656 : vector<8x128xf32>
      %659 = arith.mulf %511, %635 : vector<8x128xf32>
      %660 = arith.mulf %512, %636 : vector<8x128xf32>
      %661 = arith.addf %659, %660 : vector<8x128xf32>
      %662 = arith.mulf %511, %636 : vector<8x128xf32>
      %663 = arith.mulf %512, %635 : vector<8x128xf32>
      %664 = arith.subf %662, %663 : vector<8x128xf32>
      %665 = arith.addf %657, %661 : vector<8x128xf32>
      %666 = arith.addf %658, %664 : vector<8x128xf32>
      %667 = arith.mulf %665, %505 : vector<8x128xf32>
      %668 = arith.mulf %666, %506 : vector<8x128xf32>
      %669 = arith.subf %667, %668 : vector<8x128xf32>
      %670 = arith.mulf %665, %506 : vector<8x128xf32>
      %671 = arith.mulf %666, %505 : vector<8x128xf32>
      %672 = arith.addf %670, %671 : vector<8x128xf32>
      %673 = arith.subf %611, %669 : vector<8x128xf32>
      %674 = arith.subf %612, %672 : vector<8x128xf32>
      %675 = arith.mulf %665, %507 : vector<8x128xf32>
      %676 = arith.mulf %666, %508 : vector<8x128xf32>
      %677 = arith.subf %675, %676 : vector<8x128xf32>
      %678 = arith.mulf %665, %508 : vector<8x128xf32>
      %679 = arith.mulf %666, %507 : vector<8x128xf32>
      %680 = arith.addf %678, %679 : vector<8x128xf32>
      %681 = arith.subf %619, %677 : vector<8x128xf32>
      %682 = arith.subf %620, %680 : vector<8x128xf32>
      %683 = arith.mulf %665, %509 : vector<8x128xf32>
      %684 = arith.mulf %666, %510 : vector<8x128xf32>
      %685 = arith.subf %683, %684 : vector<8x128xf32>
      %686 = arith.mulf %665, %510 : vector<8x128xf32>
      %687 = arith.mulf %666, %509 : vector<8x128xf32>
      %688 = arith.addf %686, %687 : vector<8x128xf32>
      %689 = arith.subf %627, %685 : vector<8x128xf32>
      %690 = arith.subf %628, %688 : vector<8x128xf32>
      %691 = arith.mulf %665, %511 : vector<8x128xf32>
      %692 = arith.mulf %666, %512 : vector<8x128xf32>
      %693 = arith.subf %691, %692 : vector<8x128xf32>
      %694 = arith.mulf %665, %512 : vector<8x128xf32>
      %695 = arith.mulf %666, %511 : vector<8x128xf32>
      %696 = arith.addf %694, %695 : vector<8x128xf32>
      %697 = arith.subf %635, %693 : vector<8x128xf32>
      %698 = arith.subf %636, %696 : vector<8x128xf32>
      %699 = arith.mulf %673, %673 : vector<8x128xf32>
      %700 = arith.mulf %674, %674 : vector<8x128xf32>
      %701 = arith.addf %699, %700 : vector<8x128xf32>
      %702 = arith.mulf %681, %681 : vector<8x128xf32>
      %703 = arith.mulf %682, %682 : vector<8x128xf32>
      %704 = arith.addf %702, %703 : vector<8x128xf32>
      %705 = arith.addf %701, %704 : vector<8x128xf32>
      %706 = arith.mulf %689, %689 : vector<8x128xf32>
      %707 = arith.mulf %690, %690 : vector<8x128xf32>
      %708 = arith.addf %706, %707 : vector<8x128xf32>
      %709 = arith.addf %705, %708 : vector<8x128xf32>
      %710 = arith.mulf %697, %697 : vector<8x128xf32>
      %711 = arith.mulf %698, %698 : vector<8x128xf32>
      %712 = arith.addf %710, %711 : vector<8x128xf32>
      %713 = arith.addf %709, %712 : vector<8x128xf32>
      %cst_157 = arith.constant 1.000000e-30 : f32
      %714 = vector.broadcast %cst_157 : f32 to vector<8x128xf32>
      %715 = arith.maximumf %713, %714 : vector<8x128xf32>
      %716 = math.rsqrt %715 : vector<8x128xf32>
      %717 = arith.mulf %713, %716 : vector<8x128xf32>
      %718 = arith.mulf %673, %716 : vector<8x128xf32>
      %719 = arith.mulf %674, %716 : vector<8x128xf32>
      %720 = arith.mulf %681, %716 : vector<8x128xf32>
      %721 = arith.mulf %682, %716 : vector<8x128xf32>
      %722 = arith.mulf %689, %716 : vector<8x128xf32>
      %723 = arith.mulf %690, %716 : vector<8x128xf32>
      %724 = arith.mulf %697, %716 : vector<8x128xf32>
      %725 = arith.mulf %698, %716 : vector<8x128xf32>
      %726 = arith.mulf %264, %265 : vector<8x128xf32>
      %727 = arith.mulf %264, %266 : vector<8x128xf32>
      %728 = arith.mulf %301, %267 : vector<8x128xf32>
      %729 = arith.mulf %302, %268 : vector<8x128xf32>
      %730 = arith.subf %728, %729 : vector<8x128xf32>
      %731 = arith.mulf %301, %268 : vector<8x128xf32>
      %732 = arith.mulf %302, %267 : vector<8x128xf32>
      %733 = arith.addf %731, %732 : vector<8x128xf32>
      %734 = arith.addf %726, %730 : vector<8x128xf32>
      %735 = arith.addf %727, %733 : vector<8x128xf32>
      %736 = arith.mulf %390, %269 : vector<8x128xf32>
      %737 = arith.mulf %391, %270 : vector<8x128xf32>
      %738 = arith.subf %736, %737 : vector<8x128xf32>
      %739 = arith.mulf %390, %270 : vector<8x128xf32>
      %740 = arith.mulf %391, %269 : vector<8x128xf32>
      %741 = arith.addf %739, %740 : vector<8x128xf32>
      %742 = arith.addf %734, %738 : vector<8x128xf32>
      %743 = arith.addf %735, %741 : vector<8x128xf32>
      %744 = arith.mulf %541, %271 : vector<8x128xf32>
      %745 = arith.mulf %542, %272 : vector<8x128xf32>
      %746 = arith.subf %744, %745 : vector<8x128xf32>
      %747 = arith.mulf %541, %272 : vector<8x128xf32>
      %748 = arith.mulf %542, %271 : vector<8x128xf32>
      %749 = arith.addf %747, %748 : vector<8x128xf32>
      %750 = arith.addf %742, %746 : vector<8x128xf32>
      %751 = arith.addf %743, %749 : vector<8x128xf32>
      %752 = arith.addf %750, %236 : vector<8x128xf32>
      %753 = arith.addf %751, %237 : vector<8x128xf32>
      %754 = arith.mulf %264, %354 : vector<8x128xf32>
      %755 = arith.mulf %264, %355 : vector<8x128xf32>
      %756 = arith.mulf %301, %356 : vector<8x128xf32>
      %757 = arith.mulf %302, %357 : vector<8x128xf32>
      %758 = arith.subf %756, %757 : vector<8x128xf32>
      %759 = arith.mulf %301, %357 : vector<8x128xf32>
      %760 = arith.mulf %302, %356 : vector<8x128xf32>
      %761 = arith.addf %759, %760 : vector<8x128xf32>
      %762 = arith.addf %754, %758 : vector<8x128xf32>
      %763 = arith.addf %755, %761 : vector<8x128xf32>
      %764 = arith.mulf %390, %358 : vector<8x128xf32>
      %765 = arith.mulf %391, %359 : vector<8x128xf32>
      %766 = arith.subf %764, %765 : vector<8x128xf32>
      %767 = arith.mulf %390, %359 : vector<8x128xf32>
      %768 = arith.mulf %391, %358 : vector<8x128xf32>
      %769 = arith.addf %767, %768 : vector<8x128xf32>
      %770 = arith.addf %762, %766 : vector<8x128xf32>
      %771 = arith.addf %763, %769 : vector<8x128xf32>
      %772 = arith.mulf %541, %360 : vector<8x128xf32>
      %773 = arith.mulf %542, %361 : vector<8x128xf32>
      %774 = arith.subf %772, %773 : vector<8x128xf32>
      %775 = arith.mulf %541, %361 : vector<8x128xf32>
      %776 = arith.mulf %542, %360 : vector<8x128xf32>
      %777 = arith.addf %775, %776 : vector<8x128xf32>
      %778 = arith.addf %770, %774 : vector<8x128xf32>
      %779 = arith.addf %771, %777 : vector<8x128xf32>
      %780 = arith.mulf %264, %505 : vector<8x128xf32>
      %781 = arith.mulf %264, %506 : vector<8x128xf32>
      %782 = arith.mulf %301, %507 : vector<8x128xf32>
      %783 = arith.mulf %302, %508 : vector<8x128xf32>
      %784 = arith.subf %782, %783 : vector<8x128xf32>
      %785 = arith.mulf %301, %508 : vector<8x128xf32>
      %786 = arith.mulf %302, %507 : vector<8x128xf32>
      %787 = arith.addf %785, %786 : vector<8x128xf32>
      %788 = arith.addf %780, %784 : vector<8x128xf32>
      %789 = arith.addf %781, %787 : vector<8x128xf32>
      %790 = arith.mulf %390, %509 : vector<8x128xf32>
      %791 = arith.mulf %391, %510 : vector<8x128xf32>
      %792 = arith.subf %790, %791 : vector<8x128xf32>
      %793 = arith.mulf %390, %510 : vector<8x128xf32>
      %794 = arith.mulf %391, %509 : vector<8x128xf32>
      %795 = arith.addf %793, %794 : vector<8x128xf32>
      %796 = arith.addf %788, %792 : vector<8x128xf32>
      %797 = arith.addf %789, %795 : vector<8x128xf32>
      %798 = arith.mulf %541, %511 : vector<8x128xf32>
      %799 = arith.mulf %542, %512 : vector<8x128xf32>
      %800 = arith.subf %798, %799 : vector<8x128xf32>
      %801 = arith.mulf %541, %512 : vector<8x128xf32>
      %802 = arith.mulf %542, %511 : vector<8x128xf32>
      %803 = arith.addf %801, %802 : vector<8x128xf32>
      %804 = arith.addf %796, %800 : vector<8x128xf32>
      %805 = arith.addf %797, %803 : vector<8x128xf32>
      %806 = arith.mulf %264, %718 : vector<8x128xf32>
      %807 = arith.mulf %264, %719 : vector<8x128xf32>
      %808 = arith.mulf %301, %720 : vector<8x128xf32>
      %809 = arith.mulf %302, %721 : vector<8x128xf32>
      %810 = arith.subf %808, %809 : vector<8x128xf32>
      %811 = arith.mulf %301, %721 : vector<8x128xf32>
      %812 = arith.mulf %302, %720 : vector<8x128xf32>
      %813 = arith.addf %811, %812 : vector<8x128xf32>
      %814 = arith.addf %806, %810 : vector<8x128xf32>
      %815 = arith.addf %807, %813 : vector<8x128xf32>
      %816 = arith.mulf %390, %722 : vector<8x128xf32>
      %817 = arith.mulf %391, %723 : vector<8x128xf32>
      %818 = arith.subf %816, %817 : vector<8x128xf32>
      %819 = arith.mulf %390, %723 : vector<8x128xf32>
      %820 = arith.mulf %391, %722 : vector<8x128xf32>
      %821 = arith.addf %819, %820 : vector<8x128xf32>
      %822 = arith.addf %814, %818 : vector<8x128xf32>
      %823 = arith.addf %815, %821 : vector<8x128xf32>
      %824 = arith.mulf %541, %724 : vector<8x128xf32>
      %825 = arith.mulf %542, %725 : vector<8x128xf32>
      %826 = arith.subf %824, %825 : vector<8x128xf32>
      %827 = arith.mulf %541, %725 : vector<8x128xf32>
      %828 = arith.mulf %542, %724 : vector<8x128xf32>
      %829 = arith.addf %827, %828 : vector<8x128xf32>
      %830 = arith.addf %822, %826 : vector<8x128xf32>
      %831 = arith.addf %823, %829 : vector<8x128xf32>
      %832 = arith.mulf %353, %267 : vector<8x128xf32>
      %833 = arith.mulf %353, %268 : vector<8x128xf32>
      %834 = arith.mulf %452, %269 : vector<8x128xf32>
      %835 = arith.mulf %453, %270 : vector<8x128xf32>
      %836 = arith.subf %834, %835 : vector<8x128xf32>
      %837 = arith.mulf %452, %270 : vector<8x128xf32>
      %838 = arith.mulf %453, %269 : vector<8x128xf32>
      %839 = arith.addf %837, %838 : vector<8x128xf32>
      %840 = arith.addf %832, %836 : vector<8x128xf32>
      %841 = arith.addf %833, %839 : vector<8x128xf32>
      %842 = arith.mulf %603, %271 : vector<8x128xf32>
      %843 = arith.mulf %604, %272 : vector<8x128xf32>
      %844 = arith.subf %842, %843 : vector<8x128xf32>
      %845 = arith.mulf %603, %272 : vector<8x128xf32>
      %846 = arith.mulf %604, %271 : vector<8x128xf32>
      %847 = arith.addf %845, %846 : vector<8x128xf32>
      %848 = arith.addf %840, %844 : vector<8x128xf32>
      %849 = arith.addf %841, %847 : vector<8x128xf32>
      %850 = arith.mulf %353, %356 : vector<8x128xf32>
      %851 = arith.mulf %353, %357 : vector<8x128xf32>
      %852 = arith.mulf %452, %358 : vector<8x128xf32>
      %853 = arith.mulf %453, %359 : vector<8x128xf32>
      %854 = arith.subf %852, %853 : vector<8x128xf32>
      %855 = arith.mulf %452, %359 : vector<8x128xf32>
      %856 = arith.mulf %453, %358 : vector<8x128xf32>
      %857 = arith.addf %855, %856 : vector<8x128xf32>
      %858 = arith.addf %850, %854 : vector<8x128xf32>
      %859 = arith.addf %851, %857 : vector<8x128xf32>
      %860 = arith.mulf %603, %360 : vector<8x128xf32>
      %861 = arith.mulf %604, %361 : vector<8x128xf32>
      %862 = arith.subf %860, %861 : vector<8x128xf32>
      %863 = arith.mulf %603, %361 : vector<8x128xf32>
      %864 = arith.mulf %604, %360 : vector<8x128xf32>
      %865 = arith.addf %863, %864 : vector<8x128xf32>
      %866 = arith.addf %858, %862 : vector<8x128xf32>
      %867 = arith.addf %859, %865 : vector<8x128xf32>
      %868 = arith.addf %866, %236 : vector<8x128xf32>
      %869 = arith.addf %867, %237 : vector<8x128xf32>
      %870 = arith.mulf %353, %507 : vector<8x128xf32>
      %871 = arith.mulf %353, %508 : vector<8x128xf32>
      %872 = arith.mulf %452, %509 : vector<8x128xf32>
      %873 = arith.mulf %453, %510 : vector<8x128xf32>
      %874 = arith.subf %872, %873 : vector<8x128xf32>
      %875 = arith.mulf %452, %510 : vector<8x128xf32>
      %876 = arith.mulf %453, %509 : vector<8x128xf32>
      %877 = arith.addf %875, %876 : vector<8x128xf32>
      %878 = arith.addf %870, %874 : vector<8x128xf32>
      %879 = arith.addf %871, %877 : vector<8x128xf32>
      %880 = arith.mulf %603, %511 : vector<8x128xf32>
      %881 = arith.mulf %604, %512 : vector<8x128xf32>
      %882 = arith.subf %880, %881 : vector<8x128xf32>
      %883 = arith.mulf %603, %512 : vector<8x128xf32>
      %884 = arith.mulf %604, %511 : vector<8x128xf32>
      %885 = arith.addf %883, %884 : vector<8x128xf32>
      %886 = arith.addf %878, %882 : vector<8x128xf32>
      %887 = arith.addf %879, %885 : vector<8x128xf32>
      %888 = arith.mulf %353, %720 : vector<8x128xf32>
      %889 = arith.mulf %353, %721 : vector<8x128xf32>
      %890 = arith.mulf %452, %722 : vector<8x128xf32>
      %891 = arith.mulf %453, %723 : vector<8x128xf32>
      %892 = arith.subf %890, %891 : vector<8x128xf32>
      %893 = arith.mulf %452, %723 : vector<8x128xf32>
      %894 = arith.mulf %453, %722 : vector<8x128xf32>
      %895 = arith.addf %893, %894 : vector<8x128xf32>
      %896 = arith.addf %888, %892 : vector<8x128xf32>
      %897 = arith.addf %889, %895 : vector<8x128xf32>
      %898 = arith.mulf %603, %724 : vector<8x128xf32>
      %899 = arith.mulf %604, %725 : vector<8x128xf32>
      %900 = arith.subf %898, %899 : vector<8x128xf32>
      %901 = arith.mulf %603, %725 : vector<8x128xf32>
      %902 = arith.mulf %604, %724 : vector<8x128xf32>
      %903 = arith.addf %901, %902 : vector<8x128xf32>
      %904 = arith.addf %896, %900 : vector<8x128xf32>
      %905 = arith.addf %897, %903 : vector<8x128xf32>
      %906 = arith.mulf %504, %269 : vector<8x128xf32>
      %907 = arith.mulf %504, %270 : vector<8x128xf32>
      %908 = arith.mulf %665, %271 : vector<8x128xf32>
      %909 = arith.mulf %666, %272 : vector<8x128xf32>
      %910 = arith.subf %908, %909 : vector<8x128xf32>
      %911 = arith.mulf %665, %272 : vector<8x128xf32>
      %912 = arith.mulf %666, %271 : vector<8x128xf32>
      %913 = arith.addf %911, %912 : vector<8x128xf32>
      %914 = arith.addf %906, %910 : vector<8x128xf32>
      %915 = arith.addf %907, %913 : vector<8x128xf32>
      %916 = arith.mulf %504, %358 : vector<8x128xf32>
      %917 = arith.mulf %504, %359 : vector<8x128xf32>
      %918 = arith.mulf %665, %360 : vector<8x128xf32>
      %919 = arith.mulf %666, %361 : vector<8x128xf32>
      %920 = arith.subf %918, %919 : vector<8x128xf32>
      %921 = arith.mulf %665, %361 : vector<8x128xf32>
      %922 = arith.mulf %666, %360 : vector<8x128xf32>
      %923 = arith.addf %921, %922 : vector<8x128xf32>
      %924 = arith.addf %916, %920 : vector<8x128xf32>
      %925 = arith.addf %917, %923 : vector<8x128xf32>
      %926 = arith.mulf %504, %509 : vector<8x128xf32>
      %927 = arith.mulf %504, %510 : vector<8x128xf32>
      %928 = arith.mulf %665, %511 : vector<8x128xf32>
      %929 = arith.mulf %666, %512 : vector<8x128xf32>
      %930 = arith.subf %928, %929 : vector<8x128xf32>
      %931 = arith.mulf %665, %512 : vector<8x128xf32>
      %932 = arith.mulf %666, %511 : vector<8x128xf32>
      %933 = arith.addf %931, %932 : vector<8x128xf32>
      %934 = arith.addf %926, %930 : vector<8x128xf32>
      %935 = arith.addf %927, %933 : vector<8x128xf32>
      %936 = arith.addf %934, %236 : vector<8x128xf32>
      %937 = arith.addf %935, %237 : vector<8x128xf32>
      %938 = arith.mulf %504, %722 : vector<8x128xf32>
      %939 = arith.mulf %504, %723 : vector<8x128xf32>
      %940 = arith.mulf %665, %724 : vector<8x128xf32>
      %941 = arith.mulf %666, %725 : vector<8x128xf32>
      %942 = arith.subf %940, %941 : vector<8x128xf32>
      %943 = arith.mulf %665, %725 : vector<8x128xf32>
      %944 = arith.mulf %666, %724 : vector<8x128xf32>
      %945 = arith.addf %943, %944 : vector<8x128xf32>
      %946 = arith.addf %938, %942 : vector<8x128xf32>
      %947 = arith.addf %939, %945 : vector<8x128xf32>
      %948 = arith.mulf %717, %271 : vector<8x128xf32>
      %949 = arith.mulf %717, %272 : vector<8x128xf32>
      %950 = arith.mulf %717, %360 : vector<8x128xf32>
      %951 = arith.mulf %717, %361 : vector<8x128xf32>
      %952 = arith.mulf %717, %511 : vector<8x128xf32>
      %953 = arith.mulf %717, %512 : vector<8x128xf32>
      %954 = arith.mulf %717, %724 : vector<8x128xf32>
      %955 = arith.mulf %717, %725 : vector<8x128xf32>
      %956 = arith.addf %954, %236 : vector<8x128xf32>
      %957 = arith.addf %955, %237 : vector<8x128xf32>
      scf.yield %752, %753, %778, %779, %804, %805, %830, %831, %848, %849, %868, %869, %886, %887, %904, %905, %914, %915, %924, %925, %936, %937, %946, %947, %948, %949, %950, %951, %952, %953, %956, %957 : vector<8x128xf32>, vector<8x128xf32>, vector<8x128xf32>, vector<8x128xf32>, vector<8x128xf32>, vector<8x128xf32>, vector<8x128xf32>, vector<8x128xf32>, vector<8x128xf32>, vector<8x128xf32>, vector<8x128xf32>, vector<8x128xf32>, vector<8x128xf32>, vector<8x128xf32>, vector<8x128xf32>, vector<8x128xf32>, vector<8x128xf32>, vector<8x128xf32>, vector<8x128xf32>, vector<8x128xf32>, vector<8x128xf32>, vector<8x128xf32>, vector<8x128xf32>, vector<8x128xf32>, vector<8x128xf32>, vector<8x128xf32>, vector<8x128xf32>, vector<8x128xf32>, vector<8x128xf32>, vector<8x128xf32>, vector<8x128xf32>, vector<8x128xf32>
    }
    %c0_i32_112 = arith.constant 0 : i32
    %c10_i32 = arith.constant 10 : i32
    %66 = arith.addi %c0_i32_112, %c10_i32 : i32
    %c1_i32_113 = arith.constant 1 : i32
    %67:18 = scf.for %arg5 = %c0_i32_112 to %66 step %c1_i32_113 iter_args(%arg6 = %65#0, %arg7 = %65#1, %arg8 = %65#2, %arg9 = %65#3, %arg10 = %65#4, %arg11 = %65#5, %arg12 = %65#8, %arg13 = %65#9, %arg14 = %65#10, %arg15 = %65#11, %arg16 = %65#12, %arg17 = %65#13, %arg18 = %65#16, %arg19 = %65#17, %arg20 = %65#18, %arg21 = %65#19, %arg22 = %65#20, %arg23 = %65#21) -> (vector<8x128xf32>, vector<8x128xf32>, vector<8x128xf32>, vector<8x128xf32>, vector<8x128xf32>, vector<8x128xf32>, vector<8x128xf32>, vector<8x128xf32>, vector<8x128xf32>, vector<8x128xf32>, vector<8x128xf32>, vector<8x128xf32>, vector<8x128xf32>, vector<8x128xf32>, vector<8x128xf32>, vector<8x128xf32>, vector<8x128xf32>, vector<8x128xf32>)  : i32 {
      %173 = arith.addf %arg14, %arg22 : vector<8x128xf32>
      %cst_143 = arith.constant 5.000000e-01 : f32
      %174 = vector.broadcast %cst_143 : f32 to vector<8x128xf32>
      %175 = arith.mulf %174, %173 : vector<8x128xf32>
      %176 = arith.addf %arg15, %arg23 : vector<8x128xf32>
      %cst_144 = arith.constant 5.000000e-01 : f32
      %177 = vector.broadcast %cst_144 : f32 to vector<8x128xf32>
      %178 = arith.mulf %177, %176 : vector<8x128xf32>
      %179 = arith.subf %arg14, %arg22 : vector<8x128xf32>
      %cst_145 = arith.constant 5.000000e-01 : f32
      %180 = vector.broadcast %cst_145 : f32 to vector<8x128xf32>
      %181 = arith.mulf %180, %179 : vector<8x128xf32>
      %182 = arith.subf %arg15, %arg23 : vector<8x128xf32>
      %cst_146 = arith.constant 5.000000e-01 : f32
      %183 = vector.broadcast %cst_146 : f32 to vector<8x128xf32>
      %184 = arith.mulf %183, %182 : vector<8x128xf32>
      %185 = arith.mulf %181, %181 : vector<8x128xf32>
      %186 = arith.mulf %184, %184 : vector<8x128xf32>
      %187 = arith.subf %185, %186 : vector<8x128xf32>
      %188 = arith.mulf %181, %184 : vector<8x128xf32>
      %189 = arith.mulf %184, %181 : vector<8x128xf32>
      %190 = arith.addf %188, %189 : vector<8x128xf32>
      %191 = arith.mulf %arg16, %arg20 : vector<8x128xf32>
      %192 = arith.mulf %arg17, %arg21 : vector<8x128xf32>
      %193 = arith.subf %191, %192 : vector<8x128xf32>
      %194 = arith.mulf %arg16, %arg21 : vector<8x128xf32>
      %195 = arith.mulf %arg17, %arg20 : vector<8x128xf32>
      %196 = arith.addf %194, %195 : vector<8x128xf32>
      %197 = arith.addf %187, %193 : vector<8x128xf32>
      %198 = arith.addf %190, %196 : vector<8x128xf32>
      %199 = arith.mulf %197, %197 : vector<8x128xf32>
      %200 = arith.mulf %198, %198 : vector<8x128xf32>
      %201 = arith.addf %199, %200 : vector<8x128xf32>
      %202 = math.sqrt %201 : vector<8x128xf32>
      %203 = arith.addf %202, %197 : vector<8x128xf32>
      %cst_147 = arith.constant 5.000000e-01 : f32
      %204 = vector.broadcast %cst_147 : f32 to vector<8x128xf32>
      %205 = arith.mulf %204, %203 : vector<8x128xf32>
      %cst_148 = arith.constant 0.000000e+00 : f32
      %206 = vector.broadcast %cst_148 : f32 to vector<8x128xf32>
      %207 = arith.maximumf %205, %206 : vector<8x128xf32>
      %208 = math.sqrt %207 : vector<8x128xf32>
      %209 = arith.subf %202, %197 : vector<8x128xf32>
      %cst_149 = arith.constant 5.000000e-01 : f32
      %210 = vector.broadcast %cst_149 : f32 to vector<8x128xf32>
      %211 = arith.mulf %210, %209 : vector<8x128xf32>
      %cst_150 = arith.constant 0.000000e+00 : f32
      %212 = vector.broadcast %cst_150 : f32 to vector<8x128xf32>
      %213 = arith.maximumf %211, %212 : vector<8x128xf32>
      %214 = math.sqrt %213 : vector<8x128xf32>
      %cst_151 = arith.constant 0.000000e+00 : f32
      %215 = vector.broadcast %cst_151 : f32 to vector<8x128xf32>
      %216 = arith.cmpf oge, %198, %215 : vector<8x128xf32>
      %cst_152 = arith.constant 1.000000e+00 : f32
      %cst_153 = arith.constant -1.000000e+00 : f32
      %217 = vector.broadcast %cst_152 : f32 to vector<8x128xf32>
      %218 = vector.broadcast %cst_153 : f32 to vector<8x128xf32>
      %219 = arith.select %216, %217, %218 : vector<8x128xi1>, vector<8x128xf32>
      %220 = arith.mulf %219, %214 : vector<8x128xf32>
      %221 = arith.addf %175, %208 : vector<8x128xf32>
      %222 = arith.addf %178, %220 : vector<8x128xf32>
      %223 = arith.subf %175, %208 : vector<8x128xf32>
      %224 = arith.subf %178, %220 : vector<8x128xf32>
      %225 = arith.subf %221, %arg22 : vector<8x128xf32>
      %226 = arith.subf %222, %arg23 : vector<8x128xf32>
      %227 = arith.mulf %225, %225 : vector<8x128xf32>
      %228 = arith.mulf %226, %226 : vector<8x128xf32>
      %229 = arith.addf %227, %228 : vector<8x128xf32>
      %230 = arith.subf %223, %arg22 : vector<8x128xf32>
      %231 = arith.subf %224, %arg23 : vector<8x128xf32>
      %232 = arith.mulf %230, %230 : vector<8x128xf32>
      %233 = arith.mulf %231, %231 : vector<8x128xf32>
      %234 = arith.addf %232, %233 : vector<8x128xf32>
      %235 = arith.cmpf ole, %229, %234 : vector<8x128xf32>
      %236 = arith.select %235, %221, %223 : vector<8x128xi1>, vector<8x128xf32>
      %237 = arith.select %235, %222, %224 : vector<8x128xi1>, vector<8x128xf32>
      %238 = arith.subf %arg6, %236 : vector<8x128xf32>
      %239 = arith.subf %arg7, %237 : vector<8x128xf32>
      %240 = arith.subf %arg14, %236 : vector<8x128xf32>
      %241 = arith.subf %arg15, %237 : vector<8x128xf32>
      %242 = arith.subf %arg22, %236 : vector<8x128xf32>
      %243 = arith.subf %arg23, %237 : vector<8x128xf32>
      %244 = arith.mulf %238, %238 : vector<8x128xf32>
      %245 = arith.mulf %239, %239 : vector<8x128xf32>
      %246 = arith.addf %244, %245 : vector<8x128xf32>
      %247 = arith.mulf %arg12, %arg12 : vector<8x128xf32>
      %248 = arith.mulf %arg13, %arg13 : vector<8x128xf32>
      %249 = arith.addf %247, %248 : vector<8x128xf32>
      %250 = arith.addf %246, %249 : vector<8x128xf32>
      %251 = arith.mulf %arg18, %arg18 : vector<8x128xf32>
      %252 = arith.mulf %arg19, %arg19 : vector<8x128xf32>
      %253 = arith.addf %251, %252 : vector<8x128xf32>
      %254 = arith.addf %250, %253 : vector<8x128xf32>
      %cst_154 = arith.constant 1.000000e-30 : f32
      %255 = vector.broadcast %cst_154 : f32 to vector<8x128xf32>
      %256 = arith.maximumf %254, %255 : vector<8x128xf32>
      %257 = math.rsqrt %256 : vector<8x128xf32>
      %258 = arith.mulf %254, %257 : vector<8x128xf32>
      %259 = arith.mulf %238, %257 : vector<8x128xf32>
      %260 = arith.mulf %239, %257 : vector<8x128xf32>
      %261 = arith.mulf %arg12, %257 : vector<8x128xf32>
      %262 = arith.mulf %arg13, %257 : vector<8x128xf32>
      %263 = arith.mulf %arg18, %257 : vector<8x128xf32>
      %264 = arith.mulf %arg19, %257 : vector<8x128xf32>
      %265 = arith.mulf %259, %arg8 : vector<8x128xf32>
      %266 = arith.mulf %260, %arg9 : vector<8x128xf32>
      %267 = arith.addf %265, %266 : vector<8x128xf32>
      %268 = arith.mulf %259, %arg9 : vector<8x128xf32>
      %269 = arith.mulf %260, %arg8 : vector<8x128xf32>
      %270 = arith.subf %268, %269 : vector<8x128xf32>
      %271 = arith.mulf %261, %240 : vector<8x128xf32>
      %272 = arith.mulf %262, %241 : vector<8x128xf32>
      %273 = arith.addf %271, %272 : vector<8x128xf32>
      %274 = arith.mulf %261, %241 : vector<8x128xf32>
      %275 = arith.mulf %262, %240 : vector<8x128xf32>
      %276 = arith.subf %274, %275 : vector<8x128xf32>
      %277 = arith.addf %267, %273 : vector<8x128xf32>
      %278 = arith.addf %270, %276 : vector<8x128xf32>
      %279 = arith.mulf %263, %arg20 : vector<8x128xf32>
      %280 = arith.mulf %264, %arg21 : vector<8x128xf32>
      %281 = arith.addf %279, %280 : vector<8x128xf32>
      %282 = arith.mulf %263, %arg21 : vector<8x128xf32>
      %283 = arith.mulf %264, %arg20 : vector<8x128xf32>
      %284 = arith.subf %282, %283 : vector<8x128xf32>
      %285 = arith.addf %277, %281 : vector<8x128xf32>
      %286 = arith.addf %278, %284 : vector<8x128xf32>
      %287 = arith.mulf %285, %259 : vector<8x128xf32>
      %288 = arith.mulf %286, %260 : vector<8x128xf32>
      %289 = arith.subf %287, %288 : vector<8x128xf32>
      %290 = arith.mulf %285, %260 : vector<8x128xf32>
      %291 = arith.mulf %286, %259 : vector<8x128xf32>
      %292 = arith.addf %290, %291 : vector<8x128xf32>
      %293 = arith.subf %arg8, %289 : vector<8x128xf32>
      %294 = arith.subf %arg9, %292 : vector<8x128xf32>
      %295 = arith.mulf %285, %261 : vector<8x128xf32>
      %296 = arith.mulf %286, %262 : vector<8x128xf32>
      %297 = arith.subf %295, %296 : vector<8x128xf32>
      %298 = arith.mulf %285, %262 : vector<8x128xf32>
      %299 = arith.mulf %286, %261 : vector<8x128xf32>
      %300 = arith.addf %298, %299 : vector<8x128xf32>
      %301 = arith.subf %240, %297 : vector<8x128xf32>
      %302 = arith.subf %241, %300 : vector<8x128xf32>
      %303 = arith.mulf %285, %263 : vector<8x128xf32>
      %304 = arith.mulf %286, %264 : vector<8x128xf32>
      %305 = arith.subf %303, %304 : vector<8x128xf32>
      %306 = arith.mulf %285, %264 : vector<8x128xf32>
      %307 = arith.mulf %286, %263 : vector<8x128xf32>
      %308 = arith.addf %306, %307 : vector<8x128xf32>
      %309 = arith.subf %arg20, %305 : vector<8x128xf32>
      %310 = arith.subf %arg21, %308 : vector<8x128xf32>
      %311 = arith.mulf %293, %293 : vector<8x128xf32>
      %312 = arith.mulf %294, %294 : vector<8x128xf32>
      %313 = arith.addf %311, %312 : vector<8x128xf32>
      %314 = arith.mulf %301, %301 : vector<8x128xf32>
      %315 = arith.mulf %302, %302 : vector<8x128xf32>
      %316 = arith.addf %314, %315 : vector<8x128xf32>
      %317 = arith.addf %313, %316 : vector<8x128xf32>
      %318 = arith.mulf %309, %309 : vector<8x128xf32>
      %319 = arith.mulf %310, %310 : vector<8x128xf32>
      %320 = arith.addf %318, %319 : vector<8x128xf32>
      %321 = arith.addf %317, %320 : vector<8x128xf32>
      %cst_155 = arith.constant 1.000000e-30 : f32
      %322 = vector.broadcast %cst_155 : f32 to vector<8x128xf32>
      %323 = arith.maximumf %321, %322 : vector<8x128xf32>
      %324 = math.rsqrt %323 : vector<8x128xf32>
      %325 = arith.mulf %321, %324 : vector<8x128xf32>
      %326 = arith.mulf %293, %324 : vector<8x128xf32>
      %327 = arith.mulf %294, %324 : vector<8x128xf32>
      %328 = arith.mulf %301, %324 : vector<8x128xf32>
      %329 = arith.mulf %302, %324 : vector<8x128xf32>
      %330 = arith.mulf %309, %324 : vector<8x128xf32>
      %331 = arith.mulf %310, %324 : vector<8x128xf32>
      %332 = arith.mulf %259, %arg10 : vector<8x128xf32>
      %333 = arith.mulf %260, %arg11 : vector<8x128xf32>
      %334 = arith.addf %332, %333 : vector<8x128xf32>
      %335 = arith.mulf %259, %arg11 : vector<8x128xf32>
      %336 = arith.mulf %260, %arg10 : vector<8x128xf32>
      %337 = arith.subf %335, %336 : vector<8x128xf32>
      %338 = arith.mulf %261, %arg16 : vector<8x128xf32>
      %339 = arith.mulf %262, %arg17 : vector<8x128xf32>
      %340 = arith.addf %338, %339 : vector<8x128xf32>
      %341 = arith.mulf %261, %arg17 : vector<8x128xf32>
      %342 = arith.mulf %262, %arg16 : vector<8x128xf32>
      %343 = arith.subf %341, %342 : vector<8x128xf32>
      %344 = arith.addf %334, %340 : vector<8x128xf32>
      %345 = arith.addf %337, %343 : vector<8x128xf32>
      %346 = arith.mulf %263, %242 : vector<8x128xf32>
      %347 = arith.mulf %264, %243 : vector<8x128xf32>
      %348 = arith.addf %346, %347 : vector<8x128xf32>
      %349 = arith.mulf %263, %243 : vector<8x128xf32>
      %350 = arith.mulf %264, %242 : vector<8x128xf32>
      %351 = arith.subf %349, %350 : vector<8x128xf32>
      %352 = arith.addf %344, %348 : vector<8x128xf32>
      %353 = arith.addf %345, %351 : vector<8x128xf32>
      %354 = arith.mulf %352, %259 : vector<8x128xf32>
      %355 = arith.mulf %353, %260 : vector<8x128xf32>
      %356 = arith.subf %354, %355 : vector<8x128xf32>
      %357 = arith.mulf %352, %260 : vector<8x128xf32>
      %358 = arith.mulf %353, %259 : vector<8x128xf32>
      %359 = arith.addf %357, %358 : vector<8x128xf32>
      %360 = arith.subf %arg10, %356 : vector<8x128xf32>
      %361 = arith.subf %arg11, %359 : vector<8x128xf32>
      %362 = arith.mulf %352, %261 : vector<8x128xf32>
      %363 = arith.mulf %353, %262 : vector<8x128xf32>
      %364 = arith.subf %362, %363 : vector<8x128xf32>
      %365 = arith.mulf %352, %262 : vector<8x128xf32>
      %366 = arith.mulf %353, %261 : vector<8x128xf32>
      %367 = arith.addf %365, %366 : vector<8x128xf32>
      %368 = arith.subf %arg16, %364 : vector<8x128xf32>
      %369 = arith.subf %arg17, %367 : vector<8x128xf32>
      %370 = arith.mulf %352, %263 : vector<8x128xf32>
      %371 = arith.mulf %353, %264 : vector<8x128xf32>
      %372 = arith.subf %370, %371 : vector<8x128xf32>
      %373 = arith.mulf %352, %264 : vector<8x128xf32>
      %374 = arith.mulf %353, %263 : vector<8x128xf32>
      %375 = arith.addf %373, %374 : vector<8x128xf32>
      %376 = arith.subf %242, %372 : vector<8x128xf32>
      %377 = arith.subf %243, %375 : vector<8x128xf32>
      %378 = arith.mulf %326, %360 : vector<8x128xf32>
      %379 = arith.mulf %327, %361 : vector<8x128xf32>
      %380 = arith.addf %378, %379 : vector<8x128xf32>
      %381 = arith.mulf %326, %361 : vector<8x128xf32>
      %382 = arith.mulf %327, %360 : vector<8x128xf32>
      %383 = arith.subf %381, %382 : vector<8x128xf32>
      %384 = arith.mulf %328, %368 : vector<8x128xf32>
      %385 = arith.mulf %329, %369 : vector<8x128xf32>
      %386 = arith.addf %384, %385 : vector<8x128xf32>
      %387 = arith.mulf %328, %369 : vector<8x128xf32>
      %388 = arith.mulf %329, %368 : vector<8x128xf32>
      %389 = arith.subf %387, %388 : vector<8x128xf32>
      %390 = arith.addf %380, %386 : vector<8x128xf32>
      %391 = arith.addf %383, %389 : vector<8x128xf32>
      %392 = arith.mulf %330, %376 : vector<8x128xf32>
      %393 = arith.mulf %331, %377 : vector<8x128xf32>
      %394 = arith.addf %392, %393 : vector<8x128xf32>
      %395 = arith.mulf %330, %377 : vector<8x128xf32>
      %396 = arith.mulf %331, %376 : vector<8x128xf32>
      %397 = arith.subf %395, %396 : vector<8x128xf32>
      %398 = arith.addf %390, %394 : vector<8x128xf32>
      %399 = arith.addf %391, %397 : vector<8x128xf32>
      %400 = arith.mulf %398, %326 : vector<8x128xf32>
      %401 = arith.mulf %399, %327 : vector<8x128xf32>
      %402 = arith.subf %400, %401 : vector<8x128xf32>
      %403 = arith.mulf %398, %327 : vector<8x128xf32>
      %404 = arith.mulf %399, %326 : vector<8x128xf32>
      %405 = arith.addf %403, %404 : vector<8x128xf32>
      %406 = arith.subf %360, %402 : vector<8x128xf32>
      %407 = arith.subf %361, %405 : vector<8x128xf32>
      %408 = arith.mulf %398, %328 : vector<8x128xf32>
      %409 = arith.mulf %399, %329 : vector<8x128xf32>
      %410 = arith.subf %408, %409 : vector<8x128xf32>
      %411 = arith.mulf %398, %329 : vector<8x128xf32>
      %412 = arith.mulf %399, %328 : vector<8x128xf32>
      %413 = arith.addf %411, %412 : vector<8x128xf32>
      %414 = arith.subf %368, %410 : vector<8x128xf32>
      %415 = arith.subf %369, %413 : vector<8x128xf32>
      %416 = arith.mulf %398, %330 : vector<8x128xf32>
      %417 = arith.mulf %399, %331 : vector<8x128xf32>
      %418 = arith.subf %416, %417 : vector<8x128xf32>
      %419 = arith.mulf %398, %331 : vector<8x128xf32>
      %420 = arith.mulf %399, %330 : vector<8x128xf32>
      %421 = arith.addf %419, %420 : vector<8x128xf32>
      %422 = arith.subf %376, %418 : vector<8x128xf32>
      %423 = arith.subf %377, %421 : vector<8x128xf32>
      %424 = arith.mulf %406, %406 : vector<8x128xf32>
      %425 = arith.mulf %407, %407 : vector<8x128xf32>
      %426 = arith.addf %424, %425 : vector<8x128xf32>
      %427 = arith.mulf %414, %414 : vector<8x128xf32>
      %428 = arith.mulf %415, %415 : vector<8x128xf32>
      %429 = arith.addf %427, %428 : vector<8x128xf32>
      %430 = arith.addf %426, %429 : vector<8x128xf32>
      %431 = arith.mulf %422, %422 : vector<8x128xf32>
      %432 = arith.mulf %423, %423 : vector<8x128xf32>
      %433 = arith.addf %431, %432 : vector<8x128xf32>
      %434 = arith.addf %430, %433 : vector<8x128xf32>
      %cst_156 = arith.constant 1.000000e-30 : f32
      %435 = vector.broadcast %cst_156 : f32 to vector<8x128xf32>
      %436 = arith.maximumf %434, %435 : vector<8x128xf32>
      %437 = math.rsqrt %436 : vector<8x128xf32>
      %438 = arith.mulf %434, %437 : vector<8x128xf32>
      %439 = arith.mulf %406, %437 : vector<8x128xf32>
      %440 = arith.mulf %407, %437 : vector<8x128xf32>
      %441 = arith.mulf %414, %437 : vector<8x128xf32>
      %442 = arith.mulf %415, %437 : vector<8x128xf32>
      %443 = arith.mulf %422, %437 : vector<8x128xf32>
      %444 = arith.mulf %423, %437 : vector<8x128xf32>
      %445 = arith.mulf %258, %259 : vector<8x128xf32>
      %446 = arith.mulf %258, %260 : vector<8x128xf32>
      %447 = arith.mulf %285, %261 : vector<8x128xf32>
      %448 = arith.mulf %286, %262 : vector<8x128xf32>
      %449 = arith.subf %447, %448 : vector<8x128xf32>
      %450 = arith.mulf %285, %262 : vector<8x128xf32>
      %451 = arith.mulf %286, %261 : vector<8x128xf32>
      %452 = arith.addf %450, %451 : vector<8x128xf32>
      %453 = arith.addf %445, %449 : vector<8x128xf32>
      %454 = arith.addf %446, %452 : vector<8x128xf32>
      %455 = arith.mulf %352, %263 : vector<8x128xf32>
      %456 = arith.mulf %353, %264 : vector<8x128xf32>
      %457 = arith.subf %455, %456 : vector<8x128xf32>
      %458 = arith.mulf %352, %264 : vector<8x128xf32>
      %459 = arith.mulf %353, %263 : vector<8x128xf32>
      %460 = arith.addf %458, %459 : vector<8x128xf32>
      %461 = arith.addf %453, %457 : vector<8x128xf32>
      %462 = arith.addf %454, %460 : vector<8x128xf32>
      %463 = arith.addf %461, %236 : vector<8x128xf32>
      %464 = arith.addf %462, %237 : vector<8x128xf32>
      %465 = arith.mulf %258, %326 : vector<8x128xf32>
      %466 = arith.mulf %258, %327 : vector<8x128xf32>
      %467 = arith.mulf %285, %328 : vector<8x128xf32>
      %468 = arith.mulf %286, %329 : vector<8x128xf32>
      %469 = arith.subf %467, %468 : vector<8x128xf32>
      %470 = arith.mulf %285, %329 : vector<8x128xf32>
      %471 = arith.mulf %286, %328 : vector<8x128xf32>
      %472 = arith.addf %470, %471 : vector<8x128xf32>
      %473 = arith.addf %465, %469 : vector<8x128xf32>
      %474 = arith.addf %466, %472 : vector<8x128xf32>
      %475 = arith.mulf %352, %330 : vector<8x128xf32>
      %476 = arith.mulf %353, %331 : vector<8x128xf32>
      %477 = arith.subf %475, %476 : vector<8x128xf32>
      %478 = arith.mulf %352, %331 : vector<8x128xf32>
      %479 = arith.mulf %353, %330 : vector<8x128xf32>
      %480 = arith.addf %478, %479 : vector<8x128xf32>
      %481 = arith.addf %473, %477 : vector<8x128xf32>
      %482 = arith.addf %474, %480 : vector<8x128xf32>
      %483 = arith.mulf %258, %439 : vector<8x128xf32>
      %484 = arith.mulf %258, %440 : vector<8x128xf32>
      %485 = arith.mulf %285, %441 : vector<8x128xf32>
      %486 = arith.mulf %286, %442 : vector<8x128xf32>
      %487 = arith.subf %485, %486 : vector<8x128xf32>
      %488 = arith.mulf %285, %442 : vector<8x128xf32>
      %489 = arith.mulf %286, %441 : vector<8x128xf32>
      %490 = arith.addf %488, %489 : vector<8x128xf32>
      %491 = arith.addf %483, %487 : vector<8x128xf32>
      %492 = arith.addf %484, %490 : vector<8x128xf32>
      %493 = arith.mulf %352, %443 : vector<8x128xf32>
      %494 = arith.mulf %353, %444 : vector<8x128xf32>
      %495 = arith.subf %493, %494 : vector<8x128xf32>
      %496 = arith.mulf %352, %444 : vector<8x128xf32>
      %497 = arith.mulf %353, %443 : vector<8x128xf32>
      %498 = arith.addf %496, %497 : vector<8x128xf32>
      %499 = arith.addf %491, %495 : vector<8x128xf32>
      %500 = arith.addf %492, %498 : vector<8x128xf32>
      %501 = arith.mulf %325, %261 : vector<8x128xf32>
      %502 = arith.mulf %325, %262 : vector<8x128xf32>
      %503 = arith.mulf %398, %263 : vector<8x128xf32>
      %504 = arith.mulf %399, %264 : vector<8x128xf32>
      %505 = arith.subf %503, %504 : vector<8x128xf32>
      %506 = arith.mulf %398, %264 : vector<8x128xf32>
      %507 = arith.mulf %399, %263 : vector<8x128xf32>
      %508 = arith.addf %506, %507 : vector<8x128xf32>
      %509 = arith.addf %501, %505 : vector<8x128xf32>
      %510 = arith.addf %502, %508 : vector<8x128xf32>
      %511 = arith.mulf %325, %328 : vector<8x128xf32>
      %512 = arith.mulf %325, %329 : vector<8x128xf32>
      %513 = arith.mulf %398, %330 : vector<8x128xf32>
      %514 = arith.mulf %399, %331 : vector<8x128xf32>
      %515 = arith.subf %513, %514 : vector<8x128xf32>
      %516 = arith.mulf %398, %331 : vector<8x128xf32>
      %517 = arith.mulf %399, %330 : vector<8x128xf32>
      %518 = arith.addf %516, %517 : vector<8x128xf32>
      %519 = arith.addf %511, %515 : vector<8x128xf32>
      %520 = arith.addf %512, %518 : vector<8x128xf32>
      %521 = arith.addf %519, %236 : vector<8x128xf32>
      %522 = arith.addf %520, %237 : vector<8x128xf32>
      %523 = arith.mulf %325, %441 : vector<8x128xf32>
      %524 = arith.mulf %325, %442 : vector<8x128xf32>
      %525 = arith.mulf %398, %443 : vector<8x128xf32>
      %526 = arith.mulf %399, %444 : vector<8x128xf32>
      %527 = arith.subf %525, %526 : vector<8x128xf32>
      %528 = arith.mulf %398, %444 : vector<8x128xf32>
      %529 = arith.mulf %399, %443 : vector<8x128xf32>
      %530 = arith.addf %528, %529 : vector<8x128xf32>
      %531 = arith.addf %523, %527 : vector<8x128xf32>
      %532 = arith.addf %524, %530 : vector<8x128xf32>
      %533 = arith.mulf %438, %263 : vector<8x128xf32>
      %534 = arith.mulf %438, %264 : vector<8x128xf32>
      %535 = arith.mulf %438, %330 : vector<8x128xf32>
      %536 = arith.mulf %438, %331 : vector<8x128xf32>
      %537 = arith.mulf %438, %443 : vector<8x128xf32>
      %538 = arith.mulf %438, %444 : vector<8x128xf32>
      %539 = arith.addf %537, %236 : vector<8x128xf32>
      %540 = arith.addf %538, %237 : vector<8x128xf32>
      scf.yield %463, %464, %481, %482, %499, %500, %509, %510, %521, %522, %531, %532, %533, %534, %535, %536, %539, %540 : vector<8x128xf32>, vector<8x128xf32>, vector<8x128xf32>, vector<8x128xf32>, vector<8x128xf32>, vector<8x128xf32>, vector<8x128xf32>, vector<8x128xf32>, vector<8x128xf32>, vector<8x128xf32>, vector<8x128xf32>, vector<8x128xf32>, vector<8x128xf32>, vector<8x128xf32>, vector<8x128xf32>, vector<8x128xf32>, vector<8x128xf32>, vector<8x128xf32>
    }
    %68 = arith.addf %67#0, %67#8 : vector<8x128xf32>
    %cst = arith.constant 5.000000e-01 : f32
    %69 = vector.broadcast %cst : f32 to vector<8x128xf32>
    %70 = arith.mulf %69, %68 : vector<8x128xf32>
    %71 = arith.addf %67#1, %67#9 : vector<8x128xf32>
    %cst_114 = arith.constant 5.000000e-01 : f32
    %72 = vector.broadcast %cst_114 : f32 to vector<8x128xf32>
    %73 = arith.mulf %72, %71 : vector<8x128xf32>
    %74 = arith.subf %67#0, %67#8 : vector<8x128xf32>
    %cst_115 = arith.constant 5.000000e-01 : f32
    %75 = vector.broadcast %cst_115 : f32 to vector<8x128xf32>
    %76 = arith.mulf %75, %74 : vector<8x128xf32>
    %77 = arith.subf %67#1, %67#9 : vector<8x128xf32>
    %cst_116 = arith.constant 5.000000e-01 : f32
    %78 = vector.broadcast %cst_116 : f32 to vector<8x128xf32>
    %79 = arith.mulf %78, %77 : vector<8x128xf32>
    %80 = arith.mulf %76, %76 : vector<8x128xf32>
    %81 = arith.mulf %79, %79 : vector<8x128xf32>
    %82 = arith.subf %80, %81 : vector<8x128xf32>
    %83 = arith.mulf %76, %79 : vector<8x128xf32>
    %84 = arith.mulf %79, %76 : vector<8x128xf32>
    %85 = arith.addf %83, %84 : vector<8x128xf32>
    %86 = arith.mulf %67#2, %67#6 : vector<8x128xf32>
    %87 = arith.mulf %67#3, %67#7 : vector<8x128xf32>
    %88 = arith.subf %86, %87 : vector<8x128xf32>
    %89 = arith.mulf %67#2, %67#7 : vector<8x128xf32>
    %90 = arith.mulf %67#3, %67#6 : vector<8x128xf32>
    %91 = arith.addf %89, %90 : vector<8x128xf32>
    %92 = arith.addf %82, %88 : vector<8x128xf32>
    %93 = arith.addf %85, %91 : vector<8x128xf32>
    %94 = arith.mulf %92, %92 : vector<8x128xf32>
    %95 = arith.mulf %93, %93 : vector<8x128xf32>
    %96 = arith.addf %94, %95 : vector<8x128xf32>
    %97 = math.sqrt %96 : vector<8x128xf32>
    %98 = arith.addf %97, %92 : vector<8x128xf32>
    %cst_117 = arith.constant 5.000000e-01 : f32
    %99 = vector.broadcast %cst_117 : f32 to vector<8x128xf32>
    %100 = arith.mulf %99, %98 : vector<8x128xf32>
    %cst_118 = arith.constant 0.000000e+00 : f32
    %101 = vector.broadcast %cst_118 : f32 to vector<8x128xf32>
    %102 = arith.maximumf %100, %101 : vector<8x128xf32>
    %103 = math.sqrt %102 : vector<8x128xf32>
    %104 = arith.subf %97, %92 : vector<8x128xf32>
    %cst_119 = arith.constant 5.000000e-01 : f32
    %105 = vector.broadcast %cst_119 : f32 to vector<8x128xf32>
    %106 = arith.mulf %105, %104 : vector<8x128xf32>
    %cst_120 = arith.constant 0.000000e+00 : f32
    %107 = vector.broadcast %cst_120 : f32 to vector<8x128xf32>
    %108 = arith.maximumf %106, %107 : vector<8x128xf32>
    %109 = math.sqrt %108 : vector<8x128xf32>
    %cst_121 = arith.constant 0.000000e+00 : f32
    %110 = vector.broadcast %cst_121 : f32 to vector<8x128xf32>
    %111 = arith.cmpf oge, %93, %110 : vector<8x128xf32>
    %cst_122 = arith.constant 1.000000e+00 : f32
    %cst_123 = arith.constant -1.000000e+00 : f32
    %112 = vector.broadcast %cst_122 : f32 to vector<8x128xf32>
    %113 = vector.broadcast %cst_123 : f32 to vector<8x128xf32>
    %114 = arith.select %111, %112, %113 : vector<8x128xi1>, vector<8x128xf32>
    %115 = arith.mulf %114, %109 : vector<8x128xf32>
    %116 = arith.addf %70, %103 : vector<8x128xf32>
    %117 = arith.addf %73, %115 : vector<8x128xf32>
    %118 = arith.subf %70, %103 : vector<8x128xf32>
    %119 = arith.subf %73, %115 : vector<8x128xf32>
    %120 = arith.subf %116, %67#8 : vector<8x128xf32>
    %121 = arith.subf %117, %67#9 : vector<8x128xf32>
    %122 = arith.mulf %120, %120 : vector<8x128xf32>
    %123 = arith.mulf %121, %121 : vector<8x128xf32>
    %124 = arith.addf %122, %123 : vector<8x128xf32>
    %125 = arith.subf %118, %67#8 : vector<8x128xf32>
    %126 = arith.subf %119, %67#9 : vector<8x128xf32>
    %127 = arith.mulf %125, %125 : vector<8x128xf32>
    %128 = arith.mulf %126, %126 : vector<8x128xf32>
    %129 = arith.addf %127, %128 : vector<8x128xf32>
    %130 = arith.cmpf ole, %124, %129 : vector<8x128xf32>
    %131 = arith.select %130, %116, %118 : vector<8x128xi1>, vector<8x128xf32>
    %132 = arith.select %130, %117, %119 : vector<8x128xi1>, vector<8x128xf32>
    %133 = arith.select %130, %118, %116 : vector<8x128xi1>, vector<8x128xf32>
    %134 = arith.select %130, %119, %117 : vector<8x128xi1>, vector<8x128xf32>
    %135 = arith.mulf %133, %133 : vector<8x128xf32>
    %136 = arith.mulf %134, %134 : vector<8x128xf32>
    %137 = arith.addf %135, %136 : vector<8x128xf32>
    %138 = math.sqrt %137 : vector<8x128xf32>
    %c0_124 = arith.constant 0 : index
    %c0_125 = arith.constant 0 : index
    %c0_126 = arith.constant 0 : index
    %c0_127 = arith.constant 0 : index
    %139 = vector.load %arg3[%c0_124, %c0_125, %c0_126, %c0_127] : memref<1x4x8x128xf32, #tpu.memory_space<vmem>>, vector<1x1x8x128xf32>
    %140 = vector.shape_cast %139 : vector<1x1x8x128xf32> to vector<8x128xf32>
    %141 = arith.subf %138, %140 : vector<8x128xf32>
    %142 = arith.mulf %141, %141 : vector<8x128xf32>
    %143 = arith.mulf %131, %131 : vector<8x128xf32>
    %144 = arith.mulf %132, %132 : vector<8x128xf32>
    %145 = arith.addf %143, %144 : vector<8x128xf32>
    %146 = math.sqrt %145 : vector<8x128xf32>
    %c0_128 = arith.constant 0 : index
    %c1_129 = arith.constant 1 : index
    %c0_130 = arith.constant 0 : index
    %c0_131 = arith.constant 0 : index
    %147 = vector.load %arg3[%c0_128, %c1_129, %c0_130, %c0_131] : memref<1x4x8x128xf32, #tpu.memory_space<vmem>>, vector<1x1x8x128xf32>
    %148 = vector.shape_cast %147 : vector<1x1x8x128xf32> to vector<8x128xf32>
    %149 = arith.subf %146, %148 : vector<8x128xf32>
    %150 = arith.mulf %149, %149 : vector<8x128xf32>
    %151 = arith.addf %142, %150 : vector<8x128xf32>
    %152 = arith.mulf %67#16, %67#16 : vector<8x128xf32>
    %153 = arith.mulf %67#17, %67#17 : vector<8x128xf32>
    %154 = arith.addf %152, %153 : vector<8x128xf32>
    %155 = math.sqrt %154 : vector<8x128xf32>
    %c0_132 = arith.constant 0 : index
    %c2_133 = arith.constant 2 : index
    %c0_134 = arith.constant 0 : index
    %c0_135 = arith.constant 0 : index
    %156 = vector.load %arg3[%c0_132, %c2_133, %c0_134, %c0_135] : memref<1x4x8x128xf32, #tpu.memory_space<vmem>>, vector<1x1x8x128xf32>
    %157 = vector.shape_cast %156 : vector<1x1x8x128xf32> to vector<8x128xf32>
    %158 = arith.subf %155, %157 : vector<8x128xf32>
    %159 = arith.mulf %158, %158 : vector<8x128xf32>
    %160 = arith.addf %151, %159 : vector<8x128xf32>
    %161 = arith.mulf %65#30, %65#30 : vector<8x128xf32>
    %162 = arith.mulf %65#31, %65#31 : vector<8x128xf32>
    %163 = arith.addf %161, %162 : vector<8x128xf32>
    %164 = math.sqrt %163 : vector<8x128xf32>
    %c0_136 = arith.constant 0 : index
    %c3_137 = arith.constant 3 : index
    %c0_138 = arith.constant 0 : index
    %c0_139 = arith.constant 0 : index
    %165 = vector.load %arg3[%c0_136, %c3_137, %c0_138, %c0_139] : memref<1x4x8x128xf32, #tpu.memory_space<vmem>>, vector<1x1x8x128xf32>
    %166 = vector.shape_cast %165 : vector<1x1x8x128xf32> to vector<8x128xf32>
    %167 = arith.subf %164, %166 : vector<8x128xf32>
    %168 = arith.mulf %167, %167 : vector<8x128xf32>
    %169 = arith.addf %160, %168 : vector<8x128xf32>
    %c0_140 = arith.constant 0 : index
    %c0_141 = arith.constant 0 : index
    %c0_142 = arith.constant 0 : index
    %170 = vector.load %arg4[%c0_140, %c0_141, %c0_142] : memref<1x8x128xf32, #tpu.memory_space<vmem>>, vector<1x8x128xf32>
    %171 = vector.shape_cast %170 : vector<1x8x128xf32> to vector<8x128xf32>
    %172 = vector.shape_cast %169 : vector<8x128xf32> to vector<1x8x128xf32>
    tpu.vector_store %arg4[%c0_140, %c0_141, %c0_142], %172 {strides = array<i32>} : memref<1x8x128xf32, #tpu.memory_space<vmem>>, vector<1x8x128xf32>,
    return
  }
  func.func @transform_0(%arg0: i32) -> (i32, i32, i32, i32) {
    %c0_i32 = arith.constant 0 : i32
    %c0_i32_0 = arith.constant 0 : i32
    %c0_i32_1 = arith.constant 0 : i32
    %c0_i32_2 = arith.constant 0 : i32
    return %arg0, %c0_i32, %c0_i32_0, %c0_i32_1 : i32, i32, i32, i32
  }
  func.func @transform_1(%arg0: i32) -> (i32, i32, i32, i32) {
    %c0_i32 = arith.constant 0 : i32
    %c0_i32_0 = arith.constant 0 : i32
    %c0_i32_1 = arith.constant 0 : i32
    %c0_i32_2 = arith.constant 0 : i32
    return %arg0, %c0_i32, %c0_i32_0, %c0_i32_1 : i32, i32, i32, i32
  }
  func.func @transform_2(%arg0: i32) -> (i32, i32, i32, i32) {
    %c0_i32 = arith.constant 0 : i32
    %c0_i32_0 = arith.constant 0 : i32
    %c0_i32_1 = arith.constant 0 : i32
    %c0_i32_2 = arith.constant 0 : i32
    return %arg0, %c0_i32, %c0_i32_0, %c0_i32_1 : i32, i32, i32, i32
  }
  func.func @transform_3(%arg0: i32) -> (i32, i32, i32) {
    %c0_i32 = arith.constant 0 : i32
    %c0_i32_0 = arith.constant 0 : i32
    %c0_i32_1 = arith.constant 0 : i32
    return %arg0, %c0_i32, %c0_i32_0 : i32, i32, i32
  }
}

</mosaic_0001>

<llo_original>
// kernel: custom-call.1
$region0: #{custom-call.1}
  %s0 = inlined_call_operand.vmem [shape: c64[2,16,4,4], index: 0, kind: input, shape index: {}]
  %s1 = inlined_call_operand.vmem [shape: f32[2,16,4,4], index: 1, kind: output, shape index: {}]
  %s2 = scalar_lea.vmem %s0, 128
  %v3 = vld [vmem:[%s2] sm:$0xff]
  %4 = vst [vmem:[%s1] sm:$0xff] %v3
  %s5 = scalar_lea.vmem %s1, 8
  %s6 = scalar_lea.vmem %s2, 8
  %v7 = vld [vmem:[%s6] sm:$0xff]
  %8 = vst [vmem:[%s5] sm:$0xff] %v7
  %s9 = scalar_lea.vmem %s1, 16
  %s10 = scalar_lea.vmem %s2, 16
  %v11 = vld [vmem:[%s10] sm:$0xff]
  %12 = vst [vmem:[%s9] sm:$0xff] %v11
  %s13 = scalar_lea.vmem %s1, 24
  %s14 = scalar_lea.vmem %s2, 24
  %v15 = vld [vmem:[%s14] sm:$0xff]
  %16 = vst [vmem:[%s13] sm:$0xff] %v15
  %s17 = scalar_lea.vmem %s1, 32
  %s18 = scalar_lea.vmem %s2, 32
  %v19 = vld [vmem:[%s18] sm:$0xff]
  %20 = vst [vmem:[%s17] sm:$0xff] %v19
  %s21 = scalar_lea.vmem %s1, 40
  %s22 = scalar_lea.vmem %s2, 40
  %v23 = vld [vmem:[%s22] sm:$0xff]
  %24 = vst [vmem:[%s21] sm:$0xff] %v23
  %s25 = scalar_lea.vmem %s1, 48
  %s26 = scalar_lea.vmem %s2, 48
  %v27 = vld [vmem:[%s26] sm:$0xff]
  %28 = vst [vmem:[%s25] sm:$0xff] %v27
  %s29 = scalar_lea.vmem %s1, 56
  %s30 = scalar_lea.vmem %s2, 56
  %v31 = vld [vmem:[%s30] sm:$0xff]
  %32 = vst [vmem:[%s29] sm:$0xff] %v31
  %s33 = scalar_lea.vmem %s1, 64
  %s34 = scalar_lea.vmem %s2, 64
  %v35 = vld [vmem:[%s34] sm:$0xff]
  %36 = vst [vmem:[%s33] sm:$0xff] %v35
  %s37 = scalar_lea.vmem %s1, 72
  %s38 = scalar_lea.vmem %s2, 72
  %v39 = vld [vmem:[%s38] sm:$0xff]
  %40 = vst [vmem:[%s37] sm:$0xff] %v39
  %s41 = scalar_lea.vmem %s1, 80
  %s42 = scalar_lea.vmem %s2, 80
  %v43 = vld [vmem:[%s42] sm:$0xff]
  %44 = vst [vmem:[%s41] sm:$0xff] %v43
  %s45 = scalar_lea.vmem %s1, 88
  %s46 = scalar_lea.vmem %s2, 88
  %v47 = vld [vmem:[%s46] sm:$0xff]
  %48 = vst [vmem:[%s45] sm:$0xff] %v47
  %s49 = scalar_lea.vmem %s1, 96
  %s50 = scalar_lea.vmem %s2, 96
  %v51 = vld [vmem:[%s50] sm:$0xff]
  %52 = vst [vmem:[%s49] sm:$0xff] %v51
  %s53 = scalar_lea.vmem %s1, 104
  %s54 = scalar_lea.vmem %s2, 104
  %v55 = vld [vmem:[%s54] sm:$0xff]
  %56 = vst [vmem:[%s53] sm:$0xff] %v55
  %s57 = scalar_lea.vmem %s1, 112
  %s58 = scalar_lea.vmem %s2, 112
  %v59 = vld [vmem:[%s58] sm:$0xff]
  %60 = vst [vmem:[%s57] sm:$0xff] %v59
  %s61 = scalar_lea.vmem %s1, 120
  %s62 = scalar_lea.vmem %s2, 120
  %v63 = vld [vmem:[%s62] sm:$0xff]
  %64 = vst [vmem:[%s61] sm:$0xff] %v63

// kernel: custom-call
$region0: #{custom-call}
  %s0 = inlined_call_operand.vmem [shape: c64[2,16,4,4], index: 0, kind: input, shape index: {}]
  %s1 = inlined_call_operand.vmem [shape: f32[2,16,4,4], index: 1, kind: output, shape index: {}]
  %v2 = vld [vmem:[%s0] sm:$0xff]
  %3 = vst [vmem:[%s1] sm:$0xff] %v2
  %s4 = scalar_lea.vmem %s1, 8
  %s5 = scalar_lea.vmem %s0, 8
  %v6 = vld [vmem:[%s5] sm:$0xff]
  %7 = vst [vmem:[%s4] sm:$0xff] %v6
  %s8 = scalar_lea.vmem %s1, 16
  %s9 = scalar_lea.vmem %s0, 16
  %v10 = vld [vmem:[%s9] sm:$0xff]
  %11 = vst [vmem:[%s8] sm:$0xff] %v10
  %s12 = scalar_lea.vmem %s1, 24
  %s13 = scalar_lea.vmem %s0, 24
  %v14 = vld [vmem:[%s13] sm:$0xff]
  %15 = vst [vmem:[%s12] sm:$0xff] %v14
  %s16 = scalar_lea.vmem %s1, 32
  %s17 = scalar_lea.vmem %s0, 32
  %v18 = vld [vmem:[%s17] sm:$0xff]
  %19 = vst [vmem:[%s16] sm:$0xff] %v18
  %s20 = scalar_lea.vmem %s1, 40
  %s21 = scalar_lea.vmem %s0, 40
  %v22 = vld [vmem:[%s21] sm:$0xff]
  %23 = vst [vmem:[%s20] sm:$0xff] %v22
  %s24 = scalar_lea.vmem %s1, 48
  %s25 = scalar_lea.vmem %s0, 48
  %v26 = vld [vmem:[%s25] sm:$0xff]
  %27 = vst [vmem:[%s24] sm:$0xff] %v26
  %s28 = scalar_lea.vmem %s1, 56
  %s29 = scalar_lea.vmem %s0, 56
  %v30 = vld [vmem:[%s29] sm:$0xff]
  %31 = vst [vmem:[%s28] sm:$0xff] %v30
  %s32 = scalar_lea.vmem %s1, 64
  %s33 = scalar_lea.vmem %s0, 64
  %v34 = vld [vmem:[%s33] sm:$0xff]
  %35 = vst [vmem:[%s32] sm:$0xff] %v34
  %s36 = scalar_lea.vmem %s1, 72
  %s37 = scalar_lea.vmem %s0, 72
  %v38 = vld [vmem:[%s37] sm:$0xff]
  %39 = vst [vmem:[%s36] sm:$0xff] %v38
  %s40 = scalar_lea.vmem %s1, 80
  %s41 = scalar_lea.vmem %s0, 80
  %v42 = vld [vmem:[%s41] sm:$0xff]
  %43 = vst [vmem:[%s40] sm:$0xff] %v42
  %s44 = scalar_lea.vmem %s1, 88
  %s45 = scalar_lea.vmem %s0, 88
  %v46 = vld [vmem:[%s45] sm:$0xff]
  %47 = vst [vmem:[%s44] sm:$0xff] %v46
  %s48 = scalar_lea.vmem %s1, 96
  %s49 = scalar_lea.vmem %s0, 96
  %v50 = vld [vmem:[%s49] sm:$0xff]
  %51 = vst [vmem:[%s48] sm:$0xff] %v50
  %s52 = scalar_lea.vmem %s1, 104
  %s53 = scalar_lea.vmem %s0, 104
  %v54 = vld [vmem:[%s53] sm:$0xff]
  %55 = vst [vmem:[%s52] sm:$0xff] %v54
  %s56 = scalar_lea.vmem %s1, 112
  %s57 = scalar_lea.vmem %s0, 112
  %v58 = vld [vmem:[%s57] sm:$0xff]
  %59 = vst [vmem:[%s56] sm:$0xff] %v58
  %s60 = scalar_lea.vmem %s1, 120
  %s61 = scalar_lea.vmem %s0, 120
  %v62 = vld [vmem:[%s61] sm:$0xff]
  %63 = vst [vmem:[%s60] sm:$0xff] %v62

// kernel: mse_evs_idxs.1
$region0: #{mse_evs_idxs.1}
  #allocation0 [shape = 'u32[]', space=smem, size = 0x4, offset = 0x4, fixed_abs, tag = 'smem constant byte address 0x4 - core index']
  #allocation1 [shape = 'u32[144,128]{1,0:T(1,128)}', space=vmem, size = 0x12000, scoped, tag = 'internal scratch']
  %s0 = inlined_call_operand.vmem [shape: f32[1,16,8,128], index: 0, kind: input, shape index: {}]
  %s1 = inlined_call_operand.vmem [shape: f32[1,16,8,128], index: 1, kind: input, shape index: {}]
  %s2 = inlined_call_operand.vmem [shape: f32[1,4,8,128], index: 2, kind: input, shape index: {}]
  %s3 = inlined_call_operand.vmem [shape: f32[1,8,128], index: 3, kind: output, shape index: {}]
  %s4 = sld [smem:[#allocation0]]
  $region36: #{mse_evs_idxs.1} parent=0
    _
  %s6 = ssub.s32 1, %s4
  %s7 = scalar_select 0, %s6, %s4
  // Predicated region
  $region2: #{mse_evs_idxs.1} parent=0 // pred_check
    _
  $region3: #{mse_evs_idxs.1} parent=0 // pred_check_branch
    %9 = sbr.rel (0) target = $region5
  $region4: #{mse_evs_idxs.1} parent=0 // pred_region
    _
  $region5: #{mse_evs_idxs.1} parent=0 // pred_fallthru
    _
  // Predicated region
  $region6: #{mse_evs_idxs.1} parent=0 // pred_check
    _
  $region7: #{mse_evs_idxs.1} parent=0 // pred_check_branch
    %11 = sbr.rel (0) target = $region9
  $region8: #{mse_evs_idxs.1} parent=0 // pred_region
    _
  $region9: #{mse_evs_idxs.1} parent=0 // pred_fallthru
    _
  // Predicated region
  $region10: #{mse_evs_idxs.1} parent=0 // pred_check
    _
  $region11: #{mse_evs_idxs.1} parent=0 // pred_check_branch
    %13 = sbr.rel (0) target = $region13
  $region12: #{mse_evs_idxs.1} parent=0 // pred_region
    _
  $region13: #{mse_evs_idxs.1} parent=0 // pred_fallthru
    _
  %v14 = vld [vmem:[%s0] sm:$0xff]
  %v15 = vld [vmem:[%s1] sm:$0xff]
  %s16 = scalar_lea.vmem %s0, 8
  %v17 = vld [vmem:[%s16] sm:$0xff]
  %s18 = scalar_lea.vmem %s1, 8
  %v19 = vld [vmem:[%s18] sm:$0xff]
  %s20 = scalar_lea.vmem %s0, 16
  %v21 = vld [vmem:[%s20] sm:$0xff]
  %s22 = scalar_lea.vmem %s1, 16
  %v23 = vld [vmem:[%s22] sm:$0xff]
  %s24 = scalar_lea.vmem %s0, 24
  %v25 = vld [vmem:[%s24] sm:$0xff]
  %s26 = scalar_lea.vmem %s1, 24
  %v27 = vld [vmem:[%s26] sm:$0xff]
  %s28 = scalar_lea.vmem %s0, 32
  %v29 = vld [vmem:[%s28] sm:$0xff]
  %s30 = scalar_lea.vmem %s1, 32
  %v31 = vld [vmem:[%s30] sm:$0xff]
  %s32 = scalar_lea.vmem %s0, 40
  %v33 = vld [vmem:[%s32] sm:$0xff]
  %s34 = scalar_lea.vmem %s1, 40
  %v35 = vld [vmem:[%s34] sm:$0xff]
  %s36 = scalar_lea.vmem %s0, 48
  %v37 = vld [vmem:[%s36] sm:$0xff]
  %s38 = scalar_lea.vmem %s1, 48
  %v39 = vld [vmem:[%s38] sm:$0xff]
  %s40 = scalar_lea.vmem %s0, 56
  %v41 = vld [vmem:[%s40] sm:$0xff]
  %s42 = scalar_lea.vmem %s1, 56
  %v43 = vld [vmem:[%s42] sm:$0xff]
  %s44 = scalar_lea.vmem %s0, 64
  %v45 = vld [vmem:[%s44] sm:$0xff]
  %s46 = scalar_lea.vmem %s1, 64
  %v47 = vld [vmem:[%s46] sm:$0xff]
  %s48 = scalar_lea.vmem %s0, 72
  %v49 = vld [vmem:[%s48] sm:$0xff]
  %s50 = scalar_lea.vmem %s1, 72
  %v51 = vld [vmem:[%s50] sm:$0xff]
  %s52 = scalar_lea.vmem %s0, 80
  %v53 = vld [vmem:[%s52] sm:$0xff]
  %s54 = scalar_lea.vmem %s1, 80
  %v55 = vld [vmem:[%s54] sm:$0xff]
  %s56 = scalar_lea.vmem %s0, 88
  %v57 = vld [vmem:[%s56] sm:$0xff]
  %s58 = scalar_lea.vmem %s1, 88
  %v59 = vld [vmem:[%s58] sm:$0xff]
  %s60 = scalar_lea.vmem %s0, 96
  %v61 = vld [vmem:[%s60] sm:$0xff]
  %s62 = scalar_lea.vmem %s1, 96
  %v63 = vld [vmem:[%s62] sm:$0xff]
  %s64 = scalar_lea.vmem %s0, 104
  %v65 = vld [vmem:[%s64] sm:$0xff]
  %s66 = scalar_lea.vmem %s1, 104
  %v67 = vld [vmem:[%s66] sm:$0xff]
  %s68 = scalar_lea.vmem %s0, 112
  %v69 = vld [vmem:[%s68] sm:$0xff]
  %s70 = scalar_lea.vmem %s1, 112
  %v71 = vld [vmem:[%s70] sm:$0xff]
  %s72 = scalar_lea.vmem %s0, 120
  %v73 = vld [vmem:[%s72] sm:$0xff]
  %s74 = scalar_lea.vmem %s1, 120
  %v75 = vld [vmem:[%s74] sm:$0xff]
  loop: start=0, step=1, limit=12
  $region14: #{mse_evs_idxs.1} parent=0 // loop_pre_header
    _
  $region15: #{mse_evs_idxs.1} parent=0 // loop_header
    %s77 = sphi 0, %s81
    %p78 = scmp.ge.s32.totalorder %s77, 12
    %v82 = vphi %v14, %v677
    %v83 = vphi %v15, %v678
    %v84 = vphi %v17, %v703
    %v85 = vphi %v19, %v704
    %v86 = vphi %v21, %v729
    %v87 = vphi %v23, %v730
    %v88 = vphi %v25, %v755
    %v89 = vphi %v27, %v756
    %v90 = vphi %v29, %v773
    %v91 = vphi %v31, %v774
    %v92 = vphi %v33, %v781
    %v93 = vphi %v35, %v782
    %v94 = vphi %v37, %v799
    %v95 = vphi %v39, %v800
    %v96 = vphi %v41, %v817
    %v97 = vphi %v43, %v818
    %v98 = vphi %v45, %v827
    %v99 = vphi %v47, %v828
    %v100 = vphi %v49, %v837
    %v101 = vphi %v51, %v838
    %v102 = vphi %v53, %v843
    %v103 = vphi %v55, %v844
    %v104 = vphi %v57, %v853
    %v105 = vphi %v59, %v854
    %v106 = vphi %v61, %v855
    %v107 = vphi %v63, %v856
    %v108 = vphi %v65, %v857
    %v109 = vphi %v67, %v858
    %v110 = vphi %v69, %v859
    %v111 = vphi %v71, %v860
    %v112 = vphi %v73, %v863
    %v113 = vphi %v75, %v864
  $region16: #{mse_evs_idxs.1} parent=0 // loop_header_branch
    %80 = sbr.rel (%p78) target = $region20
  $region17: #{mse_evs_idxs.1} parent=0 // loop_body
    %v114 = vadd.f32 %v102, %v112
    %v115 = vmul.f32 %v114, 0.5
    %v116 = vadd.f32 %v103, %v113
    %v117 = vmul.f32 %v116, 0.5
    %v118 = vsub.f32 %v102, %v112
    %v119 = vmul.f32 %v118, 0.5
    %v120 = vsub.f32 %v103, %v113
    %v121 = vmul.f32 %v120, 0.5
    %v122 = vmul.f32 %v119, %v119
    %v123 = vmul.f32 %v121, %v121
    %v124 = vsub.f32 %v122, %v123
    %v125 = vmul.f32 %v119, %v121
    %v126 = vadd.f32 %v125, %v125
    %v127 = vmul.f32 %v104, %v110
    %v128 = vmul.f32 %v105, %v111
    %v129 = vsub.f32 %v127, %v128
    %v130 = vmul.f32 %v104, %v111
    %v131 = vmul.f32 %v105, %v110
    %v132 = vadd.f32 %v130, %v131
    %v133 = vadd.f32 %v124, %v129
    %v134 = vadd.f32 %v126, %v132
    %v135 = vmul.f32 %v133, %v133
    %v136 = vmul.f32 %v134, %v134
    %v137 = vadd.f32 %v135, %v136
    %v138 = vrsqrt.pop %v137
    %v139 = vmul.f32 %v137, %v138
    %vm140 = vcmp.eq.f32.partialorder %v137, inf
    %v141 = vsel %vm140, %v137, %v139
    %vm142 = vcmp.eq.f32.partialorder %v137, 0.0
    %v143 = vand.u32 %v137, 2147483648
    %v144 = vsel %vm142, %v143, %v141
    %v145 = vadd.f32 %v144, %v133
    %v146 = vmul.f32 %v145, 0.5
    %v147 = vmax.f32 %v146, 0.0
    %v148 = vrsqrt.pop %v147
    %v149 = vmul.f32 %v147, %v148
    %vm150 = vcmp.eq.f32.partialorder %v147, inf
    %v151 = vsel %vm150, %v147, %v149
    %vm152 = vcmp.eq.f32.partialorder %v147, 0.0
    %v153 = vand.u32 %v147, 2147483648
    %v154 = vsel %vm152, %v153, %v151
    %v155 = vsub.f32 %v144, %v133
    %v156 = vmul.f32 %v155, 0.5
    %v157 = vmax.f32 %v156, 0.0
    %v158 = vrsqrt.pop %v157
    %v159 = vmul.f32 %v157, %v158
    %vm160 = vcmp.eq.f32.partialorder %v157, inf
    %v161 = vsel %vm160, %v157, %v159
    %vm162 = vcmp.eq.f32.partialorder %v157, 0.0
    %v163 = vand.u32 %v157, 2147483648
    %v164 = vsel %vm162, %v163, %v161
    %vm165 = vcmp.ge.f32.partialorder %v134, 0.0
    %v166 = vsel %vm165, 1.0, -1.0
    %v167 = vmul.f32 %v166, %v164
    %v168 = vadd.f32 %v115, %v154
    %v169 = vadd.f32 %v117, %v167
    %v170 = vsub.f32 %v115, %v154
    %v171 = vsub.f32 %v117, %v167
    %v172 = vsub.f32 %v168, %v112
    %v173 = vsub.f32 %v169, %v113
    %v174 = vmul.f32 %v172, %v172
    %v175 = vmul.f32 %v173, %v173
    %v176 = vadd.f32 %v174, %v175
    %v177 = vsub.f32 %v170, %v112
    %v178 = vsub.f32 %v171, %v113
    %v179 = vmul.f32 %v177, %v177
    %v180 = vmul.f32 %v178, %v178
    %v181 = vadd.f32 %v179, %v180
    %vm182 = vcmp.le.f32.partialorder %v176, %v181
    %v183 = vsel %vm182, %v168, %v170
    %v184 = vsel %vm182, %v169, %v171
    %v185 = vsub.f32 %v82, %v183
    %v186 = vsub.f32 %v83, %v184
    %v187 = vsub.f32 %v92, %v183
    %v188 = vsub.f32 %v93, %v184
    %v189 = vsub.f32 %v102, %v183
    %v190 = vsub.f32 %v103, %v184
    %v191 = vsub.f32 %v112, %v183
    %v192 = vsub.f32 %v113, %v184
    %v193 = vmul.f32 %v185, %v185
    %v194 = vmul.f32 %v186, %v186
    %v195 = vadd.f32 %v193, %v194
    %v196 = vmul.f32 %v90, %v90
    %v197 = vmul.f32 %v91, %v91
    %v198 = vadd.f32 %v196, %v197
    %v199 = vadd.f32 %v195, %v198
    %v200 = vmul.f32 %v98, %v98
    %v201 = vmul.f32 %v99, %v99
    %v202 = vadd.f32 %v200, %v201
    %v203 = vadd.f32 %v199, %v202
    %v204 = vmul.f32 %v106, %v106
    %v205 = vmul.f32 %v107, %v107
    %v206 = vadd.f32 %v204, %v205
    %v207 = vadd.f32 %v203, %v206
    %v208 = vmax.f32 %v207, 1e-30
    %v209 = vrsqrt.pop %v208
    %v210 = vmul.f32 %v207, %v209
    %v211 = vmul.f32 %v185, %v209
    %v212 = vmul.f32 %v186, %v209
    %v213 = vmul.f32 %v90, %v209
    %v214 = vmul.f32 %v91, %v209
    %v215 = vmul.f32 %v98, %v209
    %v216 = vmul.f32 %v99, %v209
    %v217 = vmul.f32 %v106, %v209
    %v218 = vmul.f32 %v107, %v209
    %v219 = vmul.f32 %v211, %v84
    %v220 = vmul.f32 %v212, %v85
    %v221 = vadd.f32 %v219, %v220
    %v222 = vmul.f32 %v211, %v85
    %v223 = vmul.f32 %v212, %v84
    %v224 = vsub.f32 %v222, %v223
    %v225 = vmul.f32 %v213, %v187
    %v226 = vmul.f32 %v214, %v188
    %v227 = vadd.f32 %v225, %v226
    %v228 = vmul.f32 %v213, %v188
    %v229 = vmul.f32 %v214, %v187
    %v230 = vsub.f32 %v228, %v229
    %v231 = vadd.f32 %v221, %v227
    %v232 = vadd.f32 %v224, %v230
    %v233 = vmul.f32 %v215, %v100
    %v234 = vmul.f32 %v216, %v101
    %v235 = vadd.f32 %v233, %v234
    %v236 = vmul.f32 %v215, %v101
    %v237 = vmul.f32 %v216, %v100
    %v238 = vsub.f32 %v236, %v237
    %v239 = vadd.f32 %v231, %v235
    %v240 = vadd.f32 %v232, %v238
    %v241 = vmul.f32 %v217, %v108
    %v242 = vmul.f32 %v218, %v109
    %v243 = vadd.f32 %v241, %v242
    %v244 = vmul.f32 %v217, %v109
    %v245 = vmul.f32 %v218, %v108
    %v246 = vsub.f32 %v244, %v245
    %v247 = vadd.f32 %v239, %v243
    %v248 = vadd.f32 %v240, %v246
    %v249 = vmul.f32 %v247, %v211
    %v250 = vmul.f32 %v248, %v212
    %v251 = vsub.f32 %v249, %v250
    %v252 = vmul.f32 %v247, %v212
    %v253 = vmul.f32 %v248, %v211
    %v254 = vadd.f32 %v252, %v253
    %v255 = vsub.f32 %v84, %v251
    %v256 = vsub.f32 %v85, %v254
    %v257 = vmul.f32 %v247, %v213
    %v258 = vmul.f32 %v248, %v214
    %v259 = vsub.f32 %v257, %v258
    %v260 = vmul.f32 %v247, %v214
    %v261 = vmul.f32 %v248, %v213
    %v262 = vadd.f32 %v260, %v261
    %v263 = vsub.f32 %v187, %v259
    %v264 = vsub.f32 %v188, %v262
    %v265 = vmul.f32 %v247, %v215
    %v266 = vmul.f32 %v248, %v216
    %v267 = vsub.f32 %v265, %v266
    %v268 = vmul.f32 %v247, %v216
    %v269 = vmul.f32 %v248, %v215
    %v270 = vadd.f32 %v268, %v269
    %v271 = vsub.f32 %v100, %v267
    %v272 = vsub.f32 %v101, %v270
    %v273 = vmul.f32 %v247, %v217
    %v274 = vmul.f32 %v248, %v218
    %v275 = vsub.f32 %v273, %v274
    %v276 = vmul.f32 %v247, %v218
    %v277 = vmul.f32 %v248, %v217
    %v278 = vadd.f32 %v276, %v277
    %v279 = vsub.f32 %v108, %v275
    %v280 = vsub.f32 %v109, %v278
    %v281 = vmul.f32 %v255, %v255
    %v282 = vmul.f32 %v256, %v256
    %v283 = vadd.f32 %v281, %v282
    %v284 = vmul.f32 %v263, %v263
    %v285 = vmul.f32 %v264, %v264
    %v286 = vadd.f32 %v284, %v285
    %v287 = vadd.f32 %v283, %v286
    %v288 = vmul.f32 %v271, %v271
    %v289 = vmul.f32 %v272, %v272
    %v290 = vadd.f32 %v288, %v289
    %v291 = vadd.f32 %v287, %v290
    %v292 = vmul.f32 %v279, %v279
    %v293 = vmul.f32 %v280, %v280
    %v294 = vadd.f32 %v292, %v293
    %v295 = vadd.f32 %v291, %v294
    %v296 = vmax.f32 %v295, 1e-30
    %v297 = vrsqrt.pop %v296
    %v298 = vmul.f32 %v295, %v297
    %v299 = vmul.f32 %v255, %v297
    %v300 = vmul.f32 %v256, %v297
    %v301 = vmul.f32 %v263, %v297
    %v302 = vmul.f32 %v264, %v297
    %v303 = vmul.f32 %v271, %v297
    %v304 = vmul.f32 %v272, %v297
    %v305 = vmul.f32 %v279, %v297
    %v306 = vmul.f32 %v280, %v297
    %v307 = vmul.f32 %v211, %v86
    %v308 = vmul.f32 %v212, %v87
    %v309 = vadd.f32 %v307, %v308
    %v310 = vmul.f32 %v211, %v87
    %v311 = vmul.f32 %v212, %v86
    %v312 = vsub.f32 %v310, %v311
    %v313 = vmul.f32 %v213, %v94
    %v314 = vmul.f32 %v214, %v95
    %v315 = vadd.f32 %v313, %v314
    %v316 = vmul.f32 %v213, %v95
    %v317 = vmul.f32 %v214, %v94
    %v318 = vsub.f32 %v316, %v317
    %v319 = vadd.f32 %v309, %v315
    %v320 = vadd.f32 %v312, %v318
    %v321 = vmul.f32 %v215, %v189
    %v322 = vmul.f32 %v216, %v190
    %v323 = vadd.f32 %v321, %v322
    %v324 = vmul.f32 %v215, %v190
    %v325 = vmul.f32 %v216, %v189
    %v326 = vsub.f32 %v324, %v325
    %v327 = vadd.f32 %v319, %v323
    %v328 = vadd.f32 %v320, %v326
    %v329 = vmul.f32 %v217, %v110
    %v330 = vmul.f32 %v218, %v111
    %v331 = vadd.f32 %v329, %v330
    %v332 = vmul.f32 %v217, %v111
    %v333 = vmul.f32 %v218, %v110
    %v334 = vsub.f32 %v332, %v333
    %v335 = vadd.f32 %v327, %v331
    %v336 = vadd.f32 %v328, %v334
    %v337 = vmul.f32 %v335, %v211
    %v338 = vmul.f32 %v336, %v212
    %v339 = vsub.f32 %v337, %v338
    %v340 = vmul.f32 %v335, %v212
    %v341 = vmul.f32 %v336, %v211
    %v342 = vadd.f32 %v340, %v341
    %v343 = vsub.f32 %v86, %v339
    %v344 = vsub.f32 %v87, %v342
    %v345 = vmul.f32 %v335, %v213
    %v346 = vmul.f32 %v336, %v214
    %v347 = vsub.f32 %v345, %v346
    %v348 = vmul.f32 %v335, %v214
    %v349 = vmul.f32 %v336, %v213
    %v350 = vadd.f32 %v348, %v349
    %v351 = vsub.f32 %v94, %v347
    %v352 = vsub.f32 %v95, %v350
    %v353 = vmul.f32 %v335, %v215
    %v354 = vmul.f32 %v336, %v216
    %v355 = vsub.f32 %v353, %v354
    %v356 = vmul.f32 %v335, %v216
    %v357 = vmul.f32 %v336, %v215
    %v358 = vadd.f32 %v356, %v357
    %v359 = vsub.f32 %v189, %v355
    %v360 = vsub.f32 %v190, %v358
    %v361 = vmul.f32 %v335, %v217
    %v362 = vmul.f32 %v336, %v218
    %v363 = vsub.f32 %v361, %v362
    %v364 = vmul.f32 %v335, %v218
    %v365 = vmul.f32 %v336, %v217
    %v366 = vadd.f32 %v364, %v365
    %v367 = vsub.f32 %v110, %v363
    %v368 = vsub.f32 %v111, %v366
    %v369 = vmul.f32 %v299, %v343
    %v370 = vmul.f32 %v300, %v344
    %v371 = vadd.f32 %v369, %v370
    %v372 = vmul.f32 %v299, %v344
    %v373 = vmul.f32 %v300, %v343
    %v374 = vsub.f32 %v372, %v373
    %v375 = vmul.f32 %v301, %v351
    %v376 = vmul.f32 %v302, %v352
    %v377 = vadd.f32 %v375, %v376
    %v378 = vmul.f32 %v301, %v352
    %v379 = vmul.f32 %v302, %v351
    %v380 = vsub.f32 %v378, %v379
    %v381 = vadd.f32 %v371, %v377
    %v382 = vadd.f32 %v374, %v380
    %v383 = vmul.f32 %v303, %v359
    %v384 = vmul.f32 %v304, %v360
    %v385 = vadd.f32 %v383, %v384
    %v386 = vmul.f32 %v303, %v360
    %v387 = vmul.f32 %v304, %v359
    %v388 = vsub.f32 %v386, %v387
    %v389 = vadd.f32 %v381, %v385
    %v390 = vadd.f32 %v382, %v388
    %v391 = vmul.f32 %v305, %v367
    %v392 = vmul.f32 %v306, %v368
    %v393 = vadd.f32 %v391, %v392
    %v394 = vmul.f32 %v305, %v368
    %v395 = vmul.f32 %v306, %v367
    %v396 = vsub.f32 %v394, %v395
    %v397 = vadd.f32 %v389, %v393
    %v398 = vadd.f32 %v390, %v396
    %v399 = vmul.f32 %v397, %v299
    %v400 = vmul.f32 %v398, %v300
    %v401 = vsub.f32 %v399, %v400
    %v402 = vmul.f32 %v397, %v300
    %v403 = vmul.f32 %v398, %v299
    %v404 = vadd.f32 %v402, %v403
    %v405 = vsub.f32 %v343, %v401
    %v406 = vsub.f32 %v344, %v404
    %v407 = vmul.f32 %v397, %v301
    %v408 = vmul.f32 %v398, %v302
    %v409 = vsub.f32 %v407, %v408
    %v410 = vmul.f32 %v397, %v302
    %v411 = vmul.f32 %v398, %v301
    %v412 = vadd.f32 %v410, %v411
    %v413 = vsub.f32 %v351, %v409
    %v414 = vsub.f32 %v352, %v412
    %v415 = vmul.f32 %v397, %v303
    %v416 = vmul.f32 %v398, %v304
    %v417 = vsub.f32 %v415, %v416
    %v418 = vmul.f32 %v397, %v304
    %v419 = vmul.f32 %v398, %v303
    %v420 = vadd.f32 %v418, %v419
    %v421 = vsub.f32 %v359, %v417
    %v422 = vsub.f32 %v360, %v420
    %v423 = vmul.f32 %v397, %v305
    %v424 = vmul.f32 %v398, %v306
    %v425 = vsub.f32 %v423, %v424
    %v426 = vmul.f32 %v397, %v306
    %v427 = vmul.f32 %v398, %v305
    %v428 = vadd.f32 %v426, %v427
    %v429 = vsub.f32 %v367, %v425
    %v430 = vsub.f32 %v368, %v428
    %v431 = vmul.f32 %v405, %v405
    %v432 = vmul.f32 %v406, %v406
    %v433 = vadd.f32 %v431, %v432
    %v434 = vmul.f32 %v413, %v413
    %v435 = vmul.f32 %v414, %v414
    %v436 = vadd.f32 %v434, %v435
    %v437 = vadd.f32 %v433, %v436
    %v438 = vmul.f32 %v421, %v421
    %v439 = vmul.f32 %v422, %v422
    %v440 = vadd.f32 %v438, %v439
    %v441 = vadd.f32 %v437, %v440
    %v442 = vmul.f32 %v429, %v429
    %v443 = vmul.f32 %v430, %v430
    %v444 = vadd.f32 %v442, %v443
    %v445 = vadd.f32 %v441, %v444
    %v446 = vmax.f32 %v445, 1e-30
    %v447 = vrsqrt.pop %v446
    %v448 = vmul.f32 %v445, %v447
    %v449 = vmul.f32 %v405, %v447
    %v450 = vmul.f32 %v406, %v447
    %v451 = vmul.f32 %v413, %v447
    %v452 = vmul.f32 %v414, %v447
    %v453 = vmul.f32 %v421, %v447
    %v454 = vmul.f32 %v422, %v447
    %v455 = vmul.f32 %v429, %v447
    %v456 = vmul.f32 %v430, %v447
    %v457 = vmul.f32 %v211, %v88
    %v458 = vmul.f32 %v212, %v89
    %v459 = vadd.f32 %v457, %v458
    %v460 = vmul.f32 %v211, %v89
    %v461 = vmul.f32 %v212, %v88
    %v462 = vsub.f32 %v460, %v461
    %v463 = vmul.f32 %v213, %v96
    %v464 = vmul.f32 %v214, %v97
    %v465 = vadd.f32 %v463, %v464
    %v466 = vmul.f32 %v213, %v97
    %v467 = vmul.f32 %v214, %v96
    %v468 = vsub.f32 %v466, %v467
    %v469 = vadd.f32 %v459, %v465
    %v470 = vadd.f32 %v462, %v468
    %v471 = vmul.f32 %v215, %v104
    %v472 = vmul.f32 %v216, %v105
    %v473 = vadd.f32 %v471, %v472
    %v474 = vmul.f32 %v215, %v105
    %v475 = vmul.f32 %v216, %v104
    %v476 = vsub.f32 %v474, %v475
    %v477 = vadd.f32 %v469, %v473
    %v478 = vadd.f32 %v470, %v476
    %v479 = vmul.f32 %v217, %v191
    %v480 = vmul.f32 %v218, %v192
    %v481 = vadd.f32 %v479, %v480
    %v482 = vmul.f32 %v217, %v192
    %v483 = vmul.f32 %v218, %v191
    %v484 = vsub.f32 %v482, %v483
    %v485 = vadd.f32 %v477, %v481
    %v486 = vadd.f32 %v478, %v484
    %v487 = vmul.f32 %v485, %v211
    %v488 = vmul.f32 %v486, %v212
    %v489 = vsub.f32 %v487, %v488
    %v490 = vmul.f32 %v485, %v212
    %v491 = vmul.f32 %v486, %v211
    %v492 = vadd.f32 %v490, %v491
    %v493 = vsub.f32 %v88, %v489
    %v494 = vsub.f32 %v89, %v492
    %v495 = vmul.f32 %v485, %v213
    %v496 = vmul.f32 %v486, %v214
    %v497 = vsub.f32 %v495, %v496
    %v498 = vmul.f32 %v485, %v214
    %v499 = vmul.f32 %v486, %v213
    %v500 = vadd.f32 %v498, %v499
    %v501 = vsub.f32 %v96, %v497
    %v502 = vsub.f32 %v97, %v500
    %v503 = vmul.f32 %v485, %v215
    %v504 = vmul.f32 %v486, %v216
    %v505 = vsub.f32 %v503, %v504
    %v506 = vmul.f32 %v485, %v216
    %v507 = vmul.f32 %v486, %v215
    %v508 = vadd.f32 %v506, %v507
    %v509 = vsub.f32 %v104, %v505
    %v510 = vsub.f32 %v105, %v508
    %v511 = vmul.f32 %v485, %v217
    %v512 = vmul.f32 %v486, %v218
    %v513 = vsub.f32 %v511, %v512
    %v514 = vmul.f32 %v485, %v218
    %v515 = vmul.f32 %v486, %v217
    %v516 = vadd.f32 %v514, %v515
    %v517 = vsub.f32 %v191, %v513
    %v518 = vsub.f32 %v192, %v516
    %v519 = vmul.f32 %v299, %v493
    %v520 = vmul.f32 %v300, %v494
    %v521 = vadd.f32 %v519, %v520
    %v522 = vmul.f32 %v299, %v494
    %v523 = vmul.f32 %v300, %v493
    %v524 = vsub.f32 %v522, %v523
    %v525 = vmul.f32 %v301, %v501
    %v526 = vmul.f32 %v302, %v502
    %v527 = vadd.f32 %v525, %v526
    %v528 = vmul.f32 %v301, %v502
    %v529 = vmul.f32 %v302, %v501
    %v530 = vsub.f32 %v528, %v529
    %v531 = vadd.f32 %v521, %v527
    %v532 = vadd.f32 %v524, %v530
    %v533 = vmul.f32 %v303, %v509
    %v534 = vmul.f32 %v304, %v510
    %v535 = vadd.f32 %v533, %v534
    %v536 = vmul.f32 %v303, %v510
    %v537 = vmul.f32 %v304, %v509
    %v538 = vsub.f32 %v536, %v537
    %v539 = vadd.f32 %v531, %v535
    %v540 = vadd.f32 %v532, %v538
    %v541 = vmul.f32 %v305, %v517
    %v542 = vmul.f32 %v306, %v518
    %v543 = vadd.f32 %v541, %v542
    %v544 = vmul.f32 %v305, %v518
    %v545 = vmul.f32 %v306, %v517
    %v546 = vsub.f32 %v544, %v545
    %v547 = vadd.f32 %v539, %v543
    %v548 = vadd.f32 %v540, %v546
    %v549 = vmul.f32 %v547, %v299
    %v550 = vmul.f32 %v548, %v300
    %v551 = vsub.f32 %v549, %v550
    %v552 = vmul.f32 %v547, %v300
    %v553 = vmul.f32 %v548, %v299
    %v554 = vadd.f32 %v552, %v553
    %v555 = vsub.f32 %v493, %v551
    %v556 = vsub.f32 %v494, %v554
    %v557 = vmul.f32 %v547, %v301
    %v558 = vmul.f32 %v548, %v302
    %v559 = vsub.f32 %v557, %v558
    %v560 = vmul.f32 %v547, %v302
    %v561 = vmul.f32 %v548, %v301
    %v562 = vadd.f32 %v560, %v561
    %v563 = vsub.f32 %v501, %v559
    %v564 = vsub.f32 %v502, %v562
    %v565 = vmul.f32 %v547, %v303
    %v566 = vmul.f32 %v548, %v304
    %v567 = vsub.f32 %v565, %v566
    %v568 = vmul.f32 %v547, %v304
    %v569 = vmul.f32 %v548, %v303
    %v570 = vadd.f32 %v568, %v569
    %v571 = vsub.f32 %v509, %v567
    %v572 = vsub.f32 %v510, %v570
    %v573 = vmul.f32 %v547, %v305
    %v574 = vmul.f32 %v548, %v306
    %v575 = vsub.f32 %v573, %v574
    %v576 = vmul.f32 %v547, %v306
    %v577 = vmul.f32 %v548, %v305
    %v578 = vadd.f32 %v576, %v577
    %v579 = vsub.f32 %v517, %v575
    %v580 = vsub.f32 %v518, %v578
    %v581 = vmul.f32 %v449, %v555
    %v582 = vmul.f32 %v450, %v556
    %v583 = vadd.f32 %v581, %v582
    %v584 = vmul.f32 %v449, %v556
    %v585 = vmul.f32 %v450, %v555
    %v586 = vsub.f32 %v584, %v585
    %v587 = vmul.f32 %v451, %v563
    %v588 = vmul.f32 %v452, %v564
    %v589 = vadd.f32 %v587, %v588
    %v590 = vmul.f32 %v451, %v564
    %v591 = vmul.f32 %v452, %v563
    %v592 = vsub.f32 %v590, %v591
    %v593 = vadd.f32 %v583, %v589
    %v594 = vadd.f32 %v586, %v592
    %v595 = vmul.f32 %v453, %v571
    %v596 = vmul.f32 %v454, %v572
    %v597 = vadd.f32 %v595, %v596
    %v598 = vmul.f32 %v453, %v572
    %v599 = vmul.f32 %v454, %v571
    %v600 = vsub.f32 %v598, %v599
    %v601 = vadd.f32 %v593, %v597
    %v602 = vadd.f32 %v594, %v600
    %v603 = vmul.f32 %v455, %v579
    %v604 = vmul.f32 %v456, %v580
    %v605 = vadd.f32 %v603, %v604
    %v606 = vmul.f32 %v455, %v580
    %v607 = vmul.f32 %v456, %v579
    %v608 = vsub.f32 %v606, %v607
    %v609 = vadd.f32 %v601, %v605
    %v610 = vadd.f32 %v602, %v608
    %v611 = vmul.f32 %v609, %v449
    %v612 = vmul.f32 %v610, %v450
    %v613 = vsub.f32 %v611, %v612
    %v614 = vmul.f32 %v609, %v450
    %v615 = vmul.f32 %v610, %v449
    %v616 = vadd.f32 %v614, %v615
    %v617 = vsub.f32 %v555, %v613
    %v618 = vsub.f32 %v556, %v616
    %v619 = vmul.f32 %v609, %v451
    %v620 = vmul.f32 %v610, %v452
    %v621 = vsub.f32 %v619, %v620
    %v622 = vmul.f32 %v609, %v452
    %v623 = vmul.f32 %v610, %v451
    %v624 = vadd.f32 %v622, %v623
    %v625 = vsub.f32 %v563, %v621
    %v626 = vsub.f32 %v564, %v624
    %v627 = vmul.f32 %v609, %v453
    %v628 = vmul.f32 %v610, %v454
    %v629 = vsub.f32 %v627, %v628
    %v630 = vmul.f32 %v609, %v454
    %v631 = vmul.f32 %v610, %v453
    %v632 = vadd.f32 %v630, %v631
    %v633 = vsub.f32 %v571, %v629
    %v634 = vsub.f32 %v572, %v632
    %v635 = vmul.f32 %v609, %v455
    %v636 = vmul.f32 %v610, %v456
    %v637 = vsub.f32 %v635, %v636
    %v638 = vmul.f32 %v609, %v456
    %v639 = vmul.f32 %v610, %v455
    %v640 = vadd.f32 %v638, %v639
    %v641 = vsub.f32 %v579, %v637
    %v642 = vsub.f32 %v580, %v640
    %v643 = vmul.f32 %v617, %v617
    %v644 = vmul.f32 %v618, %v618
    %v645 = vadd.f32 %v643, %v644
    %v646 = vmul.f32 %v625, %v625
    %v647 = vmul.f32 %v626, %v626
    %v648 = vadd.f32 %v646, %v647
    %v649 = vadd.f32 %v645, %v648
    %v650 = vmul.f32 %v633, %v633
    %v651 = vmul.f32 %v634, %v634
    %v652 = vadd.f32 %v650, %v651
    %v653 = vadd.f32 %v649, %v652
    %v654 = vmul.f32 %v641, %v641
    %v655 = vmul.f32 %v642, %v642
    %v656 = vadd.f32 %v654, %v655
    %v657 = vadd.f32 %v653, %v656
    %v658 = vmax.f32 %v657, 1e-30
    %v659 = vrsqrt.pop %v658
    %v660 = vmul.f32 %v657, %v659
    %v661 = vmul.f32 %v617, %v659
    %v662 = vmul.f32 %v618, %v659
    %v663 = vmul.f32 %v625, %v659
    %v664 = vmul.f32 %v626, %v659
    %v665 = vmul.f32 %v633, %v659
    %v666 = vmul.f32 %v634, %v659
    %v667 = vmul.f32 %v641, %v659
    %v668 = vmul.f32 %v642, %v659
    %v669 = vmul.f32 %v210, %v211
    %v670 = vmul.f32 %v210, %v212
    %v671 = vadd.f32 %v669, %v259
    %v672 = vadd.f32 %v670, %v262
    %v673 = vadd.f32 %v671, %v355
    %v674 = vadd.f32 %v672, %v358
    %v675 = vadd.f32 %v673, %v513
    %v676 = vadd.f32 %v674, %v516
    %v677 = vadd.f32 %v675, %v183
    %v678 = vadd.f32 %v676, %v184
    %v679 = vmul.f32 %v210, %v299
    %v680 = vmul.f32 %v210, %v300
    %v681 = vmul.f32 %v247, %v301
    %v682 = vmul.f32 %v248, %v302
    %v683 = vsub.f32 %v681, %v682
    %v684 = vmul.f32 %v247, %v302
    %v685 = vmul.f32 %v248, %v301
    %v686 = vadd.f32 %v684, %v685
    %v687 = vadd.f32 %v679, %v683
    %v688 = vadd.f32 %v680, %v686
    %v689 = vmul.f32 %v335, %v303
    %v690 = vmul.f32 %v336, %v304
    %v691 = vsub.f32 %v689, %v690
    %v692 = vmul.f32 %v335, %v304
    %v693 = vmul.f32 %v336, %v303
    %v694 = vadd.f32 %v692, %v693
    %v695 = vadd.f32 %v687, %v691
    %v696 = vadd.f32 %v688, %v694
    %v697 = vmul.f32 %v485, %v305
    %v698 = vmul.f32 %v486, %v306
    %v699 = vsub.f32 %v697, %v698
    %v700 = vmul.f32 %v485, %v306
    %v701 = vmul.f32 %v486, %v305
    %v702 = vadd.f32 %v700, %v701
    %v703 = vadd.f32 %v695, %v699
    %v704 = vadd.f32 %v696, %v702
    %v705 = vmul.f32 %v210, %v449
    %v706 = vmul.f32 %v210, %v450
    %v707 = vmul.f32 %v247, %v451
    %v708 = vmul.f32 %v248, %v452
    %v709 = vsub.f32 %v707, %v708
    %v710 = vmul.f32 %v247, %v452
    %v711 = vmul.f32 %v248, %v451
    %v712 = vadd.f32 %v710, %v711
    %v713 = vadd.f32 %v705, %v709
    %v714 = vadd.f32 %v706, %v712
    %v715 = vmul.f32 %v335, %v453
    %v716 = vmul.f32 %v336, %v454
    %v717 = vsub.f32 %v715, %v716
    %v718 = vmul.f32 %v335, %v454
    %v719 = vmul.f32 %v336, %v453
    %v720 = vadd.f32 %v718, %v719
    %v721 = vadd.f32 %v713, %v717
    %v722 = vadd.f32 %v714, %v720
    %v723 = vmul.f32 %v485, %v455
    %v724 = vmul.f32 %v486, %v456
    %v725 = vsub.f32 %v723, %v724
    %v726 = vmul.f32 %v485, %v456
    %v727 = vmul.f32 %v486, %v455
    %v728 = vadd.f32 %v726, %v727
    %v729 = vadd.f32 %v721, %v725
    %v730 = vadd.f32 %v722, %v728
    %v731 = vmul.f32 %v210, %v661
    %v732 = vmul.f32 %v210, %v662
    %v733 = vmul.f32 %v247, %v663
    %v734 = vmul.f32 %v248, %v664
    %v735 = vsub.f32 %v733, %v734
    %v736 = vmul.f32 %v247, %v664
    %v737 = vmul.f32 %v248, %v663
    %v738 = vadd.f32 %v736, %v737
    %v739 = vadd.f32 %v731, %v735
    %v740 = vadd.f32 %v732, %v738
    %v741 = vmul.f32 %v335, %v665
    %v742 = vmul.f32 %v336, %v666
    %v743 = vsub.f32 %v741, %v742
    %v744 = vmul.f32 %v335, %v666
    %v745 = vmul.f32 %v336, %v665
    %v746 = vadd.f32 %v744, %v745
    %v747 = vadd.f32 %v739, %v743
    %v748 = vadd.f32 %v740, %v746
    %v749 = vmul.f32 %v485, %v667
    %v750 = vmul.f32 %v486, %v668
    %v751 = vsub.f32 %v749, %v750
    %v752 = vmul.f32 %v485, %v668
    %v753 = vmul.f32 %v486, %v667
    %v754 = vadd.f32 %v752, %v753
    %v755 = vadd.f32 %v747, %v751
    %v756 = vadd.f32 %v748, %v754
    %v757 = vmul.f32 %v298, %v213
    %v758 = vmul.f32 %v298, %v214
    %v759 = vmul.f32 %v397, %v215
    %v760 = vmul.f32 %v398, %v216
    %v761 = vsub.f32 %v759, %v760
    %v762 = vmul.f32 %v397, %v216
    %v763 = vmul.f32 %v398, %v215
    %v764 = vadd.f32 %v762, %v763
    %v765 = vadd.f32 %v757, %v761
    %v766 = vadd.f32 %v758, %v764
    %v767 = vmul.f32 %v547, %v217
    %v768 = vmul.f32 %v548, %v218
    %v769 = vsub.f32 %v767, %v768
    %v770 = vmul.f32 %v547, %v218
    %v771 = vmul.f32 %v548, %v217
    %v772 = vadd.f32 %v770, %v771
    %v773 = vadd.f32 %v765, %v769
    %v774 = vadd.f32 %v766, %v772
    %v775 = vmul.f32 %v298, %v301
    %v776 = vmul.f32 %v298, %v302
    %v777 = vadd.f32 %v775, %v417
    %v778 = vadd.f32 %v776, %v420
    %v779 = vadd.f32 %v777, %v575
    %v780 = vadd.f32 %v778, %v578
    %v781 = vadd.f32 %v779, %v183
    %v782 = vadd.f32 %v780, %v184
    %v783 = vmul.f32 %v298, %v451
    %v784 = vmul.f32 %v298, %v452
    %v785 = vmul.f32 %v397, %v453
    %v786 = vmul.f32 %v398, %v454
    %v787 = vsub.f32 %v785, %v786
    %v788 = vmul.f32 %v397, %v454
    %v789 = vmul.f32 %v398, %v453
    %v790 = vadd.f32 %v788, %v789
    %v791 = vadd.f32 %v783, %v787
    %v792 = vadd.f32 %v784, %v790
    %v793 = vmul.f32 %v547, %v455
    %v794 = vmul.f32 %v548, %v456
    %v795 = vsub.f32 %v793, %v794
    %v796 = vmul.f32 %v547, %v456
    %v797 = vmul.f32 %v548, %v455
    %v798 = vadd.f32 %v796, %v797
    %v799 = vadd.f32 %v791, %v795
    %v800 = vadd.f32 %v792, %v798
    %v801 = vmul.f32 %v298, %v663
    %v802 = vmul.f32 %v298, %v664
    %v803 = vmul.f32 %v397, %v665
    %v804 = vmul.f32 %v398, %v666
    %v805 = vsub.f32 %v803, %v804
    %v806 = vmul.f32 %v397, %v666
    %v807 = vmul.f32 %v398, %v665
    %v808 = vadd.f32 %v806, %v807
    %v809 = vadd.f32 %v801, %v805
    %v810 = vadd.f32 %v802, %v808
    %v811 = vmul.f32 %v547, %v667
    %v812 = vmul.f32 %v548, %v668
    %v813 = vsub.f32 %v811, %v812
    %v814 = vmul.f32 %v547, %v668
    %v815 = vmul.f32 %v548, %v667
    %v816 = vadd.f32 %v814, %v815
    %v817 = vadd.f32 %v809, %v813
    %v818 = vadd.f32 %v810, %v816
    %v819 = vmul.f32 %v448, %v215
    %v820 = vmul.f32 %v448, %v216
    %v821 = vmul.f32 %v609, %v217
    %v822 = vmul.f32 %v610, %v218
    %v823 = vsub.f32 %v821, %v822
    %v824 = vmul.f32 %v609, %v218
    %v825 = vmul.f32 %v610, %v217
    %v826 = vadd.f32 %v824, %v825
    %v827 = vadd.f32 %v819, %v823
    %v828 = vadd.f32 %v820, %v826
    %v829 = vmul.f32 %v448, %v303
    %v830 = vmul.f32 %v448, %v304
    %v831 = vmul.f32 %v609, %v305
    %v832 = vmul.f32 %v610, %v306
    %v833 = vsub.f32 %v831, %v832
    %v834 = vmul.f32 %v609, %v306
    %v835 = vmul.f32 %v610, %v305
    %v836 = vadd.f32 %v834, %v835
    %v837 = vadd.f32 %v829, %v833
    %v838 = vadd.f32 %v830, %v836
    %v839 = vmul.f32 %v448, %v453
    %v840 = vmul.f32 %v448, %v454
    %v841 = vadd.f32 %v839, %v637
    %v842 = vadd.f32 %v840, %v640
    %v843 = vadd.f32 %v841, %v183
    %v844 = vadd.f32 %v842, %v184
    %v845 = vmul.f32 %v448, %v665
    %v846 = vmul.f32 %v448, %v666
    %v847 = vmul.f32 %v609, %v667
    %v848 = vmul.f32 %v610, %v668
    %v849 = vsub.f32 %v847, %v848
    %v850 = vmul.f32 %v609, %v668
    %v851 = vmul.f32 %v610, %v667
    %v852 = vadd.f32 %v850, %v851
    %v853 = vadd.f32 %v845, %v849
    %v854 = vadd.f32 %v846, %v852
    %v855 = vmul.f32 %v660, %v217
    %v856 = vmul.f32 %v660, %v218
    %v857 = vmul.f32 %v660, %v305
    %v858 = vmul.f32 %v660, %v306
    %v859 = vmul.f32 %v660, %v455
    %v860 = vmul.f32 %v660, %v456
    %v861 = vmul.f32 %v660, %v667
    %v862 = vmul.f32 %v660, %v668
    %v863 = vadd.f32 %v861, %v183
    %v864 = vadd.f32 %v862, %v184
  $region18: #{mse_evs_idxs.1} parent=0 // loop_footer
    %s81 = sadd.s32 1, %s77
  $region19: #{mse_evs_idxs.1} parent=0 // loop_footer_branch
    %76 = sbr.rel target = $region15
  $region20: #{mse_evs_idxs.1} parent=0 // loop_exit
    _
  loop: start=0, step=1, limit=10
  $region21: #{mse_evs_idxs.1} parent=0 // loop_pre_header
    _
  $region22: #{mse_evs_idxs.1} parent=0 // loop_header
    %s866 = sphi 0, %s870
    %p867 = scmp.ge.s32.totalorder %s866, 10
    %v871 = vphi %v82, %v1170
    %v872 = vphi %v83, %v1171
    %v873 = vphi %v84, %v1188
    %v874 = vphi %v85, %v1189
    %v875 = vphi %v86, %v1206
    %v876 = vphi %v87, %v1207
    %v877 = vphi %v90, %v1216
    %v878 = vphi %v91, %v1217
    %v879 = vphi %v92, %v1222
    %v880 = vphi %v93, %v1223
    %v881 = vphi %v94, %v1232
    %v882 = vphi %v95, %v1233
    %v883 = vphi %v98, %v1234
    %v884 = vphi %v99, %v1235
    %v885 = vphi %v100, %v1236
    %v886 = vphi %v101, %v1237
    %v887 = vphi %v102, %v1240
    %v888 = vphi %v103, %v1241
  $region23: #{mse_evs_idxs.1} parent=0 // loop_header_branch
    %869 = sbr.rel (%p867) target = $region27
  $region24: #{mse_evs_idxs.1} parent=0 // loop_body
    %v889 = vadd.f32 %v879, %v887
    %v890 = vmul.f32 %v889, 0.5
    %v891 = vadd.f32 %v880, %v888
    %v892 = vmul.f32 %v891, 0.5
    %v893 = vsub.f32 %v879, %v887
    %v894 = vmul.f32 %v893, 0.5
    %v895 = vsub.f32 %v880, %v888
    %v896 = vmul.f32 %v895, 0.5
    %v897 = vmul.f32 %v894, %v894
    %v898 = vmul.f32 %v896, %v896
    %v899 = vsub.f32 %v897, %v898
    %v900 = vmul.f32 %v894, %v896
    %v901 = vadd.f32 %v900, %v900
    %v902 = vmul.f32 %v881, %v885
    %v903 = vmul.f32 %v882, %v886
    %v904 = vsub.f32 %v902, %v903
    %v905 = vmul.f32 %v881, %v886
    %v906 = vmul.f32 %v882, %v885
    %v907 = vadd.f32 %v905, %v906
    %v908 = vadd.f32 %v899, %v904
    %v909 = vadd.f32 %v901, %v907
    %v910 = vmul.f32 %v908, %v908
    %v911 = vmul.f32 %v909, %v909
    %v912 = vadd.f32 %v910, %v911
    %v913 = vrsqrt.pop %v912
    %v914 = vmul.f32 %v912, %v913
    %vm915 = vcmp.eq.f32.partialorder %v912, inf
    %v916 = vsel %vm915, %v912, %v914
    %vm917 = vcmp.eq.f32.partialorder %v912, 0.0
    %v918 = vand.u32 %v912, 2147483648
    %v919 = vsel %vm917, %v918, %v916
    %v920 = vadd.f32 %v919, %v908
    %v921 = vmul.f32 %v920, 0.5
    %v922 = vmax.f32 %v921, 0.0
    %v923 = vrsqrt.pop %v922
    %v924 = vmul.f32 %v922, %v923
    %vm925 = vcmp.eq.f32.partialorder %v922, inf
    %v926 = vsel %vm925, %v922, %v924
    %vm927 = vcmp.eq.f32.partialorder %v922, 0.0
    %v928 = vand.u32 %v922, 2147483648
    %v929 = vsel %vm927, %v928, %v926
    %v930 = vsub.f32 %v919, %v908
    %v931 = vmul.f32 %v930, 0.5
    %v932 = vmax.f32 %v931, 0.0
    %v933 = vrsqrt.pop %v932
    %v934 = vmul.f32 %v932, %v933
    %vm935 = vcmp.eq.f32.partialorder %v932, inf
    %v936 = vsel %vm935, %v932, %v934
    %vm937 = vcmp.eq.f32.partialorder %v932, 0.0
    %v938 = vand.u32 %v932, 2147483648
    %v939 = vsel %vm937, %v938, %v936
    %vm940 = vcmp.ge.f32.partialorder %v909, 0.0
    %v941 = vsel %vm940, 1.0, -1.0
    %v942 = vmul.f32 %v941, %v939
    %v943 = vadd.f32 %v890, %v929
    %v944 = vadd.f32 %v892, %v942
    %v945 = vsub.f32 %v890, %v929
    %v946 = vsub.f32 %v892, %v942
    %v947 = vsub.f32 %v943, %v887
    %v948 = vsub.f32 %v944, %v888
    %v949 = vmul.f32 %v947, %v947
    %v950 = vmul.f32 %v948, %v948
    %v951 = vadd.f32 %v949, %v950
    %v952 = vsub.f32 %v945, %v887
    %v953 = vsub.f32 %v946, %v888
    %v954 = vmul.f32 %v952, %v952
    %v955 = vmul.f32 %v953, %v953
    %v956 = vadd.f32 %v954, %v955
    %vm957 = vcmp.le.f32.partialorder %v951, %v956
    %v958 = vsel %vm957, %v943, %v945
    %v959 = vsel %vm957, %v944, %v946
    %v960 = vsub.f32 %v871, %v958
    %v961 = vsub.f32 %v872, %v959
    %v962 = vsub.f32 %v879, %v958
    %v963 = vsub.f32 %v880, %v959
    %v964 = vsub.f32 %v887, %v958
    %v965 = vsub.f32 %v888, %v959
    %v966 = vmul.f32 %v960, %v960
    %v967 = vmul.f32 %v961, %v961
    %v968 = vadd.f32 %v966, %v967
    %v969 = vmul.f32 %v877, %v877
    %v970 = vmul.f32 %v878, %v878
    %v971 = vadd.f32 %v969, %v970
    %v972 = vadd.f32 %v968, %v971
    %v973 = vmul.f32 %v883, %v883
    %v974 = vmul.f32 %v884, %v884
    %v975 = vadd.f32 %v973, %v974
    %v976 = vadd.f32 %v972, %v975
    %v977 = vmax.f32 %v976, 1e-30
    %v978 = vrsqrt.pop %v977
    %v979 = vmul.f32 %v976, %v978
    %v980 = vmul.f32 %v960, %v978
    %v981 = vmul.f32 %v961, %v978
    %v982 = vmul.f32 %v877, %v978
    %v983 = vmul.f32 %v878, %v978
    %v984 = vmul.f32 %v883, %v978
    %v985 = vmul.f32 %v884, %v978
    %v986 = vmul.f32 %v980, %v873
    %v987 = vmul.f32 %v981, %v874
    %v988 = vadd.f32 %v986, %v987
    %v989 = vmul.f32 %v980, %v874
    %v990 = vmul.f32 %v981, %v873
    %v991 = vsub.f32 %v989, %v990
    %v992 = vmul.f32 %v982, %v962
    %v993 = vmul.f32 %v983, %v963
    %v994 = vadd.f32 %v992, %v993
    %v995 = vmul.f32 %v982, %v963
    %v996 = vmul.f32 %v983, %v962
    %v997 = vsub.f32 %v995, %v996
    %v998 = vadd.f32 %v988, %v994
    %v999 = vadd.f32 %v991, %v997
    %v1000 = vmul.f32 %v984, %v885
    %v1001 = vmul.f32 %v985, %v886
    %v1002 = vadd.f32 %v1000, %v1001
    %v1003 = vmul.f32 %v984, %v886
    %v1004 = vmul.f32 %v985, %v885
    %v1005 = vsub.f32 %v1003, %v1004
    %v1006 = vadd.f32 %v998, %v1002
    %v1007 = vadd.f32 %v999, %v1005
    %v1008 = vmul.f32 %v1006, %v980
    %v1009 = vmul.f32 %v1007, %v981
    %v1010 = vsub.f32 %v1008, %v1009
    %v1011 = vmul.f32 %v1006, %v981
    %v1012 = vmul.f32 %v1007, %v980
    %v1013 = vadd.f32 %v1011, %v1012
    %v1014 = vsub.f32 %v873, %v1010
    %v1015 = vsub.f32 %v874, %v1013
    %v1016 = vmul.f32 %v1006, %v982
    %v1017 = vmul.f32 %v1007, %v983
    %v1018 = vsub.f32 %v1016, %v1017
    %v1019 = vmul.f32 %v1006, %v983
    %v1020 = vmul.f32 %v1007, %v982
    %v1021 = vadd.f32 %v1019, %v1020
    %v1022 = vsub.f32 %v962, %v1018
    %v1023 = vsub.f32 %v963, %v1021
    %v1024 = vmul.f32 %v1006, %v984
    %v1025 = vmul.f32 %v1007, %v985
    %v1026 = vsub.f32 %v1024, %v1025
    %v1027 = vmul.f32 %v1006, %v985
    %v1028 = vmul.f32 %v1007, %v984
    %v1029 = vadd.f32 %v1027, %v1028
    %v1030 = vsub.f32 %v885, %v1026
    %v1031 = vsub.f32 %v886, %v1029
    %v1032 = vmul.f32 %v1014, %v1014
    %v1033 = vmul.f32 %v1015, %v1015
    %v1034 = vadd.f32 %v1032, %v1033
    %v1035 = vmul.f32 %v1022, %v1022
    %v1036 = vmul.f32 %v1023, %v1023
    %v1037 = vadd.f32 %v1035, %v1036
    %v1038 = vadd.f32 %v1034, %v1037
    %v1039 = vmul.f32 %v1030, %v1030
    %v1040 = vmul.f32 %v1031, %v1031
    %v1041 = vadd.f32 %v1039, %v1040
    %v1042 = vadd.f32 %v1038, %v1041
    %v1043 = vmax.f32 %v1042, 1e-30
    %v1044 = vrsqrt.pop %v1043
    %v1045 = vmul.f32 %v1042, %v1044
    %v1046 = vmul.f32 %v1014, %v1044
    %v1047 = vmul.f32 %v1015, %v1044
    %v1048 = vmul.f32 %v1022, %v1044
    %v1049 = vmul.f32 %v1023, %v1044
    %v1050 = vmul.f32 %v1030, %v1044
    %v1051 = vmul.f32 %v1031, %v1044
    %v1052 = vmul.f32 %v980, %v875
    %v1053 = vmul.f32 %v981, %v876
    %v1054 = vadd.f32 %v1052, %v1053
    %v1055 = vmul.f32 %v980, %v876
    %v1056 = vmul.f32 %v981, %v875
    %v1057 = vsub.f32 %v1055, %v1056
    %v1058 = vmul.f32 %v982, %v881
    %v1059 = vmul.f32 %v983, %v882
    %v1060 = vadd.f32 %v1058, %v1059
    %v1061 = vmul.f32 %v982, %v882
    %v1062 = vmul.f32 %v983, %v881
    %v1063 = vsub.f32 %v1061, %v1062
    %v1064 = vadd.f32 %v1054, %v1060
    %v1065 = vadd.f32 %v1057, %v1063
    %v1066 = vmul.f32 %v984, %v964
    %v1067 = vmul.f32 %v985, %v965
    %v1068 = vadd.f32 %v1066, %v1067
    %v1069 = vmul.f32 %v984, %v965
    %v1070 = vmul.f32 %v985, %v964
    %v1071 = vsub.f32 %v1069, %v1070
    %v1072 = vadd.f32 %v1064, %v1068
    %v1073 = vadd.f32 %v1065, %v1071
    %v1074 = vmul.f32 %v1072, %v980
    %v1075 = vmul.f32 %v1073, %v981
    %v1076 = vsub.f32 %v1074, %v1075
    %v1077 = vmul.f32 %v1072, %v981
    %v1078 = vmul.f32 %v1073, %v980
    %v1079 = vadd.f32 %v1077, %v1078
    %v1080 = vsub.f32 %v875, %v1076
    %v1081 = vsub.f32 %v876, %v1079
    %v1082 = vmul.f32 %v1072, %v982
    %v1083 = vmul.f32 %v1073, %v983
    %v1084 = vsub.f32 %v1082, %v1083
    %v1085 = vmul.f32 %v1072, %v983
    %v1086 = vmul.f32 %v1073, %v982
    %v1087 = vadd.f32 %v1085, %v1086
    %v1088 = vsub.f32 %v881, %v1084
    %v1089 = vsub.f32 %v882, %v1087
    %v1090 = vmul.f32 %v1072, %v984
    %v1091 = vmul.f32 %v1073, %v985
    %v1092 = vsub.f32 %v1090, %v1091
    %v1093 = vmul.f32 %v1072, %v985
    %v1094 = vmul.f32 %v1073, %v984
    %v1095 = vadd.f32 %v1093, %v1094
    %v1096 = vsub.f32 %v964, %v1092
    %v1097 = vsub.f32 %v965, %v1095
    %v1098 = vmul.f32 %v1046, %v1080
    %v1099 = vmul.f32 %v1047, %v1081
    %v1100 = vadd.f32 %v1098, %v1099
    %v1101 = vmul.f32 %v1046, %v1081
    %v1102 = vmul.f32 %v1047, %v1080
    %v1103 = vsub.f32 %v1101, %v1102
    %v1104 = vmul.f32 %v1048, %v1088
    %v1105 = vmul.f32 %v1049, %v1089
    %v1106 = vadd.f32 %v1104, %v1105
    %v1107 = vmul.f32 %v1048, %v1089
    %v1108 = vmul.f32 %v1049, %v1088
    %v1109 = vsub.f32 %v1107, %v1108
    %v1110 = vadd.f32 %v1100, %v1106
    %v1111 = vadd.f32 %v1103, %v1109
    %v1112 = vmul.f32 %v1050, %v1096
    %v1113 = vmul.f32 %v1051, %v1097
    %v1114 = vadd.f32 %v1112, %v1113
    %v1115 = vmul.f32 %v1050, %v1097
    %v1116 = vmul.f32 %v1051, %v1096
    %v1117 = vsub.f32 %v1115, %v1116
    %v1118 = vadd.f32 %v1110, %v1114
    %v1119 = vadd.f32 %v1111, %v1117
    %v1120 = vmul.f32 %v1118, %v1046
    %v1121 = vmul.f32 %v1119, %v1047
    %v1122 = vsub.f32 %v1120, %v1121
    %v1123 = vmul.f32 %v1118, %v1047
    %v1124 = vmul.f32 %v1119, %v1046
    %v1125 = vadd.f32 %v1123, %v1124
    %v1126 = vsub.f32 %v1080, %v1122
    %v1127 = vsub.f32 %v1081, %v1125
    %v1128 = vmul.f32 %v1118, %v1048
    %v1129 = vmul.f32 %v1119, %v1049
    %v1130 = vsub.f32 %v1128, %v1129
    %v1131 = vmul.f32 %v1118, %v1049
    %v1132 = vmul.f32 %v1119, %v1048
    %v1133 = vadd.f32 %v1131, %v1132
    %v1134 = vsub.f32 %v1088, %v1130
    %v1135 = vsub.f32 %v1089, %v1133
    %v1136 = vmul.f32 %v1118, %v1050
    %v1137 = vmul.f32 %v1119, %v1051
    %v1138 = vsub.f32 %v1136, %v1137
    %v1139 = vmul.f32 %v1118, %v1051
    %v1140 = vmul.f32 %v1119, %v1050
    %v1141 = vadd.f32 %v1139, %v1140
    %v1142 = vsub.f32 %v1096, %v1138
    %v1143 = vsub.f32 %v1097, %v1141
    %v1144 = vmul.f32 %v1126, %v1126
    %v1145 = vmul.f32 %v1127, %v1127
    %v1146 = vadd.f32 %v1144, %v1145
    %v1147 = vmul.f32 %v1134, %v1134
    %v1148 = vmul.f32 %v1135, %v1135
    %v1149 = vadd.f32 %v1147, %v1148
    %v1150 = vadd.f32 %v1146, %v1149
    %v1151 = vmul.f32 %v1142, %v1142
    %v1152 = vmul.f32 %v1143, %v1143
    %v1153 = vadd.f32 %v1151, %v1152
    %v1154 = vadd.f32 %v1150, %v1153
    %v1155 = vmax.f32 %v1154, 1e-30
    %v1156 = vrsqrt.pop %v1155
    %v1157 = vmul.f32 %v1154, %v1156
    %v1158 = vmul.f32 %v1126, %v1156
    %v1159 = vmul.f32 %v1127, %v1156
    %v1160 = vmul.f32 %v1134, %v1156
    %v1161 = vmul.f32 %v1135, %v1156
    %v1162 = vmul.f32 %v1142, %v1156
    %v1163 = vmul.f32 %v1143, %v1156
    %v1164 = vmul.f32 %v979, %v980
    %v1165 = vmul.f32 %v979, %v981
    %v1166 = vadd.f32 %v1164, %v1018
    %v1167 = vadd.f32 %v1165, %v1021
    %v1168 = vadd.f32 %v1166, %v1092
    %v1169 = vadd.f32 %v1167, %v1095
    %v1170 = vadd.f32 %v1168, %v958
    %v1171 = vadd.f32 %v1169, %v959
    %v1172 = vmul.f32 %v979, %v1046
    %v1173 = vmul.f32 %v979, %v1047
    %v1174 = vmul.f32 %v1006, %v1048
    %v1175 = vmul.f32 %v1007, %v1049
    %v1176 = vsub.f32 %v1174, %v1175
    %v1177 = vmul.f32 %v1006, %v1049
    %v1178 = vmul.f32 %v1007, %v1048
    %v1179 = vadd.f32 %v1177, %v1178
    %v1180 = vadd.f32 %v1172, %v1176
    %v1181 = vadd.f32 %v1173, %v1179
    %v1182 = vmul.f32 %v1072, %v1050
    %v1183 = vmul.f32 %v1073, %v1051
    %v1184 = vsub.f32 %v1182, %v1183
    %v1185 = vmul.f32 %v1072, %v1051
    %v1186 = vmul.f32 %v1073, %v1050
    %v1187 = vadd.f32 %v1185, %v1186
    %v1188 = vadd.f32 %v1180, %v1184
    %v1189 = vadd.f32 %v1181, %v1187
    %v1190 = vmul.f32 %v979, %v1158
    %v1191 = vmul.f32 %v979, %v1159
    %v1192 = vmul.f32 %v1006, %v1160
    %v1193 = vmul.f32 %v1007, %v1161
    %v1194 = vsub.f32 %v1192, %v1193
    %v1195 = vmul.f32 %v1006, %v1161
    %v1196 = vmul.f32 %v1007, %v1160
    %v1197 = vadd.f32 %v1195, %v1196
    %v1198 = vadd.f32 %v1190, %v1194
    %v1199 = vadd.f32 %v1191, %v1197
    %v1200 = vmul.f32 %v1072, %v1162
    %v1201 = vmul.f32 %v1073, %v1163
    %v1202 = vsub.f32 %v1200, %v1201
    %v1203 = vmul.f32 %v1072, %v1163
    %v1204 = vmul.f32 %v1073, %v1162
    %v1205 = vadd.f32 %v1203, %v1204
    %v1206 = vadd.f32 %v1198, %v1202
    %v1207 = vadd.f32 %v1199, %v1205
    %v1208 = vmul.f32 %v1045, %v982
    %v1209 = vmul.f32 %v1045, %v983
    %v1210 = vmul.f32 %v1118, %v984
    %v1211 = vmul.f32 %v1119, %v985
    %v1212 = vsub.f32 %v1210, %v1211
    %v1213 = vmul.f32 %v1118, %v985
    %v1214 = vmul.f32 %v1119, %v984
    %v1215 = vadd.f32 %v1213, %v1214
    %v1216 = vadd.f32 %v1208, %v1212
    %v1217 = vadd.f32 %v1209, %v1215
    %v1218 = vmul.f32 %v1045, %v1048
    %v1219 = vmul.f32 %v1045, %v1049
    %v1220 = vadd.f32 %v1218, %v1138
    %v1221 = vadd.f32 %v1219, %v1141
    %v1222 = vadd.f32 %v1220, %v958
    %v1223 = vadd.f32 %v1221, %v959
    %v1224 = vmul.f32 %v1045, %v1160
    %v1225 = vmul.f32 %v1045, %v1161
    %v1226 = vmul.f32 %v1118, %v1162
    %v1227 = vmul.f32 %v1119, %v1163
    %v1228 = vsub.f32 %v1226, %v1227
    %v1229 = vmul.f32 %v1118, %v1163
    %v1230 = vmul.f32 %v1119, %v1162
    %v1231 = vadd.f32 %v1229, %v1230
    %v1232 = vadd.f32 %v1224, %v1228
    %v1233 = vadd.f32 %v1225, %v1231
    %v1234 = vmul.f32 %v1157, %v984
    %v1235 = vmul.f32 %v1157, %v985
    %v1236 = vmul.f32 %v1157, %v1050
    %v1237 = vmul.f32 %v1157, %v1051
    %v1238 = vmul.f32 %v1157, %v1162
    %v1239 = vmul.f32 %v1157, %v1163
    %v1240 = vadd.f32 %v1238, %v958
    %v1241 = vadd.f32 %v1239, %v959
  $region25: #{mse_evs_idxs.1} parent=0 // loop_footer
    %s870 = sadd.s32 1, %s866
  $region26: #{mse_evs_idxs.1} parent=0 // loop_footer_branch
    %865 = sbr.rel target = $region22
  $region27: #{mse_evs_idxs.1} parent=0 // loop_exit
    _
  %v1242 = vadd.f32 %v871, %v879
  %v1243 = vmul.f32 %v1242, 0.5
  %v1244 = vadd.f32 %v872, %v880
  %v1245 = vmul.f32 %v1244, 0.5
  %v1246 = vsub.f32 %v871, %v879
  %v1247 = vmul.f32 %v1246, 0.5
  %v1248 = vsub.f32 %v872, %v880
  %v1249 = vmul.f32 %v1248, 0.5
  %v1250 = vmul.f32 %v1247, %v1247
  %v1251 = vmul.f32 %v1249, %v1249
  %v1252 = vsub.f32 %v1250, %v1251
  %v1253 = vmul.f32 %v1247, %v1249
  %v1254 = vadd.f32 %v1253, %v1253
  %v1255 = vmul.f32 %v873, %v877
  %v1256 = vmul.f32 %v874, %v878
  %v1257 = vsub.f32 %v1255, %v1256
  %v1258 = vmul.f32 %v873, %v878
  %v1259 = vmul.f32 %v874, %v877
  %v1260 = vadd.f32 %v1258, %v1259
  %v1261 = vadd.f32 %v1252, %v1257
  %v1262 = vadd.f32 %v1254, %v1260
  %v1263 = vmul.f32 %v1261, %v1261
  %v1264 = vmul.f32 %v1262, %v1262
  %v1265 = vadd.f32 %v1263, %v1264
  %v1266 = vrsqrt.pop %v1265
  %v1267 = vmul.f32 %v1265, %v1266
  %vm1268 = vcmp.eq.f32.partialorder %v1265, inf
  %v1269 = vsel %vm1268, %v1265, %v1267
  %vm1270 = vcmp.eq.f32.partialorder %v1265, 0.0
  %v1271 = vand.u32 %v1265, 2147483648
  %v1272 = vsel %vm1270, %v1271, %v1269
  %v1273 = vadd.f32 %v1272, %v1261
  %v1274 = vmul.f32 %v1273, 0.5
  %v1275 = vmax.f32 %v1274, 0.0
  %v1276 = vrsqrt.pop %v1275
  %v1277 = vmul.f32 %v1275, %v1276
  %vm1278 = vcmp.eq.f32.partialorder %v1275, inf
  %v1279 = vsel %vm1278, %v1275, %v1277
  %vm1280 = vcmp.eq.f32.partialorder %v1275, 0.0
  %v1281 = vand.u32 %v1275, 2147483648
  %v1282 = vsel %vm1280, %v1281, %v1279
  %v1283 = vsub.f32 %v1272, %v1261
  %v1284 = vmul.f32 %v1283, 0.5
  %v1285 = vmax.f32 %v1284, 0.0
  %v1286 = vrsqrt.pop %v1285
  %v1287 = vmul.f32 %v1285, %v1286
  %vm1288 = vcmp.eq.f32.partialorder %v1285, inf
  %v1289 = vsel %vm1288, %v1285, %v1287
  %vm1290 = vcmp.eq.f32.partialorder %v1285, 0.0
  %v1291 = vand.u32 %v1285, 2147483648
  %v1292 = vsel %vm1290, %v1291, %v1289
  %vm1293 = vcmp.ge.f32.partialorder %v1262, 0.0
  %v1294 = vsel %vm1293, 1.0, -1.0
  %v1295 = vmul.f32 %v1294, %v1292
  %v1296 = vadd.f32 %v1243, %v1282
  %v1297 = vadd.f32 %v1245, %v1295
  %v1298 = vsub.f32 %v1243, %v1282
  %v1299 = vsub.f32 %v1245, %v1295
  %v1300 = vsub.f32 %v1296, %v879
  %v1301 = vsub.f32 %v1297, %v880
  %v1302 = vmul.f32 %v1300, %v1300
  %v1303 = vmul.f32 %v1301, %v1301
  %v1304 = vadd.f32 %v1302, %v1303
  %v1305 = vsub.f32 %v1298, %v879
  %v1306 = vsub.f32 %v1299, %v880
  %v1307 = vmul.f32 %v1305, %v1305
  %v1308 = vmul.f32 %v1306, %v1306
  %v1309 = vadd.f32 %v1307, %v1308
  %vm1310 = vcmp.le.f32.partialorder %v1304, %v1309
  %v1311 = vsel %vm1310, %v1296, %v1298
  %v1312 = vsel %vm1310, %v1297, %v1299
  %v1313 = vsel %vm1310, %v1298, %v1296
  %v1314 = vsel %vm1310, %v1299, %v1297
  %v1315 = vmul.f32 %v1313, %v1313
  %v1316 = vmul.f32 %v1314, %v1314
  %v1317 = vadd.f32 %v1315, %v1316
  %v1318 = vrsqrt.pop %v1317
  %v1319 = vmul.f32 %v1317, %v1318
  %vm1320 = vcmp.eq.f32.partialorder %v1317, inf
  %v1321 = vsel %vm1320, %v1317, %v1319
  %vm1322 = vcmp.eq.f32.partialorder %v1317, 0.0
  %v1323 = vand.u32 %v1317, 2147483648
  %v1324 = vsel %vm1322, %v1323, %v1321
  %v1325 = vld [vmem:[%s2] sm:$0xff]
  %v1326 = vsub.f32 %v1324, %v1325
  %v1327 = vmul.f32 %v1326, %v1326
  %v1328 = vmul.f32 %v1311, %v1311
  %v1329 = vmul.f32 %v1312, %v1312
  %v1330 = vadd.f32 %v1328, %v1329
  %v1331 = vrsqrt.pop %v1330
  %v1332 = vmul.f32 %v1330, %v1331
  %vm1333 = vcmp.eq.f32.partialorder %v1330, inf
  %v1334 = vsel %vm1333, %v1330, %v1332
  %vm1335 = vcmp.eq.f32.partialorder %v1330, 0.0
  %v1336 = vand.u32 %v1330, 2147483648
  %v1337 = vsel %vm1335, %v1336, %v1334
  %s1338 = scalar_lea.vmem %s2, 8
  %v1339 = vld [vmem:[%s1338] sm:$0xff]
  %v1340 = vsub.f32 %v1337, %v1339
  %v1341 = vmul.f32 %v1340, %v1340
  %v1342 = vadd.f32 %v1327, %v1341
  %v1343 = vmul.f32 %v887, %v887
  %v1344 = vmul.f32 %v888, %v888
  %v1345 = vadd.f32 %v1343, %v1344
  %v1346 = vrsqrt.pop %v1345
  %v1347 = vmul.f32 %v1345, %v1346
  %vm1348 = vcmp.eq.f32.partialorder %v1345, inf
  %v1349 = vsel %vm1348, %v1345, %v1347
  %vm1350 = vcmp.eq.f32.partialorder %v1345, 0.0
  %v1351 = vand.u32 %v1345, 2147483648
  %v1352 = vsel %vm1350, %v1351, %v1349
  %s1353 = scalar_lea.vmem %s2, 16
  %v1354 = vld [vmem:[%s1353] sm:$0xff]
  %v1355 = vsub.f32 %v1352, %v1354
  %v1356 = vmul.f32 %v1355, %v1355
  %v1357 = vadd.f32 %v1342, %v1356
  %v1358 = vmul.f32 %v112, %v112
  %v1359 = vmul.f32 %v113, %v113
  %v1360 = vadd.f32 %v1358, %v1359
  %v1361 = vrsqrt.pop %v1360
  %v1362 = vmul.f32 %v1360, %v1361
  %vm1363 = vcmp.eq.f32.partialorder %v1360, inf
  %v1364 = vsel %vm1363, %v1360, %v1362
  %vm1365 = vcmp.eq.f32.partialorder %v1360, 0.0
  %v1366 = vand.u32 %v1360, 2147483648
  %v1367 = vsel %vm1365, %v1366, %v1364
  %s1368 = scalar_lea.vmem %s2, 24
  %v1369 = vld [vmem:[%s1368] sm:$0xff]
  %v1370 = vsub.f32 %v1367, %v1369
  %v1371 = vmul.f32 %v1370, %v1370
  %v1372 = vadd.f32 %v1357, %v1371
  %1373 = vst [vmem:[%s3] sm:$0xff] %v1372
  // Predicated region
  $region28: #{mse_evs_idxs.1} parent=0 // pred_check
    _
  $region29: #{mse_evs_idxs.1} parent=0 // pred_check_branch
    %1375 = sbr.rel (0) target = $region31
  $region30: #{mse_evs_idxs.1} parent=0 // pred_region
    _
  $region31: #{mse_evs_idxs.1} parent=0 // pred_fallthru
    _
  // Predicated region
  $region32: #{mse_evs_idxs.1} parent=0 // pred_check
    _
  $region33: #{mse_evs_idxs.1} parent=0 // pred_check_branch
    %1377 = sbr.rel (0) target = $region35
  $region34: #{mse_evs_idxs.1} parent=0 // pred_region
    _
  $region35: #{mse_evs_idxs.1} parent=0 // pred_fallthru
    _

</llo_original>
